<compile_context>
chip_gen: v7x
topology: tpu7x:2x2x1
jax: 0.10.0
libtpu: 0.0.40
codegen_flags: <defaults>
</compile_context>

<pallas_src>
import jax
import jax.numpy as jnp
from jax import lax
from jax.experimental import pallas as pl
from jax.experimental.pallas import tpu as pltpu
import numpy as np

# ----------------------------- sizes (small) ---------------------------------
BATCH = 2          # B
SEQ = 8            # T  (max_seq)
EMB = 32           # E  (embedding_size)
HIDDEN = 32        # H  (hidden_size)
D_A = 32           # d_a
NUM_LABELS = 16    # L  (num_labels)
VOCAB = 50         # vocab_size
ROWS = 8           # padded per-step row group: [fwd b0..bB-1 | bwd b0..bB-1 | 0]

H, E, L, DA = HIDDEN, EMB, NUM_LABELS, D_A
assert E == H, "slab packing below assumes embedding_size == hidden_size"

# ---- static column offsets of the two packed weight slabs --------------------
# Slab R: 2E (= 2H) rows.
R_WIH = 0                      # (2E, 4H)  [Wih_f ; Wih_b], gate order i,f,o,g
R_WSIM = R_WIH + 4 * H         # (2H, L)   key_w @ label_query^T
R_FIRST = R_WSIM + L           # (2H, DA)  first_w
R_W1 = R_FIRST + DA            # (2H, 1)   w1_w
R_W2 = R_W1 + 1                # (2H, 1)   w2_w
R_WIDTH = R_W2 + 1

# Slab S: H rows.
S_WHH = 0                      # (H, 8H)   [Whh_f | Whh_b], gate order i,f,o,g
S_BG = S_WHH + 8 * H           # (ROWS, 4H) per-state-row gate bias (zero pads)
S_FINW = S_BG + 4 * H          # (H, 2H)   final_w^T
S_SECW = S_FINW + 2 * H        # (DA, L)   second_w
S_FINB = S_SECW + L            # (H, 1)    final_b^T
S_OUTW = S_FINB + 1            # (H, 1)    out_w
S_BSIM = S_OUTW + 1            # (1, L)    key_b @ label_query^T
S_FB = S_BSIM + L              # (1, DA)   first_b
S_SB = S_FB + DA               # (1, L)    second_b
S_W1B = S_SB + L               # (1, 1)    w1_b
S_W2B = S_W1B + 1              # (1, 1)    w2_b
S_OUTB = S_W2B + 1             # (1, 1)    out_b
S_WIDTH = S_OUTB + 1


def _recip(x):
    """Reciprocal via EUP approx + one Newton step (full f32 accuracy)."""
    r = pl.reciprocal(x, approx=True)
    return r * (2.0 - x * r)


def _softmax_t(x):
    """Softmax over axis 0 (the T axis)."""
    m = jnp.max(x, axis=0, keepdims=True)
    e = jnp.exp(x - m)
    return e * _recip(jnp.sum(e, axis=0, keepdims=True))


# ------------------------------- kernel --------------------------------------
def hybrid_xml_kernel(emb_ext_ref, w_r_ref, w_s_ref, o_ref, scr_f, scr_b):
    f32 = jnp.float32
    B = o_ref.shape[0]
    T = emb_ext_ref.shape[0] // ROWS

    # -------- hoisted input projection: both directions, all steps at once ----
    xw = jnp.dot(emb_ext_ref[...], w_r_ref[:, R_WIH:R_WIH + 4 * H],
                 preferred_element_type=f32)                      # (T*ROWS, 4H)
    whh_wide = w_s_ref[:, S_WHH:S_WHH + 8 * H]                    # (H, 8H)
    b_gates = w_s_ref[0:ROWS, S_BG:S_BG + 4 * H]                  # (ROWS, 4H)

    # rows [0, B) forward, [B, 2B) backward, [2B, ROWS) zero padding
    dir_fwd = lax.broadcasted_iota(jnp.int32, (ROWS, 1), 0) < B

    # -------------- fused BiLSTM recurrence (gate order i,f,o,g) --------------
    h = jnp.zeros((ROWS, H), f32)
    c = jnp.zeros((ROWS, H), f32)
    for s in range(T):                       # fully unrolled, T static & small
        gh2 = jnp.dot(h, whh_wide, preferred_element_type=f32)    # (ROWS, 8H)
        gh = jnp.where(dir_fwd, gh2[:, :4 * H], gh2[:, 4 * H:])   # vreg-aligned
        gates = xw[s * ROWS:(s + 1) * ROWS, :] + b_gates + gh     # (ROWS, 4H)
        sig = jax.nn.sigmoid(gates[:, 0:3 * H])                   # i | f | o
        i_g = sig[:, 0:H]
        f_g = sig[:, H:2 * H]
        o_g = sig[:, 2 * H:3 * H]
        g_g = jnp.tanh(gates[:, 3 * H:4 * H])
        c = f_g * c + i_g * g_g
        h = o_g * jnp.tanh(c)
        # Step-time stores of BiLSTM outputs in (b, t) row order; these are off
        # the serial critical path and replace the old row-wise reassembly.
        for b in range(B):
            rf = b * T + s                 # forward hidden for time s
            rb = b * T + (T - 1 - s)       # backward hidden for time T-1-s
            scr_f[rf:rf + 1, :] = h[b:b + 1, :]
            scr_b[rb:rb + 1, :] = h[B + b:B + b + 1, :]

    out_all = jnp.concatenate([scr_f[...], scr_b[...]], axis=1)   # (B*T, 2H)

    # ----------------------------- unpack weights -----------------------------
    w_sim = w_r_ref[:, R_WSIM:R_WSIM + L]                         # (2H, L)
    first_w = w_r_ref[:, R_FIRST:R_FIRST + DA]                    # (2H, DA)
    w1_col = w_r_ref[:, R_W1:R_W1 + 1]                            # (2H, 1)
    w2_col = w_r_ref[:, R_W2:R_W2 + 1]                            # (2H, 1)
    final_wT = w_s_ref[:, S_FINW:S_FINW + 2 * H]                  # (H, 2H)
    second_w = w_s_ref[:, S_SECW:S_SECW + L]                      # (DA, L)
    final_bT = w_s_ref[:, S_FINB:S_FINB + 1]                      # (H, 1)
    out_w_col = w_s_ref[:, S_OUTW:S_OUTW + 1]                     # (H, 1)
    b_sim = w_s_ref[0:1, S_BSIM:S_BSIM + L]                       # (1, L)
    first_b = w_s_ref[0:1, S_FB:S_FB + DA]                        # (1, DA)
    second_b = w_s_ref[0:1, S_SB:S_SB + L]                        # (1, L)
    w1_b = w_s_ref[0:1, S_W1B:S_W1B + 1]
    w2_b = w_s_ref[0:1, S_W2B:S_W2B + 1]
    out_bias = w_s_ref[0:1, S_OUTB:S_OUTB + 1]

    # -------- shared projections over all B*T rows (label-query folded) -------
    sim_pre = jnp.dot(out_all, w_sim, preferred_element_type=f32) + b_sim   # (B*T, L)
    sa_h = jnp.tanh(jnp.dot(out_all, first_w, preferred_element_type=f32) + first_b)
    sa_pre = jnp.dot(sa_h, second_w, preferred_element_type=f32) + second_b  # (B*T, L)

    # ---------- per-batch attention + gating + head (transposed, lane = L) ----
    rows = []
    for b in range(B):
        r0 = b * T                                    # tile-aligned row slices
        out_seq = out_all[r0:r0 + T, :]                               # (T, 2H)
        simT = _softmax_t(sim_pre[r0:r0 + T, :])                      # (T, L)
        saT = _softmax_t(sa_pre[r0:r0 + T, :])                        # (T, L)
        out1T = lax.dot_general(out_seq, simT, (((0,), (0,)), ((), ())),
                                preferred_element_type=f32)           # (2H, L)
        out2T = lax.dot_general(out_seq, saT, (((0,), (0,)), ((), ())),
                                preferred_element_type=f32)           # (2H, L)
        f1 = jax.nn.sigmoid(jnp.sum(out1T * w1_col, axis=0, keepdims=True) + w1_b)
        f2 = jax.nn.sigmoid(jnp.sum(out2T * w2_col, axis=0, keepdims=True) + w2_b)
        f1 = f1 * _recip(f1 + f2)
        f2 = 1.0 - f1
        mixT = f1 * out1T + f2 * out2T                                # (2H, L)
        finT = jnp.maximum(
            jnp.dot(final_wT, mixT, preferred_element_type=f32) + final_bT, 0.0)
        logits = jnp.sum(finT * out_w_col, axis=0, keepdims=True) + out_bias
        rows.append(jax.nn.sigmoid(logits))

    o_ref[...] = jnp.concatenate(rows, axis=0)                        # (B, L)


# ------------------------- one-time parameter packing -------------------------
def prepare_params(p, batch=BATCH):
    """Pack all weights into two lane-concatenated slabs (runs ONCE)."""
    f32 = jnp.float32

    def perm(w):   # reorder gate columns i,f,g,o -> i,f,o,g
        return jnp.concatenate(
            [w[..., :2 * H], w[..., 3 * H:4 * H], w[..., 2 * H:3 * H]], axis=-1)

    wih_cat = jnp.concatenate([perm(p["wih_f"]), perm(p["wih_b"])], axis=0)
    whh_wide = jnp.concatenate([perm(p["whh_f"]), perm(p["whh_b"])], axis=1)
    b_gates = jnp.concatenate(
        [jnp.tile(perm(p["b_f"]), (batch, 1)),
         jnp.tile(perm(p["b_b"]), (batch, 1)),
         jnp.zeros((ROWS - 2 * batch, 4 * H), f32)], axis=0)          # (ROWS, 4H)

    lab_q = p["label_emb"] @ p["query_w"] + p["query_b"]              # (L, H)
    w_sim = p["key_w"] @ lab_q.T                                      # (2H, L)
    b_sim = p["key_b"] @ lab_q.T                                      # (1, L)

    slab_r = jnp.concatenate(
        [wih_cat, w_sim, p["first_w"], p["w1_w"], p["w2_w"]], axis=1).astype(f32)

    def pad_rows(a, rows):
        return jnp.concatenate(
            [a, jnp.zeros((rows - a.shape[0], a.shape[1]), f32)], axis=0)

    bias_row = jnp.concatenate([b_sim, p["first_b"], p["second_b"],
                                p["w1_b"], p["w2_b"], p["out_b"]], axis=1)
    slab_s = jnp.concatenate(
        [whh_wide, pad_rows(b_gates, H), p["final_w"].T, p["second_w"],
         p["final_b"].T, p["out_w"], pad_rows(bias_row, H)], axis=1).astype(f32)

    assert slab_r.shape == (2 * E, R_WIDTH)
    assert slab_s.shape == (H, S_WIDTH)
    return slab_r, slab_s


# ------------------------------- wrapper --------------------------------------
def hybrid_xml_forward(x_ids, emb_table, slab_r, slab_s):
    # Only input-dependent glue here: frozen nn.Embedding gather + layout.
    B, T = x_ids.shape
    emb = emb_table[x_ids].astype(jnp.float32)                        # (B, T, E)
    emb_tm = jnp.transpose(emb, (1, 0, 2))                            # (T, B, E)
    zeros = jnp.zeros_like(emb_tm)
    fwd = jnp.concatenate([emb_tm, zeros], axis=-1)                   # [x | 0]
    bwd = jnp.concatenate([zeros, emb_tm[::-1]], axis=-1)             # [0 | x_rev]
    pad = jnp.zeros((T, ROWS - 2 * B, 2 * E), jnp.float32)
    emb_ext = jnp.concatenate([fwd, bwd, pad], axis=1).reshape(T * ROWS, 2 * E)

    vmem = pltpu.MemorySpace.VMEM
    return pl.pallas_call(
        hybrid_xml_kernel,
        out_shape=jax.ShapeDtypeStruct((B, NUM_LABELS), jnp.float32),
        in_specs=[pl.BlockSpec(memory_space=vmem),
                  pl.BlockSpec(memory_space=vmem),
                  pl.BlockSpec(memory_space=vmem)],
        out_specs=pl.BlockSpec(memory_space=vmem),
        scratch_shapes=[pltpu.VMEM((B * T, H), jnp.float32),   # fwd hidden stack
                        pltpu.VMEM((B * T, H), jnp.float32)],  # bwd hidden stack
    )(emb_ext, slab_r, slab_s)


# --------------------------- pure-JAX reference --------------------------------
def reference_forward(x_ids, p):
    emb = p["emb"][x_ids].astype(jnp.float32)                         # (B, T, E)

    def cell(wih, whh, b):
        def step(carry, x_t):
            h, c = carry
            g = x_t @ wih + h @ whh + b[0]
            i = jax.nn.sigmoid(g[:H])
            f = jax.nn.sigmoid(g[H:2 * H])
            gg = jnp.tanh(g[2 * H:3 * H])
            o = jax.nn.sigmoid(g[3 * H:])
            c = f * c + i * gg
            h = o * jnp.tanh(c)
            return (h, c), h
        return step

    def run_seq(emb_b):
        init = (jnp.zeros(H, jnp.float32), jnp.zeros(H, jnp.float32))
        _, hf = lax.scan(cell(p["wih_f"], p["whh_f"], p["b_f"]), init, emb_b)
        _, hb = lax.scan(cell(p["wih_b"], p["whh_b"], p["b_b"]), init,
                         emb_b[::-1])
        return jnp.concatenate([hf, hb[::-1]], axis=-1)               # (T, 2H)

    output = jax.vmap(run_seq)(emb)                                   # (B, T, 2H)
    attn_key = output @ p["key_w"] + p["key_b"][0]                    # (B, T, H)
    lab_q = p["label_emb"] @ p["query_w"] + p["query_b"][0]           # (L, H)
    sim = jnp.einsum("lh,bth->blt", lab_q, attn_key)
    sim = jax.nn.softmax(sim, axis=2)
    out1 = jnp.einsum("blt,btd->bld", sim, output)
    sa = jnp.tanh(output @ p["first_w"] + p["first_b"][0])
    sa = sa @ p["second_w"] + p["second_b"][0]                        # (B, T, L)
    sa = jax.nn.softmax(sa, axis=1)
    out2 = jnp.einsum("btl,btd->bld", sa, output)
    f1 = jax.nn.sigmoid(out1 @ p["w1_w"] + p["w1_b"][0])
    f2 = jax.nn.sigmoid(out2 @ p["w2_w"] + p["w2_b"][0])
    f1 = f1 / (f1 + f2)
    f2 = 1.0 - f1
    mix = f1 * out1 + f2 * out2
    fin = jax.nn.relu(mix @ p["final_w"] + p["final_b"][0])
    return jax.nn.sigmoid((fin @ p["out_w"] + p["out_b"][0])[..., 0])


# --------------------------------- main ---------------------------------------
if __name__ == "__main__":
    key = jax.random.PRNGKey(0)
    ks = jax.random.split(key, 32)

    def rnd(k, shape, scale=0.1):
        return (scale * jax.random.normal(k, shape)).astype(jnp.float32)

    params = {
        "emb": rnd(ks[0], (VOCAB, E), 0.5),
        # LSTM (forward / reverse), weights stored transposed: (in, 4H)
        "wih_f": rnd(ks[1], (E, 4 * H)), "whh_f": rnd(ks[2], (H, 4 * H)),
        "b_f": rnd(ks[3], (1, 4 * H)),
        "wih_b": rnd(ks[4], (E, 4 * H)), "whh_b": rnd(ks[5], (H, 4 * H)),
        "b_b": rnd(ks[6], (1, 4 * H)),
        "key_w": rnd(ks[7], (2 * H, H)), "key_b": rnd(ks[8], (1, H)),
        "query_w": rnd(ks[9], (H, H)), "query_b": rnd(ks[10], (1, H)),
        "label_emb": rnd(ks[11], (L, H)),
        "first_w": rnd(ks[12], (2 * H, DA)), "first_b": rnd(ks[13], (1, DA)),
        "second_w": rnd(ks[14], (DA, L)), "second_b": rnd(ks[15], (1, L)),
        "w1_w": rnd(ks[16], (2 * H, 1)), "w1_b": rnd(ks[17], (1, 1)),
        "w2_w": rnd(ks[18], (2 * H, 1)), "w2_b": rnd(ks[19], (1, 1)),
        "final_w": rnd(ks[20], (2 * H, H)), "final_b": rnd(ks[21], (1, H)),
        "out_w": rnd(ks[22], (H, 1)), "out_b": rnd(ks[23], (1, 1)),
    }

    x_ids = jax.random.randint(ks[24], (BATCH, SEQ), 0, VOCAB, dtype=jnp.int32)

    # One-time weight packing (hoisted out of the per-call path).
    slab_r, slab_s = prepare_params(params)
    slab_r = jax.block_until_ready(slab_r)
    slab_s = jax.block_until_ready(slab_s)

    fwd_fn = jax.jit(hybrid_xml_forward)
    out = jax.block_until_ready(fwd_fn(x_ids, params["emb"], slab_r, slab_s))

    ref = jax.block_until_ready(reference_forward(x_ids, params))
    np.testing.assert_allclose(np.asarray(out), np.asarray(ref),
                               rtol=1e-3, atol=1e-3)

    assert out.shape == (BATCH, NUM_LABELS)
    print("KERNEL_OK")
</pallas_src>

<mosaic_0001>
module attributes {stable_mosaic.version = 11 : i64} {
  func.func @hybrid_xml_kernel(%arg0: memref<64x64xf32, #tpu.memory_space<vmem>>, %arg1: memref<64x178xf32, #tpu.memory_space<vmem>>, %arg2: memref<32x533xf32, #tpu.memory_space<vmem>>, %arg3: memref<2x16xf32, #tpu.memory_space<vmem>>, %arg4: memref<16x32xf32, #tpu.memory_space<vmem>>, %arg5: memref<16x32xf32, #tpu.memory_space<vmem>>) attributes {dimension_semantics = [], scalar_prefetch = 0 : i64, scratch_operands = 2 : i64, tpu.core_type = #tpu.core_type<tc>} {
    %c0 = arith.constant 0 : index
    %c0_0 = arith.constant 0 : index
    %0 = vector.load %arg0[%c0, %c0_0] : memref<64x64xf32, #tpu.memory_space<vmem>>, vector<64x64xf32>
    %c0_1 = arith.constant 0 : index
    %c0_2 = arith.constant 0 : index
    %1 = vector.load %arg1[%c0_1, %c0_2] : memref<64x178xf32, #tpu.memory_space<vmem>>, vector<64x128xf32>
    %cst = arith.constant dense<0.000000e+00> : vector<64x128xf32>
    %2 = tpu.matmul %0, %1, %cst {dimension_numbers = #tpu.dot_dimension_numbers<[1], [0], [0], [1], [0, 0, 1, 1], [], []>} : vector<64x64xf32>, vector<64x128xf32>, vector<64x128xf32> -> vector<64x128xf32>
    %c0_3 = arith.constant 0 : index
    %c0_4 = arith.constant 0 : index
    %3 = vector.load %arg2[%c0_3, %c0_4] : memref<32x533xf32, #tpu.memory_space<vmem>>, vector<32x256xf32>
    %c0_5 = arith.constant 0 : index
    %c256 = arith.constant 256 : index
    %4 = vector.load %arg2[%c0_5, %c256] : memref<32x533xf32, #tpu.memory_space<vmem>>, vector<8x128xf32>
    %5 = tpu.iota {dimensions = array<i32: 0>} : vector<8x1xi32>
    %c2_i32 = arith.constant 2 : i32
    %6 = vector.broadcast %c2_i32 : i32 to vector<8x1xi32>
    %7 = arith.cmpi slt, %5, %6 : vector<8x1xi32>
    %cst_6 = arith.constant 0.000000e+00 : f32
    %8 = vector.broadcast %cst_6 : f32 to vector<8x32xf32>
    %cst_7 = arith.constant 0.000000e+00 : f32
    %9 = vector.broadcast %cst_7 : f32 to vector<8x32xf32>
    %cst_8 = arith.constant dense<0.000000e+00> : vector<8x256xf32>
    %10 = tpu.matmul %8, %3, %cst_8 {dimension_numbers = #tpu.dot_dimension_numbers<[1], [0], [0], [1], [0, 0, 1, 1], [], []>} : vector<8x32xf32>, vector<32x256xf32>, vector<8x256xf32> -> vector<8x256xf32>
    %11 = vector.extract_strided_slice %10 {offsets = [0, 0], sizes = [8, 128], strides = [1, 1]} : vector<8x256xf32> to vector<8x128xf32>
    %12 = vector.extract_strided_slice %10 {offsets = [0, 128], sizes = [8, 128], strides = [1, 1]} : vector<8x256xf32> to vector<8x128xf32>
    %13 = vector.shape_cast %7 : vector<8x1xi1> to vector<8x1xi1>
    %14 = vector.broadcast %13 : vector<8x1xi1> to vector<8x128xi1>
    %15 = arith.select %14, %11, %12 : vector<8x128xi1>, vector<8x128xf32>
    %16 = vector.extract_strided_slice %2 {offsets = [0, 0], sizes = [8, 128], strides = [1, 1]} : vector<64x128xf32> to vector<8x128xf32>
    %17 = arith.addf %16, %4 : vector<8x128xf32>
    %18 = arith.addf %17, %15 : vector<8x128xf32>
    %19 = vector.extract_strided_slice %18 {offsets = [0, 0], sizes = [8, 96], strides = [1, 1]} : vector<8x128xf32> to vector<8x96xf32>
    %20 = arith.negf %19 : vector<8x96xf32>
    %21 = math.exp %20 : vector<8x96xf32>
    %cst_9 = arith.constant 1.000000e+00 : f32
    %22 = vector.broadcast %cst_9 : f32 to vector<8x96xf32>
    %23 = arith.addf %22, %21 : vector<8x96xf32>
    %24 = arith.divf %22, %23 : vector<8x96xf32>
    %25 = vector.extract_strided_slice %24 {offsets = [0, 0], sizes = [8, 32], strides = [1, 1]} : vector<8x96xf32> to vector<8x32xf32>
    %26 = vector.extract_strided_slice %24 {offsets = [0, 32], sizes = [8, 32], strides = [1, 1]} : vector<8x96xf32> to vector<8x32xf32>
    %27 = vector.extract_strided_slice %24 {offsets = [0, 64], sizes = [8, 32], strides = [1, 1]} : vector<8x96xf32> to vector<8x32xf32>
    %28 = vector.extract_strided_slice %18 {offsets = [0, 96], sizes = [8, 32], strides = [1, 1]} : vector<8x128xf32> to vector<8x32xf32>
    %29 = math.tanh %28 : vector<8x32xf32>
    %30 = arith.mulf %26, %9 : vector<8x32xf32>
    %31 = arith.mulf %25, %29 : vector<8x32xf32>
    %32 = arith.addf %30, %31 : vector<8x32xf32>
    %33 = math.tanh %32 : vector<8x32xf32>
    %34 = arith.mulf %27, %33 : vector<8x32xf32>
    %35 = vector.extract_strided_slice %34 {offsets = [0, 0], sizes = [1, 32], strides = [1, 1]} : vector<8x32xf32> to vector<1x32xf32>
    %c0_10 = arith.constant 0 : index
    %c0_11 = arith.constant 0 : index
    %36 = vector.load %arg4[%c0_10, %c0_11] : memref<16x32xf32, #tpu.memory_space<vmem>>, vector<1x32xf32>
    tpu.vector_store %arg4[%c0_10, %c0_11], %35 {strides = array<i32>} : memref<16x32xf32, #tpu.memory_space<vmem>>, vector<1x32xf32>,
    %37 = vector.extract_strided_slice %34 {offsets = [2, 0], sizes = [1, 32], strides = [1, 1]} : vector<8x32xf32> to vector<1x32xf32>
    %c7 = arith.constant 7 : index
    %c0_12 = arith.constant 0 : index
    %38 = vector.load %arg5[%c7, %c0_12] : memref<16x32xf32, #tpu.memory_space<vmem>>, vector<1x32xf32>
    tpu.vector_store %arg5[%c7, %c0_12], %37 {strides = array<i32>} : memref<16x32xf32, #tpu.memory_space<vmem>>, vector<1x32xf32>,
    %39 = vector.extract_strided_slice %34 {offsets = [1, 0], sizes = [1, 32], strides = [1, 1]} : vector<8x32xf32> to vector<1x32xf32>
    %c8 = arith.constant 8 : index
    %c0_13 = arith.constant 0 : index
    %40 = vector.load %arg4[%c8, %c0_13] : memref<16x32xf32, #tpu.memory_space<vmem>>, vector<1x32xf32>
    tpu.vector_store %arg4[%c8, %c0_13], %39 {strides = array<i32>} : memref<16x32xf32, #tpu.memory_space<vmem>>, vector<1x32xf32>,
    %41 = vector.extract_strided_slice %34 {offsets = [3, 0], sizes = [1, 32], strides = [1, 1]} : vector<8x32xf32> to vector<1x32xf32>
    %c15 = arith.constant 15 : index
    %c0_14 = arith.constant 0 : index
    %42 = vector.load %arg5[%c15, %c0_14] : memref<16x32xf32, #tpu.memory_space<vmem>>, vector<1x32xf32>
    tpu.vector_store %arg5[%c15, %c0_14], %41 {strides = array<i32>} : memref<16x32xf32, #tpu.memory_space<vmem>>, vector<1x32xf32>,
    %cst_15 = arith.constant dense<0.000000e+00> : vector<8x256xf32>
    %43 = tpu.matmul %34, %3, %cst_15 {dimension_numbers = #tpu.dot_dimension_numbers<[1], [0], [0], [1], [0, 0, 1, 1], [], []>} : vector<8x32xf32>, vector<32x256xf32>, vector<8x256xf32> -> vector<8x256xf32>
    %44 = vector.extract_strided_slice %43 {offsets = [0, 0], sizes = [8, 128], strides = [1, 1]} : vector<8x256xf32> to vector<8x128xf32>
    %45 = vector.extract_strided_slice %43 {offsets = [0, 128], sizes = [8, 128], strides = [1, 1]} : vector<8x256xf32> to vector<8x128xf32>
    %46 = vector.shape_cast %7 : vector<8x1xi1> to vector<8x1xi1>
    %47 = vector.broadcast %46 : vector<8x1xi1> to vector<8x128xi1>
    %48 = arith.select %47, %44, %45 : vector<8x128xi1>, vector<8x128xf32>
    %49 = vector.extract_strided_slice %2 {offsets = [8, 0], sizes = [8, 128], strides = [1, 1]} : vector<64x128xf32> to vector<8x128xf32>
    %50 = arith.addf %49, %4 : vector<8x128xf32>
    %51 = arith.addf %50, %48 : vector<8x128xf32>
    %52 = vector.extract_strided_slice %51 {offsets = [0, 0], sizes = [8, 96], strides = [1, 1]} : vector<8x128xf32> to vector<8x96xf32>
    %53 = arith.negf %52 : vector<8x96xf32>
    %54 = math.exp %53 : vector<8x96xf32>
    %cst_16 = arith.constant 1.000000e+00 : f32
    %55 = vector.broadcast %cst_16 : f32 to vector<8x96xf32>
    %56 = arith.addf %55, %54 : vector<8x96xf32>
    %57 = arith.divf %55, %56 : vector<8x96xf32>
    %58 = vector.extract_strided_slice %57 {offsets = [0, 0], sizes = [8, 32], strides = [1, 1]} : vector<8x96xf32> to vector<8x32xf32>
    %59 = vector.extract_strided_slice %57 {offsets = [0, 32], sizes = [8, 32], strides = [1, 1]} : vector<8x96xf32> to vector<8x32xf32>
    %60 = vector.extract_strided_slice %57 {offsets = [0, 64], sizes = [8, 32], strides = [1, 1]} : vector<8x96xf32> to vector<8x32xf32>
    %61 = vector.extract_strided_slice %51 {offsets = [0, 96], sizes = [8, 32], strides = [1, 1]} : vector<8x128xf32> to vector<8x32xf32>
    %62 = math.tanh %61 : vector<8x32xf32>
    %63 = arith.mulf %59, %32 : vector<8x32xf32>
    %64 = arith.mulf %58, %62 : vector<8x32xf32>
    %65 = arith.addf %63, %64 : vector<8x32xf32>
    %66 = math.tanh %65 : vector<8x32xf32>
    %67 = arith.mulf %60, %66 : vector<8x32xf32>
    %68 = vector.extract_strided_slice %67 {offsets = [0, 0], sizes = [1, 32], strides = [1, 1]} : vector<8x32xf32> to vector<1x32xf32>
    %c1 = arith.constant 1 : index
    %c0_17 = arith.constant 0 : index
    %69 = vector.load %arg4[%c1, %c0_17] : memref<16x32xf32, #tpu.memory_space<vmem>>, vector<1x32xf32>
    tpu.vector_store %arg4[%c1, %c0_17], %68 {strides = array<i32>} : memref<16x32xf32, #tpu.memory_space<vmem>>, vector<1x32xf32>,
    %70 = vector.extract_strided_slice %67 {offsets = [2, 0], sizes = [1, 32], strides = [1, 1]} : vector<8x32xf32> to vector<1x32xf32>
    %c6 = arith.constant 6 : index
    %c0_18 = arith.constant 0 : index
    %71 = vector.load %arg5[%c6, %c0_18] : memref<16x32xf32, #tpu.memory_space<vmem>>, vector<1x32xf32>
    tpu.vector_store %arg5[%c6, %c0_18], %70 {strides = array<i32>} : memref<16x32xf32, #tpu.memory_space<vmem>>, vector<1x32xf32>,
    %72 = vector.extract_strided_slice %67 {offsets = [1, 0], sizes = [1, 32], strides = [1, 1]} : vector<8x32xf32> to vector<1x32xf32>
    %c9 = arith.constant 9 : index
    %c0_19 = arith.constant 0 : index
    %73 = vector.load %arg4[%c9, %c0_19] : memref<16x32xf32, #tpu.memory_space<vmem>>, vector<1x32xf32>
    tpu.vector_store %arg4[%c9, %c0_19], %72 {strides = array<i32>} : memref<16x32xf32, #tpu.memory_space<vmem>>, vector<1x32xf32>,
    %74 = vector.extract_strided_slice %67 {offsets = [3, 0], sizes = [1, 32], strides = [1, 1]} : vector<8x32xf32> to vector<1x32xf32>
    %c14 = arith.constant 14 : index
    %c0_20 = arith.constant 0 : index
    %75 = vector.load %arg5[%c14, %c0_20] : memref<16x32xf32, #tpu.memory_space<vmem>>, vector<1x32xf32>
    tpu.vector_store %arg5[%c14, %c0_20], %74 {strides = array<i32>} : memref<16x32xf32, #tpu.memory_space<vmem>>, vector<1x32xf32>,
    %cst_21 = arith.constant dense<0.000000e+00> : vector<8x256xf32>
    %76 = tpu.matmul %67, %3, %cst_21 {dimension_numbers = #tpu.dot_dimension_numbers<[1], [0], [0], [1], [0, 0, 1, 1], [], []>} : vector<8x32xf32>, vector<32x256xf32>, vector<8x256xf32> -> vector<8x256xf32>
    %77 = vector.extract_strided_slice %76 {offsets = [0, 0], sizes = [8, 128], strides = [1, 1]} : vector<8x256xf32> to vector<8x128xf32>
    %78 = vector.extract_strided_slice %76 {offsets = [0, 128], sizes = [8, 128], strides = [1, 1]} : vector<8x256xf32> to vector<8x128xf32>
    %79 = vector.shape_cast %7 : vector<8x1xi1> to vector<8x1xi1>
    %80 = vector.broadcast %79 : vector<8x1xi1> to vector<8x128xi1>
    %81 = arith.select %80, %77, %78 : vector<8x128xi1>, vector<8x128xf32>
    %82 = vector.extract_strided_slice %2 {offsets = [16, 0], sizes = [8, 128], strides = [1, 1]} : vector<64x128xf32> to vector<8x128xf32>
    %83 = arith.addf %82, %4 : vector<8x128xf32>
    %84 = arith.addf %83, %81 : vector<8x128xf32>
    %85 = vector.extract_strided_slice %84 {offsets = [0, 0], sizes = [8, 96], strides = [1, 1]} : vector<8x128xf32> to vector<8x96xf32>
    %86 = arith.negf %85 : vector<8x96xf32>
    %87 = math.exp %86 : vector<8x96xf32>
    %cst_22 = arith.constant 1.000000e+00 : f32
    %88 = vector.broadcast %cst_22 : f32 to vector<8x96xf32>
    %89 = arith.addf %88, %87 : vector<8x96xf32>
    %90 = arith.divf %88, %89 : vector<8x96xf32>
    %91 = vector.extract_strided_slice %90 {offsets = [0, 0], sizes = [8, 32], strides = [1, 1]} : vector<8x96xf32> to vector<8x32xf32>
    %92 = vector.extract_strided_slice %90 {offsets = [0, 32], sizes = [8, 32], strides = [1, 1]} : vector<8x96xf32> to vector<8x32xf32>
    %93 = vector.extract_strided_slice %90 {offsets = [0, 64], sizes = [8, 32], strides = [1, 1]} : vector<8x96xf32> to vector<8x32xf32>
    %94 = vector.extract_strided_slice %84 {offsets = [0, 96], sizes = [8, 32], strides = [1, 1]} : vector<8x128xf32> to vector<8x32xf32>
    %95 = math.tanh %94 : vector<8x32xf32>
    %96 = arith.mulf %92, %65 : vector<8x32xf32>
    %97 = arith.mulf %91, %95 : vector<8x32xf32>
    %98 = arith.addf %96, %97 : vector<8x32xf32>
    %99 = math.tanh %98 : vector<8x32xf32>
    %100 = arith.mulf %93, %99 : vector<8x32xf32>
    %101 = vector.extract_strided_slice %100 {offsets = [0, 0], sizes = [1, 32], strides = [1, 1]} : vector<8x32xf32> to vector<1x32xf32>
    %c2 = arith.constant 2 : index
    %c0_23 = arith.constant 0 : index
    %102 = vector.load %arg4[%c2, %c0_23] : memref<16x32xf32, #tpu.memory_space<vmem>>, vector<1x32xf32>
    tpu.vector_store %arg4[%c2, %c0_23], %101 {strides = array<i32>} : memref<16x32xf32, #tpu.memory_space<vmem>>, vector<1x32xf32>,
    %103 = vector.extract_strided_slice %100 {offsets = [2, 0], sizes = [1, 32], strides = [1, 1]} : vector<8x32xf32> to vector<1x32xf32>
    %c5 = arith.constant 5 : index
    %c0_24 = arith.constant 0 : index
    %104 = vector.load %arg5[%c5, %c0_24] : memref<16x32xf32, #tpu.memory_space<vmem>>, vector<1x32xf32>
    tpu.vector_store %arg5[%c5, %c0_24], %103 {strides = array<i32>} : memref<16x32xf32, #tpu.memory_space<vmem>>, vector<1x32xf32>,
    %105 = vector.extract_strided_slice %100 {offsets = [1, 0], sizes = [1, 32], strides = [1, 1]} : vector<8x32xf32> to vector<1x32xf32>
    %c10 = arith.constant 10 : index
    %c0_25 = arith.constant 0 : index
    %106 = vector.load %arg4[%c10, %c0_25] : memref<16x32xf32, #tpu.memory_space<vmem>>, vector<1x32xf32>
    tpu.vector_store %arg4[%c10, %c0_25], %105 {strides = array<i32>} : memref<16x32xf32, #tpu.memory_space<vmem>>, vector<1x32xf32>,
    %107 = vector.extract_strided_slice %100 {offsets = [3, 0], sizes = [1, 32], strides = [1, 1]} : vector<8x32xf32> to vector<1x32xf32>
    %c13 = arith.constant 13 : index
    %c0_26 = arith.constant 0 : index
    %108 = vector.load %arg5[%c13, %c0_26] : memref<16x32xf32, #tpu.memory_space<vmem>>, vector<1x32xf32>
    tpu.vector_store %arg5[%c13, %c0_26], %107 {strides = array<i32>} : memref<16x32xf32, #tpu.memory_space<vmem>>, vector<1x32xf32>,
    %cst_27 = arith.constant dense<0.000000e+00> : vector<8x256xf32>
    %109 = tpu.matmul %100, %3, %cst_27 {dimension_numbers = #tpu.dot_dimension_numbers<[1], [0], [0], [1], [0, 0, 1, 1], [], []>} : vector<8x32xf32>, vector<32x256xf32>, vector<8x256xf32> -> vector<8x256xf32>
    %110 = vector.extract_strided_slice %109 {offsets = [0, 0], sizes = [8, 128], strides = [1, 1]} : vector<8x256xf32> to vector<8x128xf32>
    %111 = vector.extract_strided_slice %109 {offsets = [0, 128], sizes = [8, 128], strides = [1, 1]} : vector<8x256xf32> to vector<8x128xf32>
    %112 = vector.shape_cast %7 : vector<8x1xi1> to vector<8x1xi1>
    %113 = vector.broadcast %112 : vector<8x1xi1> to vector<8x128xi1>
    %114 = arith.select %113, %110, %111 : vector<8x128xi1>, vector<8x128xf32>
    %115 = vector.extract_strided_slice %2 {offsets = [24, 0], sizes = [8, 128], strides = [1, 1]} : vector<64x128xf32> to vector<8x128xf32>
    %116 = arith.addf %115, %4 : vector<8x128xf32>
    %117 = arith.addf %116, %114 : vector<8x128xf32>
    %118 = vector.extract_strided_slice %117 {offsets = [0, 0], sizes = [8, 96], strides = [1, 1]} : vector<8x128xf32> to vector<8x96xf32>
    %119 = arith.negf %118 : vector<8x96xf32>
    %120 = math.exp %119 : vector<8x96xf32>
    %cst_28 = arith.constant 1.000000e+00 : f32
    %121 = vector.broadcast %cst_28 : f32 to vector<8x96xf32>
    %122 = arith.addf %121, %120 : vector<8x96xf32>
    %123 = arith.divf %121, %122 : vector<8x96xf32>
    %124 = vector.extract_strided_slice %123 {offsets = [0, 0], sizes = [8, 32], strides = [1, 1]} : vector<8x96xf32> to vector<8x32xf32>
    %125 = vector.extract_strided_slice %123 {offsets = [0, 32], sizes = [8, 32], strides = [1, 1]} : vector<8x96xf32> to vector<8x32xf32>
    %126 = vector.extract_strided_slice %123 {offsets = [0, 64], sizes = [8, 32], strides = [1, 1]} : vector<8x96xf32> to vector<8x32xf32>
    %127 = vector.extract_strided_slice %117 {offsets = [0, 96], sizes = [8, 32], strides = [1, 1]} : vector<8x128xf32> to vector<8x32xf32>
    %128 = math.tanh %127 : vector<8x32xf32>
    %129 = arith.mulf %125, %98 : vector<8x32xf32>
    %130 = arith.mulf %124, %128 : vector<8x32xf32>
    %131 = arith.addf %129, %130 : vector<8x32xf32>
    %132 = math.tanh %131 : vector<8x32xf32>
    %133 = arith.mulf %126, %132 : vector<8x32xf32>
    %134 = vector.extract_strided_slice %133 {offsets = [0, 0], sizes = [1, 32], strides = [1, 1]} : vector<8x32xf32> to vector<1x32xf32>
    %c3 = arith.constant 3 : index
    %c0_29 = arith.constant 0 : index
    %135 = vector.load %arg4[%c3, %c0_29] : memref<16x32xf32, #tpu.memory_space<vmem>>, vector<1x32xf32>
    tpu.vector_store %arg4[%c3, %c0_29], %134 {strides = array<i32>} : memref<16x32xf32, #tpu.memory_space<vmem>>, vector<1x32xf32>,
    %136 = vector.extract_strided_slice %133 {offsets = [2, 0], sizes = [1, 32], strides = [1, 1]} : vector<8x32xf32> to vector<1x32xf32>
    %c4 = arith.constant 4 : index
    %c0_30 = arith.constant 0 : index
    %137 = vector.load %arg5[%c4, %c0_30] : memref<16x32xf32, #tpu.memory_space<vmem>>, vector<1x32xf32>
    tpu.vector_store %arg5[%c4, %c0_30], %136 {strides = array<i32>} : memref<16x32xf32, #tpu.memory_space<vmem>>, vector<1x32xf32>,
    %138 = vector.extract_strided_slice %133 {offsets = [1, 0], sizes = [1, 32], strides = [1, 1]} : vector<8x32xf32> to vector<1x32xf32>
    %c11 = arith.constant 11 : index
    %c0_31 = arith.constant 0 : index
    %139 = vector.load %arg4[%c11, %c0_31] : memref<16x32xf32, #tpu.memory_space<vmem>>, vector<1x32xf32>
    tpu.vector_store %arg4[%c11, %c0_31], %138 {strides = array<i32>} : memref<16x32xf32, #tpu.memory_space<vmem>>, vector<1x32xf32>,
    %140 = vector.extract_strided_slice %133 {offsets = [3, 0], sizes = [1, 32], strides = [1, 1]} : vector<8x32xf32> to vector<1x32xf32>
    %c12 = arith.constant 12 : index
    %c0_32 = arith.constant 0 : index
    %141 = vector.load %arg5[%c12, %c0_32] : memref<16x32xf32, #tpu.memory_space<vmem>>, vector<1x32xf32>
    tpu.vector_store %arg5[%c12, %c0_32], %140 {strides = array<i32>} : memref<16x32xf32, #tpu.memory_space<vmem>>, vector<1x32xf32>,
    %cst_33 = arith.constant dense<0.000000e+00> : vector<8x256xf32>
    %142 = tpu.matmul %133, %3, %cst_33 {dimension_numbers = #tpu.dot_dimension_numbers<[1], [0], [0], [1], [0, 0, 1, 1], [], []>} : vector<8x32xf32>, vector<32x256xf32>, vector<8x256xf32> -> vector<8x256xf32>
    %143 = vector.extract_strided_slice %142 {offsets = [0, 0], sizes = [8, 128], strides = [1, 1]} : vector<8x256xf32> to vector<8x128xf32>
    %144 = vector.extract_strided_slice %142 {offsets = [0, 128], sizes = [8, 128], strides = [1, 1]} : vector<8x256xf32> to vector<8x128xf32>
    %145 = vector.shape_cast %7 : vector<8x1xi1> to vector<8x1xi1>
    %146 = vector.broadcast %145 : vector<8x1xi1> to vector<8x128xi1>
    %147 = arith.select %146, %143, %144 : vector<8x128xi1>, vector<8x128xf32>
    %148 = vector.extract_strided_slice %2 {offsets = [32, 0], sizes = [8, 128], strides = [1, 1]} : vector<64x128xf32> to vector<8x128xf32>
    %149 = arith.addf %148, %4 : vector<8x128xf32>
    %150 = arith.addf %149, %147 : vector<8x128xf32>
    %151 = vector.extract_strided_slice %150 {offsets = [0, 0], sizes = [8, 96], strides = [1, 1]} : vector<8x128xf32> to vector<8x96xf32>
    %152 = arith.negf %151 : vector<8x96xf32>
    %153 = math.exp %152 : vector<8x96xf32>
    %cst_34 = arith.constant 1.000000e+00 : f32
    %154 = vector.broadcast %cst_34 : f32 to vector<8x96xf32>
    %155 = arith.addf %154, %153 : vector<8x96xf32>
    %156 = arith.divf %154, %155 : vector<8x96xf32>
    %157 = vector.extract_strided_slice %156 {offsets = [0, 0], sizes = [8, 32], strides = [1, 1]} : vector<8x96xf32> to vector<8x32xf32>
    %158 = vector.extract_strided_slice %156 {offsets = [0, 32], sizes = [8, 32], strides = [1, 1]} : vector<8x96xf32> to vector<8x32xf32>
    %159 = vector.extract_strided_slice %156 {offsets = [0, 64], sizes = [8, 32], strides = [1, 1]} : vector<8x96xf32> to vector<8x32xf32>
    %160 = vector.extract_strided_slice %150 {offsets = [0, 96], sizes = [8, 32], strides = [1, 1]} : vector<8x128xf32> to vector<8x32xf32>
    %161 = math.tanh %160 : vector<8x32xf32>
    %162 = arith.mulf %158, %131 : vector<8x32xf32>
    %163 = arith.mulf %157, %161 : vector<8x32xf32>
    %164 = arith.addf %162, %163 : vector<8x32xf32>
    %165 = math.tanh %164 : vector<8x32xf32>
    %166 = arith.mulf %159, %165 : vector<8x32xf32>
    %167 = vector.extract_strided_slice %166 {offsets = [0, 0], sizes = [1, 32], strides = [1, 1]} : vector<8x32xf32> to vector<1x32xf32>
    %c4_35 = arith.constant 4 : index
    %c0_36 = arith.constant 0 : index
    %168 = vector.load %arg4[%c4_35, %c0_36] : memref<16x32xf32, #tpu.memory_space<vmem>>, vector<1x32xf32>
    tpu.vector_store %arg4[%c4_35, %c0_36], %167 {strides = array<i32>} : memref<16x32xf32, #tpu.memory_space<vmem>>, vector<1x32xf32>,
    %169 = vector.extract_strided_slice %166 {offsets = [2, 0], sizes = [1, 32], strides = [1, 1]} : vector<8x32xf32> to vector<1x32xf32>
    %c3_37 = arith.constant 3 : index
    %c0_38 = arith.constant 0 : index
    %170 = vector.load %arg5[%c3_37, %c0_38] : memref<16x32xf32, #tpu.memory_space<vmem>>, vector<1x32xf32>
    tpu.vector_store %arg5[%c3_37, %c0_38], %169 {strides = array<i32>} : memref<16x32xf32, #tpu.memory_space<vmem>>, vector<1x32xf32>,
    %171 = vector.extract_strided_slice %166 {offsets = [1, 0], sizes = [1, 32], strides = [1, 1]} : vector<8x32xf32> to vector<1x32xf32>
    %c12_39 = arith.constant 12 : index
    %c0_40 = arith.constant 0 : index
    %172 = vector.load %arg4[%c12_39, %c0_40] : memref<16x32xf32, #tpu.memory_space<vmem>>, vector<1x32xf32>
    tpu.vector_store %arg4[%c12_39, %c0_40], %171 {strides = array<i32>} : memref<16x32xf32, #tpu.memory_space<vmem>>, vector<1x32xf32>,
    %173 = vector.extract_strided_slice %166 {offsets = [3, 0], sizes = [1, 32], strides = [1, 1]} : vector<8x32xf32> to vector<1x32xf32>
    %c11_41 = arith.constant 11 : index
    %c0_42 = arith.constant 0 : index
    %174 = vector.load %arg5[%c11_41, %c0_42] : memref<16x32xf32, #tpu.memory_space<vmem>>, vector<1x32xf32>
    tpu.vector_store %arg5[%c11_41, %c0_42], %173 {strides = array<i32>} : memref<16x32xf32, #tpu.memory_space<vmem>>, vector<1x32xf32>,
    %cst_43 = arith.constant dense<0.000000e+00> : vector<8x256xf32>
    %175 = tpu.matmul %166, %3, %cst_43 {dimension_numbers = #tpu.dot_dimension_numbers<[1], [0], [0], [1], [0, 0, 1, 1], [], []>} : vector<8x32xf32>, vector<32x256xf32>, vector<8x256xf32> -> vector<8x256xf32>
    %176 = vector.extract_strided_slice %175 {offsets = [0, 0], sizes = [8, 128], strides = [1, 1]} : vector<8x256xf32> to vector<8x128xf32>
    %177 = vector.extract_strided_slice %175 {offsets = [0, 128], sizes = [8, 128], strides = [1, 1]} : vector<8x256xf32> to vector<8x128xf32>
    %178 = vector.shape_cast %7 : vector<8x1xi1> to vector<8x1xi1>
    %179 = vector.broadcast %178 : vector<8x1xi1> to vector<8x128xi1>
    %180 = arith.select %179, %176, %177 : vector<8x128xi1>, vector<8x128xf32>
    %181 = vector.extract_strided_slice %2 {offsets = [40, 0], sizes = [8, 128], strides = [1, 1]} : vector<64x128xf32> to vector<8x128xf32>
    %182 = arith.addf %181, %4 : vector<8x128xf32>
    %183 = arith.addf %182, %180 : vector<8x128xf32>
    %184 = vector.extract_strided_slice %183 {offsets = [0, 0], sizes = [8, 96], strides = [1, 1]} : vector<8x128xf32> to vector<8x96xf32>
    %185 = arith.negf %184 : vector<8x96xf32>
    %186 = math.exp %185 : vector<8x96xf32>
    %cst_44 = arith.constant 1.000000e+00 : f32
    %187 = vector.broadcast %cst_44 : f32 to vector<8x96xf32>
    %188 = arith.addf %187, %186 : vector<8x96xf32>
    %189 = arith.divf %187, %188 : vector<8x96xf32>
    %190 = vector.extract_strided_slice %189 {offsets = [0, 0], sizes = [8, 32], strides = [1, 1]} : vector<8x96xf32> to vector<8x32xf32>
    %191 = vector.extract_strided_slice %189 {offsets = [0, 32], sizes = [8, 32], strides = [1, 1]} : vector<8x96xf32> to vector<8x32xf32>
    %192 = vector.extract_strided_slice %189 {offsets = [0, 64], sizes = [8, 32], strides = [1, 1]} : vector<8x96xf32> to vector<8x32xf32>
    %193 = vector.extract_strided_slice %183 {offsets = [0, 96], sizes = [8, 32], strides = [1, 1]} : vector<8x128xf32> to vector<8x32xf32>
    %194 = math.tanh %193 : vector<8x32xf32>
    %195 = arith.mulf %191, %164 : vector<8x32xf32>
    %196 = arith.mulf %190, %194 : vector<8x32xf32>
    %197 = arith.addf %195, %196 : vector<8x32xf32>
    %198 = math.tanh %197 : vector<8x32xf32>
    %199 = arith.mulf %192, %198 : vector<8x32xf32>
    %200 = vector.extract_strided_slice %199 {offsets = [0, 0], sizes = [1, 32], strides = [1, 1]} : vector<8x32xf32> to vector<1x32xf32>
    %c5_45 = arith.constant 5 : index
    %c0_46 = arith.constant 0 : index
    %201 = vector.load %arg4[%c5_45, %c0_46] : memref<16x32xf32, #tpu.memory_space<vmem>>, vector<1x32xf32>
    tpu.vector_store %arg4[%c5_45, %c0_46], %200 {strides = array<i32>} : memref<16x32xf32, #tpu.memory_space<vmem>>, vector<1x32xf32>,
    %202 = vector.extract_strided_slice %199 {offsets = [2, 0], sizes = [1, 32], strides = [1, 1]} : vector<8x32xf32> to vector<1x32xf32>
    %c2_47 = arith.constant 2 : index
    %c0_48 = arith.constant 0 : index
    %203 = vector.load %arg5[%c2_47, %c0_48] : memref<16x32xf32, #tpu.memory_space<vmem>>, vector<1x32xf32>
    tpu.vector_store %arg5[%c2_47, %c0_48], %202 {strides = array<i32>} : memref<16x32xf32, #tpu.memory_space<vmem>>, vector<1x32xf32>,
    %204 = vector.extract_strided_slice %199 {offsets = [1, 0], sizes = [1, 32], strides = [1, 1]} : vector<8x32xf32> to vector<1x32xf32>
    %c13_49 = arith.constant 13 : index
    %c0_50 = arith.constant 0 : index
    %205 = vector.load %arg4[%c13_49, %c0_50] : memref<16x32xf32, #tpu.memory_space<vmem>>, vector<1x32xf32>
    tpu.vector_store %arg4[%c13_49, %c0_50], %204 {strides = array<i32>} : memref<16x32xf32, #tpu.memory_space<vmem>>, vector<1x32xf32>,
    %206 = vector.extract_strided_slice %199 {offsets = [3, 0], sizes = [1, 32], strides = [1, 1]} : vector<8x32xf32> to vector<1x32xf32>
    %c10_51 = arith.constant 10 : index
    %c0_52 = arith.constant 0 : index
    %207 = vector.load %arg5[%c10_51, %c0_52] : memref<16x32xf32, #tpu.memory_space<vmem>>, vector<1x32xf32>
    tpu.vector_store %arg5[%c10_51, %c0_52], %206 {strides = array<i32>} : memref<16x32xf32, #tpu.memory_space<vmem>>, vector<1x32xf32>,
    %cst_53 = arith.constant dense<0.000000e+00> : vector<8x256xf32>
    %208 = tpu.matmul %199, %3, %cst_53 {dimension_numbers = #tpu.dot_dimension_numbers<[1], [0], [0], [1], [0, 0, 1, 1], [], []>} : vector<8x32xf32>, vector<32x256xf32>, vector<8x256xf32> -> vector<8x256xf32>
    %209 = vector.extract_strided_slice %208 {offsets = [0, 0], sizes = [8, 128], strides = [1, 1]} : vector<8x256xf32> to vector<8x128xf32>
    %210 = vector.extract_strided_slice %208 {offsets = [0, 128], sizes = [8, 128], strides = [1, 1]} : vector<8x256xf32> to vector<8x128xf32>
    %211 = vector.shape_cast %7 : vector<8x1xi1> to vector<8x1xi1>
    %212 = vector.broadcast %211 : vector<8x1xi1> to vector<8x128xi1>
    %213 = arith.select %212, %209, %210 : vector<8x128xi1>, vector<8x128xf32>
    %214 = vector.extract_strided_slice %2 {offsets = [48, 0], sizes = [8, 128], strides = [1, 1]} : vector<64x128xf32> to vector<8x128xf32>
    %215 = arith.addf %214, %4 : vector<8x128xf32>
    %216 = arith.addf %215, %213 : vector<8x128xf32>
    %217 = vector.extract_strided_slice %216 {offsets = [0, 0], sizes = [8, 96], strides = [1, 1]} : vector<8x128xf32> to vector<8x96xf32>
    %218 = arith.negf %217 : vector<8x96xf32>
    %219 = math.exp %218 : vector<8x96xf32>
    %cst_54 = arith.constant 1.000000e+00 : f32
    %220 = vector.broadcast %cst_54 : f32 to vector<8x96xf32>
    %221 = arith.addf %220, %219 : vector<8x96xf32>
    %222 = arith.divf %220, %221 : vector<8x96xf32>
    %223 = vector.extract_strided_slice %222 {offsets = [0, 0], sizes = [8, 32], strides = [1, 1]} : vector<8x96xf32> to vector<8x32xf32>
    %224 = vector.extract_strided_slice %222 {offsets = [0, 32], sizes = [8, 32], strides = [1, 1]} : vector<8x96xf32> to vector<8x32xf32>
    %225 = vector.extract_strided_slice %222 {offsets = [0, 64], sizes = [8, 32], strides = [1, 1]} : vector<8x96xf32> to vector<8x32xf32>
    %226 = vector.extract_strided_slice %216 {offsets = [0, 96], sizes = [8, 32], strides = [1, 1]} : vector<8x128xf32> to vector<8x32xf32>
    %227 = math.tanh %226 : vector<8x32xf32>
    %228 = arith.mulf %224, %197 : vector<8x32xf32>
    %229 = arith.mulf %223, %227 : vector<8x32xf32>
    %230 = arith.addf %228, %229 : vector<8x32xf32>
    %231 = math.tanh %230 : vector<8x32xf32>
    %232 = arith.mulf %225, %231 : vector<8x32xf32>
    %233 = vector.extract_strided_slice %232 {offsets = [0, 0], sizes = [1, 32], strides = [1, 1]} : vector<8x32xf32> to vector<1x32xf32>
    %c6_55 = arith.constant 6 : index
    %c0_56 = arith.constant 0 : index
    %234 = vector.load %arg4[%c6_55, %c0_56] : memref<16x32xf32, #tpu.memory_space<vmem>>, vector<1x32xf32>
    tpu.vector_store %arg4[%c6_55, %c0_56], %233 {strides = array<i32>} : memref<16x32xf32, #tpu.memory_space<vmem>>, vector<1x32xf32>,
    %235 = vector.extract_strided_slice %232 {offsets = [2, 0], sizes = [1, 32], strides = [1, 1]} : vector<8x32xf32> to vector<1x32xf32>
    %c1_57 = arith.constant 1 : index
    %c0_58 = arith.constant 0 : index
    %236 = vector.load %arg5[%c1_57, %c0_58] : memref<16x32xf32, #tpu.memory_space<vmem>>, vector<1x32xf32>
    tpu.vector_store %arg5[%c1_57, %c0_58], %235 {strides = array<i32>} : memref<16x32xf32, #tpu.memory_space<vmem>>, vector<1x32xf32>,
    %237 = vector.extract_strided_slice %232 {offsets = [1, 0], sizes = [1, 32], strides = [1, 1]} : vector<8x32xf32> to vector<1x32xf32>
    %c14_59 = arith.constant 14 : index
    %c0_60 = arith.constant 0 : index
    %238 = vector.load %arg4[%c14_59, %c0_60] : memref<16x32xf32, #tpu.memory_space<vmem>>, vector<1x32xf32>
    tpu.vector_store %arg4[%c14_59, %c0_60], %237 {strides = array<i32>} : memref<16x32xf32, #tpu.memory_space<vmem>>, vector<1x32xf32>,
    %239 = vector.extract_strided_slice %232 {offsets = [3, 0], sizes = [1, 32], strides = [1, 1]} : vector<8x32xf32> to vector<1x32xf32>
    %c9_61 = arith.constant 9 : index
    %c0_62 = arith.constant 0 : index
    %240 = vector.load %arg5[%c9_61, %c0_62] : memref<16x32xf32, #tpu.memory_space<vmem>>, vector<1x32xf32>
    tpu.vector_store %arg5[%c9_61, %c0_62], %239 {strides = array<i32>} : memref<16x32xf32, #tpu.memory_space<vmem>>, vector<1x32xf32>,
    %cst_63 = arith.constant dense<0.000000e+00> : vector<8x256xf32>
    %241 = tpu.matmul %232, %3, %cst_63 {dimension_numbers = #tpu.dot_dimension_numbers<[1], [0], [0], [1], [0, 0, 1, 1], [], []>} : vector<8x32xf32>, vector<32x256xf32>, vector<8x256xf32> -> vector<8x256xf32>
    %242 = vector.extract_strided_slice %241 {offsets = [0, 0], sizes = [8, 128], strides = [1, 1]} : vector<8x256xf32> to vector<8x128xf32>
    %243 = vector.extract_strided_slice %241 {offsets = [0, 128], sizes = [8, 128], strides = [1, 1]} : vector<8x256xf32> to vector<8x128xf32>
    %244 = vector.shape_cast %7 : vector<8x1xi1> to vector<8x1xi1>
    %245 = vector.broadcast %244 : vector<8x1xi1> to vector<8x128xi1>
    %246 = arith.select %245, %242, %243 : vector<8x128xi1>, vector<8x128xf32>
    %247 = vector.extract_strided_slice %2 {offsets = [56, 0], sizes = [8, 128], strides = [1, 1]} : vector<64x128xf32> to vector<8x128xf32>
    %248 = arith.addf %247, %4 : vector<8x128xf32>
    %249 = arith.addf %248, %246 : vector<8x128xf32>
    %250 = vector.extract_strided_slice %249 {offsets = [0, 0], sizes = [8, 96], strides = [1, 1]} : vector<8x128xf32> to vector<8x96xf32>
    %251 = arith.negf %250 : vector<8x96xf32>
    %252 = math.exp %251 : vector<8x96xf32>
    %cst_64 = arith.constant 1.000000e+00 : f32
    %253 = vector.broadcast %cst_64 : f32 to vector<8x96xf32>
    %254 = arith.addf %253, %252 : vector<8x96xf32>
    %255 = arith.divf %253, %254 : vector<8x96xf32>
    %256 = vector.extract_strided_slice %255 {offsets = [0, 0], sizes = [8, 32], strides = [1, 1]} : vector<8x96xf32> to vector<8x32xf32>
    %257 = vector.extract_strided_slice %255 {offsets = [0, 32], sizes = [8, 32], strides = [1, 1]} : vector<8x96xf32> to vector<8x32xf32>
    %258 = vector.extract_strided_slice %255 {offsets = [0, 64], sizes = [8, 32], strides = [1, 1]} : vector<8x96xf32> to vector<8x32xf32>
    %259 = vector.extract_strided_slice %249 {offsets = [0, 96], sizes = [8, 32], strides = [1, 1]} : vector<8x128xf32> to vector<8x32xf32>
    %260 = math.tanh %259 : vector<8x32xf32>
    %261 = arith.mulf %257, %230 : vector<8x32xf32>
    %262 = arith.mulf %256, %260 : vector<8x32xf32>
    %263 = arith.addf %261, %262 : vector<8x32xf32>
    %264 = math.tanh %263 : vector<8x32xf32>
    %265 = arith.mulf %258, %264 : vector<8x32xf32>
    %266 = vector.extract_strided_slice %265 {offsets = [0, 0], sizes = [1, 32], strides = [1, 1]} : vector<8x32xf32> to vector<1x32xf32>
    %c7_65 = arith.constant 7 : index
    %c0_66 = arith.constant 0 : index
    %267 = vector.load %arg4[%c7_65, %c0_66] : memref<16x32xf32, #tpu.memory_space<vmem>>, vector<1x32xf32>
    tpu.vector_store %arg4[%c7_65, %c0_66], %266 {strides = array<i32>} : memref<16x32xf32, #tpu.memory_space<vmem>>, vector<1x32xf32>,
    %268 = vector.extract_strided_slice %265 {offsets = [2, 0], sizes = [1, 32], strides = [1, 1]} : vector<8x32xf32> to vector<1x32xf32>
    %c0_67 = arith.constant 0 : index
    %c0_68 = arith.constant 0 : index
    %269 = vector.load %arg5[%c0_67, %c0_68] : memref<16x32xf32, #tpu.memory_space<vmem>>, vector<1x32xf32>
    tpu.vector_store %arg5[%c0_67, %c0_68], %268 {strides = array<i32>} : memref<16x32xf32, #tpu.memory_space<vmem>>, vector<1x32xf32>,
    %270 = vector.extract_strided_slice %265 {offsets = [1, 0], sizes = [1, 32], strides = [1, 1]} : vector<8x32xf32> to vector<1x32xf32>
    %c15_69 = arith.constant 15 : index
    %c0_70 = arith.constant 0 : index
    %271 = vector.load %arg4[%c15_69, %c0_70] : memref<16x32xf32, #tpu.memory_space<vmem>>, vector<1x32xf32>
    tpu.vector_store %arg4[%c15_69, %c0_70], %270 {strides = array<i32>} : memref<16x32xf32, #tpu.memory_space<vmem>>, vector<1x32xf32>,
    %272 = vector.extract_strided_slice %265 {offsets = [3, 0], sizes = [1, 32], strides = [1, 1]} : vector<8x32xf32> to vector<1x32xf32>
    %c8_71 = arith.constant 8 : index
    %c0_72 = arith.constant 0 : index
    %273 = vector.load %arg5[%c8_71, %c0_72] : memref<16x32xf32, #tpu.memory_space<vmem>>, vector<1x32xf32>
    tpu.vector_store %arg5[%c8_71, %c0_72], %272 {strides = array<i32>} : memref<16x32xf32, #tpu.memory_space<vmem>>, vector<1x32xf32>,
    %c0_73 = arith.constant 0 : index
    %c0_74 = arith.constant 0 : index
    %274 = vector.load %arg4[%c0_73, %c0_74] : memref<16x32xf32, #tpu.memory_space<vmem>>, vector<16x32xf32>
    %c0_75 = arith.constant 0 : index
    %c0_76 = arith.constant 0 : index
    %275 = vector.load %arg5[%c0_75, %c0_76] : memref<16x32xf32, #tpu.memory_space<vmem>>, vector<16x32xf32>
    %276 = tpu.concatenate %274, %275 in 1 : vector<16x32xf32>, vector<16x32xf32> -> vector<16x64xf32>
    %c0_77 = arith.constant 0 : index
    %c128 = arith.constant 128 : index
    %277 = vector.load %arg1[%c0_77, %c128] : memref<64x178xf32, #tpu.memory_space<vmem>>, vector<64x16xf32>
    %c0_78 = arith.constant 0 : index
    %c144 = arith.constant 144 : index
    %278 = vector.load %arg1[%c0_78, %c144] : memref<64x178xf32, #tpu.memory_space<vmem>>, vector<64x32xf32>
    %c0_79 = arith.constant 0 : index
    %c176 = arith.constant 176 : index
    %279 = vector.load %arg1[%c0_79, %c176] : memref<64x178xf32, #tpu.memory_space<vmem>>, vector<64x1xf32>
    %c0_80 = arith.constant 0 : index
    %c177 = arith.constant 177 : index
    %280 = vector.load %arg1[%c0_80, %c177] : memref<64x178xf32, #tpu.memory_space<vmem>>, vector<64x1xf32>
    %c0_81 = arith.constant 0 : index
    %c384 = arith.constant 384 : index
    %281 = vector.load %arg2[%c0_81, %c384] : memref<32x533xf32, #tpu.memory_space<vmem>>, vector<32x64xf32>
    %c0_82 = arith.constant 0 : index
    %c448 = arith.constant 448 : index
    %282 = vector.load %arg2[%c0_82, %c448] : memref<32x533xf32, #tpu.memory_space<vmem>>, vector<32x16xf32>
    %c0_83 = arith.constant 0 : index
    %c464 = arith.constant 464 : index
    %283 = vector.load %arg2[%c0_83, %c464] : memref<32x533xf32, #tpu.memory_space<vmem>>, vector<32x1xf32>
    %c0_84 = arith.constant 0 : index
    %c465 = arith.constant 465 : index
    %284 = vector.load %arg2[%c0_84, %c465] : memref<32x533xf32, #tpu.memory_space<vmem>>, vector<32x1xf32>
    %c0_85 = arith.constant 0 : index
    %c466 = arith.constant 466 : index
    %285 = vector.load %arg2[%c0_85, %c466] : memref<32x533xf32, #tpu.memory_space<vmem>>, vector<1x16xf32>
    %c0_86 = arith.constant 0 : index
    %c482 = arith.constant 482 : index
    %286 = vector.load %arg2[%c0_86, %c482] : memref<32x533xf32, #tpu.memory_space<vmem>>, vector<1x32xf32>
    %c0_87 = arith.constant 0 : index
    %c514 = arith.constant 514 : index
    %287 = vector.load %arg2[%c0_87, %c514] : memref<32x533xf32, #tpu.memory_space<vmem>>, vector<1x16xf32>
    %c0_88 = arith.constant 0 : index
    %c530 = arith.constant 530 : index
    %288 = vector.load %arg2[%c0_88, %c530] : memref<32x533xf32, #tpu.memory_space<vmem>>, vector<1x1xf32>
    %c0_89 = arith.constant 0 : index
    %c531 = arith.constant 531 : index
    %289 = vector.load %arg2[%c0_89, %c531] : memref<32x533xf32, #tpu.memory_space<vmem>>, vector<1x1xf32>
    %c0_90 = arith.constant 0 : index
    %c532 = arith.constant 532 : index
    %290 = vector.load %arg2[%c0_90, %c532] : memref<32x533xf32, #tpu.memory_space<vmem>>, vector<1x1xf32>
    %cst_91 = arith.constant dense<0.000000e+00> : vector<16x16xf32>
    %291 = tpu.matmul %276, %277, %cst_91 {dimension_numbers = #tpu.dot_dimension_numbers<[1], [0], [0], [1], [0, 0, 1, 1], [], []>} : vector<16x64xf32>, vector<64x16xf32>, vector<16x16xf32> -> vector<16x16xf32>
    %292 = vector.broadcast %285 : vector<1x16xf32> to vector<16x16xf32>
    %293 = arith.addf %291, %292 : vector<16x16xf32>
    %cst_92 = arith.constant dense<0.000000e+00> : vector<16x32xf32>
    %294 = tpu.matmul %276, %278, %cst_92 {dimension_numbers = #tpu.dot_dimension_numbers<[1], [0], [0], [1], [0, 0, 1, 1], [], []>} : vector<16x64xf32>, vector<64x32xf32>, vector<16x32xf32> -> vector<16x32xf32>
    %295 = vector.broadcast %286 : vector<1x32xf32> to vector<16x32xf32>
    %296 = arith.addf %294, %295 : vector<16x32xf32>
    %297 = math.tanh %296 : vector<16x32xf32>
    %cst_93 = arith.constant dense<0.000000e+00> : vector<16x16xf32>
    %298 = tpu.matmul %297, %282, %cst_93 {dimension_numbers = #tpu.dot_dimension_numbers<[1], [0], [0], [1], [0, 0, 1, 1], [], []>} : vector<16x32xf32>, vector<32x16xf32>, vector<16x16xf32> -> vector<16x16xf32>
    %299 = vector.broadcast %287 : vector<1x16xf32> to vector<16x16xf32>
    %300 = arith.addf %298, %299 : vector<16x16xf32>
    %301 = vector.extract_strided_slice %276 {offsets = [0, 0], sizes = [8, 64], strides = [1, 1]} : vector<16x64xf32> to vector<8x64xf32>
    %302 = vector.extract_strided_slice %293 {offsets = [0, 0], sizes = [8, 16], strides = [1, 1]} : vector<16x16xf32> to vector<8x16xf32>
    %cst_94 = arith.constant dense<0xFF800000> : vector<16xf32>
    %303 = vector.multi_reduction <maximumf>, %302, %cst_94 [0] : vector<8x16xf32> to vector<16xf32>
    %304 = vector.shape_cast %303 : vector<16xf32> to vector<1x16xf32>
    %305 = vector.broadcast %304 : vector<1x16xf32> to vector<8x16xf32>
    %306 = arith.subf %302, %305 : vector<8x16xf32>
    %307 = math.exp %306 : vector<8x16xf32>
    %cst_95 = arith.constant dense<0.000000e+00> : vector<16xf32>
    %308 = vector.multi_reduction <add>, %307, %cst_95 [0] : vector<8x16xf32> to vector<16xf32>
    %309 = vector.shape_cast %308 : vector<16xf32> to vector<1x16xf32>
    %310 = tpu.reciprocal %309 {approx = true} : vector<1x16xf32> -> vector<1x16xf32>
    %311 = arith.mulf %309, %310 : vector<1x16xf32>
    %cst_96 = arith.constant 2.000000e+00 : f32
    %312 = vector.broadcast %cst_96 : f32 to vector<1x16xf32>
    %313 = arith.subf %312, %311 : vector<1x16xf32>
    %314 = arith.mulf %310, %313 : vector<1x16xf32>
    %315 = vector.broadcast %314 : vector<1x16xf32> to vector<8x16xf32>
    %316 = arith.mulf %307, %315 : vector<8x16xf32>
    %317 = vector.extract_strided_slice %300 {offsets = [0, 0], sizes = [8, 16], strides = [1, 1]} : vector<16x16xf32> to vector<8x16xf32>
    %cst_97 = arith.constant dense<0xFF800000> : vector<16xf32>
    %318 = vector.multi_reduction <maximumf>, %317, %cst_97 [0] : vector<8x16xf32> to vector<16xf32>
    %319 = vector.shape_cast %318 : vector<16xf32> to vector<1x16xf32>
    %320 = vector.broadcast %319 : vector<1x16xf32> to vector<8x16xf32>
    %321 = arith.subf %317, %320 : vector<8x16xf32>
    %322 = math.exp %321 : vector<8x16xf32>
    %cst_98 = arith.constant dense<0.000000e+00> : vector<16xf32>
    %323 = vector.multi_reduction <add>, %322, %cst_98 [0] : vector<8x16xf32> to vector<16xf32>
    %324 = vector.shape_cast %323 : vector<16xf32> to vector<1x16xf32>
    %325 = tpu.reciprocal %324 {approx = true} : vector<1x16xf32> -> vector<1x16xf32>
    %326 = arith.mulf %324, %325 : vector<1x16xf32>
    %cst_99 = arith.constant 2.000000e+00 : f32
    %327 = vector.broadcast %cst_99 : f32 to vector<1x16xf32>
    %328 = arith.subf %327, %326 : vector<1x16xf32>
    %329 = arith.mulf %325, %328 : vector<1x16xf32>
    %330 = vector.broadcast %329 : vector<1x16xf32> to vector<8x16xf32>
    %331 = arith.mulf %322, %330 : vector<8x16xf32>
    %cst_100 = arith.constant dense<0.000000e+00> : vector<64x16xf32>
    %332 = tpu.matmul %301, %316, %cst_100 {dimension_numbers = #tpu.dot_dimension_numbers<[0], [0], [1], [1], [0, 1, 1, 1], [], []>} : vector<8x64xf32>, vector<8x16xf32>, vector<64x16xf32> -> vector<64x16xf32>
    %cst_101 = arith.constant dense<0.000000e+00> : vector<64x16xf32>
    %333 = tpu.matmul %301, %331, %cst_101 {dimension_numbers = #tpu.dot_dimension_numbers<[0], [0], [1], [1], [0, 1, 1, 1], [], []>} : vector<8x64xf32>, vector<8x16xf32>, vector<64x16xf32> -> vector<64x16xf32>
    %334 = vector.broadcast %279 : vector<64x1xf32> to vector<64x16xf32>
    %335 = arith.mulf %332, %334 : vector<64x16xf32>
    %cst_102 = arith.constant dense<0.000000e+00> : vector<16xf32>
    %336 = vector.multi_reduction <add>, %335, %cst_102 [0] : vector<64x16xf32> to vector<16xf32>
    %337 = vector.shape_cast %336 : vector<16xf32> to vector<1x16xf32>
    %338 = vector.broadcast %288 : vector<1x1xf32> to vector<1x16xf32>
    %339 = arith.addf %337, %338 : vector<1x16xf32>
    %340 = arith.negf %339 : vector<1x16xf32>
    %341 = math.exp %340 : vector<1x16xf32>
    %cst_103 = arith.constant 1.000000e+00 : f32
    %342 = vector.broadcast %cst_103 : f32 to vector<1x16xf32>
    %343 = arith.addf %342, %341 : vector<1x16xf32>
    %344 = arith.divf %342, %343 : vector<1x16xf32>
    %345 = vector.broadcast %280 : vector<64x1xf32> to vector<64x16xf32>
    %346 = arith.mulf %333, %345 : vector<64x16xf32>
    %cst_104 = arith.constant dense<0.000000e+00> : vector<16xf32>
    %347 = vector.multi_reduction <add>, %346, %cst_104 [0] : vector<64x16xf32> to vector<16xf32>
    %348 = vector.shape_cast %347 : vector<16xf32> to vector<1x16xf32>
    %349 = vector.broadcast %289 : vector<1x1xf32> to vector<1x16xf32>
    %350 = arith.addf %348, %349 : vector<1x16xf32>
    %351 = arith.negf %350 : vector<1x16xf32>
    %352 = math.exp %351 : vector<1x16xf32>
    %cst_105 = arith.constant 1.000000e+00 : f32
    %353 = vector.broadcast %cst_105 : f32 to vector<1x16xf32>
    %354 = arith.addf %353, %352 : vector<1x16xf32>
    %355 = arith.divf %353, %354 : vector<1x16xf32>
    %356 = arith.addf %344, %355 : vector<1x16xf32>
    %357 = tpu.reciprocal %356 {approx = true} : vector<1x16xf32> -> vector<1x16xf32>
    %358 = arith.mulf %356, %357 : vector<1x16xf32>
    %cst_106 = arith.constant 2.000000e+00 : f32
    %359 = vector.broadcast %cst_106 : f32 to vector<1x16xf32>
    %360 = arith.subf %359, %358 : vector<1x16xf32>
    %361 = arith.mulf %357, %360 : vector<1x16xf32>
    %362 = arith.mulf %344, %361 : vector<1x16xf32>
    %cst_107 = arith.constant 1.000000e+00 : f32
    %363 = vector.broadcast %cst_107 : f32 to vector<1x16xf32>
    %364 = arith.subf %363, %362 : vector<1x16xf32>
    %365 = vector.broadcast %362 : vector<1x16xf32> to vector<64x16xf32>
    %366 = arith.mulf %365, %332 : vector<64x16xf32>
    %367 = vector.broadcast %364 : vector<1x16xf32> to vector<64x16xf32>
    %368 = arith.mulf %367, %333 : vector<64x16xf32>
    %369 = arith.addf %366, %368 : vector<64x16xf32>
    %cst_108 = arith.constant dense<0.000000e+00> : vector<32x16xf32>
    %370 = tpu.matmul %281, %369, %cst_108 {dimension_numbers = #tpu.dot_dimension_numbers<[1], [0], [0], [1], [0, 0, 1, 1], [], []>} : vector<32x64xf32>, vector<64x16xf32>, vector<32x16xf32> -> vector<32x16xf32>
    %371 = vector.broadcast %283 : vector<32x1xf32> to vector<32x16xf32>
    %372 = arith.addf %370, %371 : vector<32x16xf32>
    %cst_109 = arith.constant 0.000000e+00 : f32
    %373 = vector.broadcast %cst_109 : f32 to vector<32x16xf32>
    %374 = arith.maximumf %372, %373 : vector<32x16xf32>
    %375 = vector.broadcast %284 : vector<32x1xf32> to vector<32x16xf32>
    %376 = arith.mulf %374, %375 : vector<32x16xf32>
    %cst_110 = arith.constant dense<0.000000e+00> : vector<16xf32>
    %377 = vector.multi_reduction <add>, %376, %cst_110 [0] : vector<32x16xf32> to vector<16xf32>
    %378 = vector.shape_cast %377 : vector<16xf32> to vector<1x16xf32>
    %379 = vector.broadcast %290 : vector<1x1xf32> to vector<1x16xf32>
    %380 = arith.addf %378, %379 : vector<1x16xf32>
    %381 = arith.negf %380 : vector<1x16xf32>
    %382 = math.exp %381 : vector<1x16xf32>
    %cst_111 = arith.constant 1.000000e+00 : f32
    %383 = vector.broadcast %cst_111 : f32 to vector<1x16xf32>
    %384 = arith.addf %383, %382 : vector<1x16xf32>
    %385 = arith.divf %383, %384 : vector<1x16xf32>
    %386 = vector.extract_strided_slice %276 {offsets = [8, 0], sizes = [8, 64], strides = [1, 1]} : vector<16x64xf32> to vector<8x64xf32>
    %387 = vector.extract_strided_slice %293 {offsets = [8, 0], sizes = [8, 16], strides = [1, 1]} : vector<16x16xf32> to vector<8x16xf32>
    %cst_112 = arith.constant dense<0xFF800000> : vector<16xf32>
    %388 = vector.multi_reduction <maximumf>, %387, %cst_112 [0] : vector<8x16xf32> to vector<16xf32>
    %389 = vector.shape_cast %388 : vector<16xf32> to vector<1x16xf32>
    %390 = vector.broadcast %389 : vector<1x16xf32> to vector<8x16xf32>
    %391 = arith.subf %387, %390 : vector<8x16xf32>
    %392 = math.exp %391 : vector<8x16xf32>
    %cst_113 = arith.constant dense<0.000000e+00> : vector<16xf32>
    %393 = vector.multi_reduction <add>, %392, %cst_113 [0] : vector<8x16xf32> to vector<16xf32>
    %394 = vector.shape_cast %393 : vector<16xf32> to vector<1x16xf32>
    %395 = tpu.reciprocal %394 {approx = true} : vector<1x16xf32> -> vector<1x16xf32>
    %396 = arith.mulf %394, %395 : vector<1x16xf32>
    %cst_114 = arith.constant 2.000000e+00 : f32
    %397 = vector.broadcast %cst_114 : f32 to vector<1x16xf32>
    %398 = arith.subf %397, %396 : vector<1x16xf32>
    %399 = arith.mulf %395, %398 : vector<1x16xf32>
    %400 = vector.broadcast %399 : vector<1x16xf32> to vector<8x16xf32>
    %401 = arith.mulf %392, %400 : vector<8x16xf32>
    %402 = vector.extract_strided_slice %300 {offsets = [8, 0], sizes = [8, 16], strides = [1, 1]} : vector<16x16xf32> to vector<8x16xf32>
    %cst_115 = arith.constant dense<0xFF800000> : vector<16xf32>
    %403 = vector.multi_reduction <maximumf>, %402, %cst_115 [0] : vector<8x16xf32> to vector<16xf32>
    %404 = vector.shape_cast %403 : vector<16xf32> to vector<1x16xf32>
    %405 = vector.broadcast %404 : vector<1x16xf32> to vector<8x16xf32>
    %406 = arith.subf %402, %405 : vector<8x16xf32>
    %407 = math.exp %406 : vector<8x16xf32>
    %cst_116 = arith.constant dense<0.000000e+00> : vector<16xf32>
    %408 = vector.multi_reduction <add>, %407, %cst_116 [0] : vector<8x16xf32> to vector<16xf32>
    %409 = vector.shape_cast %408 : vector<16xf32> to vector<1x16xf32>
    %410 = tpu.reciprocal %409 {approx = true} : vector<1x16xf32> -> vector<1x16xf32>
    %411 = arith.mulf %409, %410 : vector<1x16xf32>
    %cst_117 = arith.constant 2.000000e+00 : f32
    %412 = vector.broadcast %cst_117 : f32 to vector<1x16xf32>
    %413 = arith.subf %412, %411 : vector<1x16xf32>
    %414 = arith.mulf %410, %413 : vector<1x16xf32>
    %415 = vector.broadcast %414 : vector<1x16xf32> to vector<8x16xf32>
    %416 = arith.mulf %407, %415 : vector<8x16xf32>
    %cst_118 = arith.constant dense<0.000000e+00> : vector<64x16xf32>
    %417 = tpu.matmul %386, %401, %cst_118 {dimension_numbers = #tpu.dot_dimension_numbers<[0], [0], [1], [1], [0, 1, 1, 1], [], []>} : vector<8x64xf32>, vector<8x16xf32>, vector<64x16xf32> -> vector<64x16xf32>
    %cst_119 = arith.constant dense<0.000000e+00> : vector<64x16xf32>
    %418 = tpu.matmul %386, %416, %cst_119 {dimension_numbers = #tpu.dot_dimension_numbers<[0], [0], [1], [1], [0, 1, 1, 1], [], []>} : vector<8x64xf32>, vector<8x16xf32>, vector<64x16xf32> -> vector<64x16xf32>
    %419 = vector.broadcast %279 : vector<64x1xf32> to vector<64x16xf32>
    %420 = arith.mulf %417, %419 : vector<64x16xf32>
    %cst_120 = arith.constant dense<0.000000e+00> : vector<16xf32>
    %421 = vector.multi_reduction <add>, %420, %cst_120 [0] : vector<64x16xf32> to vector<16xf32>
    %422 = vector.shape_cast %421 : vector<16xf32> to vector<1x16xf32>
    %423 = vector.broadcast %288 : vector<1x1xf32> to vector<1x16xf32>
    %424 = arith.addf %422, %423 : vector<1x16xf32>
    %425 = arith.negf %424 : vector<1x16xf32>
    %426 = math.exp %425 : vector<1x16xf32>
    %cst_121 = arith.constant 1.000000e+00 : f32
    %427 = vector.broadcast %cst_121 : f32 to vector<1x16xf32>
    %428 = arith.addf %427, %426 : vector<1x16xf32>
    %429 = arith.divf %427, %428 : vector<1x16xf32>
    %430 = vector.broadcast %280 : vector<64x1xf32> to vector<64x16xf32>
    %431 = arith.mulf %418, %430 : vector<64x16xf32>
    %cst_122 = arith.constant dense<0.000000e+00> : vector<16xf32>
    %432 = vector.multi_reduction <add>, %431, %cst_122 [0] : vector<64x16xf32> to vector<16xf32>
    %433 = vector.shape_cast %432 : vector<16xf32> to vector<1x16xf32>
    %434 = vector.broadcast %289 : vector<1x1xf32> to vector<1x16xf32>
    %435 = arith.addf %433, %434 : vector<1x16xf32>
    %436 = arith.negf %435 : vector<1x16xf32>
    %437 = math.exp %436 : vector<1x16xf32>
    %cst_123 = arith.constant 1.000000e+00 : f32
    %438 = vector.broadcast %cst_123 : f32 to vector<1x16xf32>
    %439 = arith.addf %438, %437 : vector<1x16xf32>
    %440 = arith.divf %438, %439 : vector<1x16xf32>
    %441 = arith.addf %429, %440 : vector<1x16xf32>
    %442 = tpu.reciprocal %441 {approx = true} : vector<1x16xf32> -> vector<1x16xf32>
    %443 = arith.mulf %441, %442 : vector<1x16xf32>
    %cst_124 = arith.constant 2.000000e+00 : f32
    %444 = vector.broadcast %cst_124 : f32 to vector<1x16xf32>
    %445 = arith.subf %444, %443 : vector<1x16xf32>
    %446 = arith.mulf %442, %445 : vector<1x16xf32>
    %447 = arith.mulf %429, %446 : vector<1x16xf32>
    %cst_125 = arith.constant 1.000000e+00 : f32
    %448 = vector.broadcast %cst_125 : f32 to vector<1x16xf32>
    %449 = arith.subf %448, %447 : vector<1x16xf32>
    %450 = vector.broadcast %447 : vector<1x16xf32> to vector<64x16xf32>
    %451 = arith.mulf %450, %417 : vector<64x16xf32>
    %452 = vector.broadcast %449 : vector<1x16xf32> to vector<64x16xf32>
    %453 = arith.mulf %452, %418 : vector<64x16xf32>
    %454 = arith.addf %451, %453 : vector<64x16xf32>
    %cst_126 = arith.constant dense<0.000000e+00> : vector<32x16xf32>
    %455 = tpu.matmul %281, %454, %cst_126 {dimension_numbers = #tpu.dot_dimension_numbers<[1], [0], [0], [1], [0, 0, 1, 1], [], []>} : vector<32x64xf32>, vector<64x16xf32>, vector<32x16xf32> -> vector<32x16xf32>
    %456 = vector.broadcast %283 : vector<32x1xf32> to vector<32x16xf32>
    %457 = arith.addf %455, %456 : vector<32x16xf32>
    %cst_127 = arith.constant 0.000000e+00 : f32
    %458 = vector.broadcast %cst_127 : f32 to vector<32x16xf32>
    %459 = arith.maximumf %457, %458 : vector<32x16xf32>
    %460 = vector.broadcast %284 : vector<32x1xf32> to vector<32x16xf32>
    %461 = arith.mulf %459, %460 : vector<32x16xf32>
    %cst_128 = arith.constant dense<0.000000e+00> : vector<16xf32>
    %462 = vector.multi_reduction <add>, %461, %cst_128 [0] : vector<32x16xf32> to vector<16xf32>
    %463 = vector.shape_cast %462 : vector<16xf32> to vector<1x16xf32>
    %464 = vector.broadcast %290 : vector<1x1xf32> to vector<1x16xf32>
    %465 = arith.addf %463, %464 : vector<1x16xf32>
    %466 = arith.negf %465 : vector<1x16xf32>
    %467 = math.exp %466 : vector<1x16xf32>
    %cst_129 = arith.constant 1.000000e+00 : f32
    %468 = vector.broadcast %cst_129 : f32 to vector<1x16xf32>
    %469 = arith.addf %468, %467 : vector<1x16xf32>
    %470 = arith.divf %468, %469 : vector<1x16xf32>
    %471 = tpu.concatenate %385, %470 in 0 : vector<1x16xf32>, vector<1x16xf32> -> vector<2x16xf32>
    %c0_130 = arith.constant 0 : index
    %c0_131 = arith.constant 0 : index
    %472 = vector.load %arg3[%c0_130, %c0_131] : memref<2x16xf32, #tpu.memory_space<vmem>>, vector<2x16xf32>
    tpu.vector_store %arg3[%c0_130, %c0_131], %471 {strides = array<i32>} : memref<2x16xf32, #tpu.memory_space<vmem>>, vector<2x16xf32>,
    return
  }
}

</mosaic_0001>

<llo_original>
// kernel: hybrid_xml_forward.1
$region0: #{hybrid_xml_forward.1}
  #allocation0 [shape = 'u32[]', space=smem, size = 0x4, offset = 0x4, fixed_abs, tag = 'smem constant byte address 0x4 - core index']
  #allocation1 [shape = 'u32[144,128]{1,0:T(1,128)}', space=vmem, size = 0x12000, scoped, tag = 'internal scratch']
  #allocation2 [shape = 'f32[16,32]{1,0:T(8,128)}', space=vmem, size = 0x2000, scoped, tag = 'scratch operand']
  #allocation3 [shape = 'f32[16,32]{1,0:T(8,128)}', space=vmem, size = 0x2000, scoped, tag = 'scratch operand']
  %s0 = inlined_call_operand.vmem [shape: f32[64,64], index: 0, kind: input, shape index: {}]
  %s1 = inlined_call_operand.vmem [shape: f32[64,178], index: 1, kind: input, shape index: {}]
  %s2 = inlined_call_operand.vmem [shape: f32[32,533], index: 2, kind: input, shape index: {}]
  %s3 = inlined_call_operand.hbm [shape: f32[2,16], index: 3, kind: output, shape index: {}]
  %s4 = sld [smem:[#allocation0]]
  $region22: #{hybrid_xml_forward.1} parent=0
    _
  %s6 = ssub.s32 1, %s4
  %s7 = scalar_select 0, %s6, %s4
  $region1: #{hybrid_xml_forward.1} parent=0
    #allocation4 [shape = 'u8[1024]{0}', space=vmem, size = 0x400, scoped, tag = 'output window, operand 0, single buffered']
    #allocation5 [shape = 's32[1]{0}', space=sflag, size = 0x4, scoped, tag = 'scoped memory for hybrid_xml_forward.1']
    %8 = vsyncpa [#allocation5], 0
    // Predicated region
    $region2: #{hybrid_xml_forward.1} parent=1 // pred_check
      _
    $region3: #{hybrid_xml_forward.1} parent=1 // pred_check_branch
      %10 = sbr.rel (0) target = $region5
    $region4: #{hybrid_xml_forward.1} parent=1 // pred_region
      _
    $region5: #{hybrid_xml_forward.1} parent=1 // pred_fallthru
      _
    // Predicated region
    $region6: #{hybrid_xml_forward.1} parent=1 // pred_check
      _
    $region7: #{hybrid_xml_forward.1} parent=1 // pred_check_branch
      %12 = sbr.rel (0) target = $region9
    $region8: #{hybrid_xml_forward.1} parent=1 // pred_region
      _
    $region9: #{hybrid_xml_forward.1} parent=1 // pred_fallthru
      _
    // Predicated region
    $region10: #{hybrid_xml_forward.1} parent=1 // pred_check
      _
    $region11: #{hybrid_xml_forward.1} parent=1 // pred_check_branch
      %14 = sbr.rel (0) target = $region13
    $region12: #{hybrid_xml_forward.1} parent=1 // pred_region
      _
    $region13: #{hybrid_xml_forward.1} parent=1 // pred_fallthru
      _
    %v15 = vld [vmem:[%s0] sm:$0xff]
    %v16 = vld [vmem:[%s0 + $0x8] sm:$0xff]
    %v17 = vld [vmem:[%s0 + $0x10] sm:$0xff]
    %v18 = vld [vmem:[%s0 + $0x18] sm:$0xff]
    %v19 = vld [vmem:[%s0 + $0x20] sm:$0xff]
    %v20 = vld [vmem:[%s0 + $0x28] sm:$0xff]
    %v21 = vld [vmem:[%s0 + $0x30] sm:$0xff]
    %v22 = vld [vmem:[%s0 + $0x38] sm:$0xff]
    %v23 = vld [vmem:[%s1] sm:$0xff]
    %v24 = vld [vmem:[%s1 + $0x10] sm:$0xff]
    %v25 = vld [vmem:[%s1 + $0x20] sm:$0xff]
    %v26 = vld [vmem:[%s1 + $0x30] sm:$0xff]
    %v27 = vld [vmem:[%s1 + $0x40] sm:$0xff]
    %v28 = vld [vmem:[%s1 + $0x50] sm:$0xff]
    %v29 = vld [vmem:[%s1 + $0x60] sm:$0xff]
    %v30 = vld [vmem:[%s1 + $0x70] sm:$0xff]
    %vm31 = vcmask 523264
    %v33 = vsel %vm31, %v15, 0
    %v36 = vsel %vm31, %v16, 0
    %v39 = vsel %vm31, %v17, 0
    %v42 = vsel %vm31, %v18, 0
    %v45 = vsel %vm31, %v19, 0
    %v48 = vsel %vm31, %v20, 0
    %v51 = vsel %vm31, %v21, 0
    %v54 = vsel %vm31, %v22, 0
    %56 = vmatprep.subr.mxu0 0.0
    %57 = vmatpush1.msra.mxu0 %v23
    %58 = vmatprep.subr.mxu0 0.0
    %59 = vmatpush1.msra.mxu0 %v24
    %60 = vmatprep.subr.mxu0 0.0
    %61 = vmatpush1.msra.mxu0 %v25
    %62 = vmatprep.subr.mxu0 0.0
    %63 = vmatpush1.msra.mxu0 %v26
    %64 = vmatprep.subr.mxu0 0.0
    %65 = vmatpush1.msra.mxu0 %v27
    %66 = vmatprep.subr.mxu0 0.0
    %67 = vmatpush1.msra.mxu0 %v28
    %68 = vmatprep.subr.mxu0 0.0
    %69 = vmatpush1.msra.mxu0 %v29
    %70 = vmatprep.subr.mxu0 0.0
    %71 = vmatpush1.msra.mxu0 %v30
    %72 = vmatprep.subr.mxu0 0.0
    %73 = vmatpush1.msra.mxu0 0.0
    %74 = vmatprep.subr.mxu0 0.0
    %75 = vmatpush1.msra.mxu0 0.0
    %76 = vmatprep.subr.mxu0 0.0
    %77 = vmatpush1.msra.mxu0 0.0
    %78 = vmatprep.subr.mxu0 0.0
    %79 = vmatpush1.msra.mxu0 0.0
    %80 = vmatprep.subr.mxu0 0.0
    %81 = vmatpush1.msra.mxu0 0.0
    %82 = vmatprep.subr.mxu0 0.0
    %83 = vmatpush1.msra.mxu0 0.0
    %84 = vmatprep.subr.mxu0 0.0
    %85 = vmatpush1.msra.mxu0 0.0
    %86 = vmatprep.subr.mxu0 0.0
    %87 = vmatpush1.msra.mxu0 0.0
    %88 = vmatprep.subr.mxu0 0.0
    %89 = vmatpush1.msra.mxu0 0.0
    %90 = vmatprep.subr.mxu0 0.0
    %91 = vmatpush1.msra.mxu0 0.0
    %92 = vmatprep.subr.mxu0 0.0
    %93 = vmatpush1.msra.mxu0 0.0
    %94 = vmatprep.subr.mxu0 0.0
    %95 = vmatpush1.msra.mxu0 0.0
    %96 = vmatprep.subr.mxu0 0.0
    %97 = vmatpush1.msra.mxu0 0.0
    %98 = vmatprep.subr.mxu0 0.0
    %99 = vmatpush1.msra.mxu0 0.0
    %100 = vmatprep.subr.mxu0 0.0
    %101 = vmatpush1.msra.mxu0 0.0
    %102 = vmatprep.subr.mxu0 0.0
    %103 = vmatpush1.msra.mxu0 0.0
    %104 = vmatprep.subr.mxu0 0.0
    %105 = vmatpush1.msra.mxu0 0.0
    %106 = vmatprep.subr.mxu0 0.0
    %107 = vmatpush1.msra.mxu0 0.0
    %108 = vmatprep.subr.mxu0 0.0
    %109 = vmatpush1.msra.mxu0 0.0
    %110 = vmatprep.subr.mxu0 0.0
    %111 = vmatpush1.msra.mxu0 0.0
    %112 = vmatprep.subr.mxu0 0.0
    %113 = vmatpush1.msra.mxu0 0.0
    %114 = vmatprep.subr.mxu0 0.0
    %115 = vmatpush1.msra.mxu0 0.0
    %116 = vmatprep.subr.mxu0 0.0
    %117 = vmatpush1.msra.mxu0 0.0
    %118 = vmatprep.subr.mxu0 0.0
    %119 = vmatpush1.msra.mxu0 0.0
    %120 = vmatprep.mubr.f32.mxu0 0.0
    %121 = vmatmul.mubr.f32.gmra.mrb[0].mxu0 %v33
    %v122 = vpop.f32.mrb[0].mxu0
    %v123 = vadd.f32 0.0, %v122
    %v124 = vpop.f32.mrb[0].mxu0
    %125 = vmatprep.mubr.f32.mxu0 0.0
    %126 = vmatmul.mubr.f32.gmra.mrb[0].mxu0 %v36
    %v127 = vpop.f32.mrb[0].mxu0
    %v128 = vadd.f32 0.0, %v127
    %v129 = vpop.f32.mrb[0].mxu0
    %130 = vmatprep.mubr.f32.mxu0 0.0
    %131 = vmatmul.mubr.f32.gmra.mrb[0].mxu0 %v39
    %v132 = vpop.f32.mrb[0].mxu0
    %v133 = vadd.f32 0.0, %v132
    %v134 = vpop.f32.mrb[0].mxu0
    %135 = vmatprep.mubr.f32.mxu0 0.0
    %136 = vmatmul.mubr.f32.gmra.mrb[0].mxu0 %v42
    %v137 = vpop.f32.mrb[0].mxu0
    %v138 = vadd.f32 0.0, %v137
    %v139 = vpop.f32.mrb[0].mxu0
    %140 = vmatprep.mubr.f32.mxu0 0.0
    %141 = vmatmul.mubr.f32.gmra.mrb[0].mxu0 %v45
    %v142 = vpop.f32.mrb[0].mxu0
    %v143 = vadd.f32 0.0, %v142
    %v144 = vpop.f32.mrb[0].mxu0
    %145 = vmatprep.mubr.f32.mxu0 0.0
    %146 = vmatmul.mubr.f32.gmra.mrb[0].mxu0 %v48
    %v147 = vpop.f32.mrb[0].mxu0
    %v148 = vadd.f32 0.0, %v147
    %v149 = vpop.f32.mrb[0].mxu0
    %150 = vmatprep.mubr.f32.mxu0 0.0
    %151 = vmatmul.mubr.f32.gmra.mrb[0].mxu0 %v51
    %v152 = vpop.f32.mrb[0].mxu0
    %v153 = vadd.f32 0.0, %v152
    %v154 = vpop.f32.mrb[0].mxu0
    %155 = vmatprep.mubr.f32.mxu0 0.0
    %156 = vmatmul.mubr.f32.gmra.mrb[0].mxu0 %v54
    %v157 = vpop.f32.mrb[0].mxu0
    %v158 = vadd.f32 0.0, %v157
    %v159 = vpop.f32.mrb[0].mxu0
    %160 = vdwg.mxu0
    %v161 = vld [vmem:[%s2] sm:$0xff]
    %v162 = vld [vmem:[%s2 + $0x8] sm:$0xff]
    %v163 = vld [vmem:[%s2 + $0x28] sm:$0xff]
    %v164 = vld [vmem:[%s2 + $0x30] sm:$0xff]
    %v165 = vld [vmem:[%s2 + $0x50] sm:$0xff]
    %v166 = vld [vmem:[%s2 + $0x58] sm:$0xff]
    %v167 = vld [vmem:[%s2 + $0x78] sm:$0xff]
    %v168 = vld [vmem:[%s2 + $0x80] sm:$0xff]
    %v169 = vld [vmem:[%s2 + $0x10] sm:$0xff]
    %v170 = vlaneseq
    %v171 = vshrl.u32 %v170, 7
    %vm172 = vcmp.lt.s32.totalorder %v171, 2
    %vm173 = vcmask 261120
    %v175 = vsel %vm173, 0.0, 0
    %177 = vmatprep.subr.mxu0 %v162
    %178 = vmatpush1.msra.mxu0 %v161
    %179 = vmatprep.subr.mxu0 %v164
    %180 = vmatpush1.msra.mxu0 %v163
    %181 = vmatprep.subr.mxu0 %v166
    %182 = vmatpush1.msra.mxu0 %v165
    %183 = vmatprep.subr.mxu0 %v168
    %184 = vmatpush1.msra.mxu0 %v167
    %185 = vmatprep.subr.mxu0 0.0
    %186 = vmatpush1.msra.mxu0 0.0
    %187 = vmatprep.subr.mxu0 0.0
    %188 = vmatpush1.msra.mxu0 0.0
    %189 = vmatprep.subr.mxu0 0.0
    %190 = vmatpush1.msra.mxu0 0.0
    %191 = vmatprep.subr.mxu0 0.0
    %192 = vmatpush1.msra.mxu0 0.0
    %193 = vmatprep.subr.mxu0 0.0
    %194 = vmatpush1.msra.mxu0 0.0
    %195 = vmatprep.subr.mxu0 0.0
    %196 = vmatpush1.msra.mxu0 0.0
    %197 = vmatprep.subr.mxu0 0.0
    %198 = vmatpush1.msra.mxu0 0.0
    %199 = vmatprep.subr.mxu0 0.0
    %200 = vmatpush1.msra.mxu0 0.0
    %201 = vmatprep.subr.mxu0 0.0
    %202 = vmatpush1.msra.mxu0 0.0
    %203 = vmatprep.subr.mxu0 0.0
    %204 = vmatpush1.msra.mxu0 0.0
    %205 = vmatprep.subr.mxu0 0.0
    %206 = vmatpush1.msra.mxu0 0.0
    %207 = vmatprep.subr.mxu0 0.0
    %208 = vmatpush1.msra.mxu0 0.0
    %209 = vmatprep.subr.mxu0 0.0
    %210 = vmatpush1.msra.mxu0 0.0
    %211 = vmatprep.subr.mxu0 0.0
    %212 = vmatpush1.msra.mxu0 0.0
    %213 = vmatprep.subr.mxu0 0.0
    %214 = vmatpush1.msra.mxu0 0.0
    %215 = vmatprep.subr.mxu0 0.0
    %216 = vmatpush1.msra.mxu0 0.0
    %217 = vmatprep.subr.mxu0 0.0
    %218 = vmatpush1.msra.mxu0 0.0
    %219 = vmatprep.subr.mxu0 0.0
    %220 = vmatpush1.msra.mxu0 0.0
    %221 = vmatprep.subr.mxu0 0.0
    %222 = vmatpush1.msra.mxu0 0.0
    %223 = vmatprep.subr.mxu0 0.0
    %224 = vmatpush1.msra.mxu0 0.0
    %225 = vmatprep.subr.mxu0 0.0
    %226 = vmatpush1.msra.mxu0 0.0
    %227 = vmatprep.subr.mxu0 0.0
    %228 = vmatpush1.msra.mxu0 0.0
    %229 = vmatprep.subr.mxu0 0.0
    %230 = vmatpush1.msra.mxu0 0.0
    %231 = vmatprep.subr.mxu0 0.0
    %232 = vmatpush1.msra.mxu0 0.0
    %233 = vmatprep.subr.mxu0 0.0
    %234 = vmatpush1.msra.mxu0 0.0
    %235 = vmatprep.subr.mxu0 0.0
    %236 = vmatpush1.msra.mxu0 0.0
    %237 = vmatprep.subr.mxu0 0.0
    %238 = vmatpush1.msra.mxu0 0.0
    %239 = vmatprep.subr.mxu0 0.0
    %240 = vmatpush1.msra.mxu0 0.0
    %241 = vmatprep.mubr.f32.mxu0 0.0
    %242 = vmatmul.mubr.f32.gmra.mrb[0].mxu0 %v175
    %v243 = vpop.f32.mrb[0].mxu0
    %v244 = vadd.f32 0.0, %v243
    %v245 = vpop.f32.mrb[0].mxu0
    %v246 = vadd.f32 0.0, %v245
    %247 = vdwg.mxu0
    %v248 = vsel %vm172, 1, 0
    %vm249 = vcmp.eq.s32.totalorder %v248, 1
    %v250 = vsel %vm249, %v244, %v246
    %v251 = vadd.f32 %v123, %v169
    %v252 = vadd.f32 %v251, %v250
    %v253 = vxor.u32 %v252, 2147483648
    %v254 = vmul.f32 %v253, 1.442695
    %v255 = vpow.pop %v254
    %v256 = vadd.f32 %v255, 1.0
    %v257 = vrcp.pop %v256
    %v258 = vmul.f32 1.0, %v257
    %v259 = vtanh.pop %v252
    %v260 = vmul.f32 %v258, 0.0
    %262 = vrot.lane.b32.xlu0 %v259, 32
    %v263 = vpop.permute.xlu0 %262
    %v265 = vmul.f32 %v258, %v263
    %267 = vrot.lane.b32.xlu0 %v265, 32
    %v268 = vpop.permute.xlu0 %267
    %v270 = vadd.f32 %v260, %v268
    %v271 = vtanh.pop %v270
    %273 = vrot.lane.b32.xlu0 %v271, 32
    %v274 = vpop.permute.xlu0 %273
    %v276 = vmul.f32 %v258, %v274
    %278 = vrot.lane.b32.xlu0 %v276, 64
    %v279 = vpop.permute.xlu0 %278
    %vm281 = vcmask 253952
    %282 = vst.msk [vmem:[#allocation2] sm:$0x1] %vm281, %v279
    %vm283 = vcmask 256002
    %284 = vst.msk [vmem:[#allocation3 + $0x5] sm:$0x4] %vm283, %v279
    %vm285 = vcmask 254977
    %286 = vst.msk [vmem:[#allocation2 + $0x7] sm:$0x2] %vm285, %v279
    %vm287 = vcmask 257027
    %288 = vst.msk [vmem:[#allocation3 + $0xc] sm:$0x8] %vm287, %v279
    %v289 = vsel %vm173, %v279, 0
    %291 = vmatprep.subr.mxu0 %v162
    %292 = vmatpush1.msra.mxu0 %v161
    %293 = vmatprep.subr.mxu0 %v164
    %294 = vmatpush1.msra.mxu0 %v163
    %295 = vmatprep.subr.mxu0 %v166
    %296 = vmatpush1.msra.mxu0 %v165
    %297 = vmatprep.subr.mxu0 %v168
    %298 = vmatpush1.msra.mxu0 %v167
    %299 = vmatprep.subr.mxu0 0.0
    %300 = vmatpush1.msra.mxu0 0.0
    %301 = vmatprep.subr.mxu0 0.0
    %302 = vmatpush1.msra.mxu0 0.0
    %303 = vmatprep.subr.mxu0 0.0
    %304 = vmatpush1.msra.mxu0 0.0
    %305 = vmatprep.subr.mxu0 0.0
    %306 = vmatpush1.msra.mxu0 0.0
    %307 = vmatprep.subr.mxu0 0.0
    %308 = vmatpush1.msra.mxu0 0.0
    %309 = vmatprep.subr.mxu0 0.0
    %310 = vmatpush1.msra.mxu0 0.0
    %311 = vmatprep.subr.mxu0 0.0
    %312 = vmatpush1.msra.mxu0 0.0
    %313 = vmatprep.subr.mxu0 0.0
    %314 = vmatpush1.msra.mxu0 0.0
    %315 = vmatprep.subr.mxu0 0.0
    %316 = vmatpush1.msra.mxu0 0.0
    %317 = vmatprep.subr.mxu0 0.0
    %318 = vmatpush1.msra.mxu0 0.0
    %319 = vmatprep.subr.mxu0 0.0
    %320 = vmatpush1.msra.mxu0 0.0
    %321 = vmatprep.subr.mxu0 0.0
    %322 = vmatpush1.msra.mxu0 0.0
    %323 = vmatprep.subr.mxu0 0.0
    %324 = vmatpush1.msra.mxu0 0.0
    %325 = vmatprep.subr.mxu0 0.0
    %326 = vmatpush1.msra.mxu0 0.0
    %327 = vmatprep.subr.mxu0 0.0
    %328 = vmatpush1.msra.mxu0 0.0
    %329 = vmatprep.subr.mxu0 0.0
    %330 = vmatpush1.msra.mxu0 0.0
    %331 = vmatprep.subr.mxu0 0.0
    %332 = vmatpush1.msra.mxu0 0.0
    %333 = vmatprep.subr.mxu0 0.0
    %334 = vmatpush1.msra.mxu0 0.0
    %335 = vmatprep.subr.mxu0 0.0
    %336 = vmatpush1.msra.mxu0 0.0
    %337 = vmatprep.subr.mxu0 0.0
    %338 = vmatpush1.msra.mxu0 0.0
    %339 = vmatprep.subr.mxu0 0.0
    %340 = vmatpush1.msra.mxu0 0.0
    %341 = vmatprep.subr.mxu0 0.0
    %342 = vmatpush1.msra.mxu0 0.0
    %343 = vmatprep.subr.mxu0 0.0
    %344 = vmatpush1.msra.mxu0 0.0
    %345 = vmatprep.subr.mxu0 0.0
    %346 = vmatpush1.msra.mxu0 0.0
    %347 = vmatprep.subr.mxu0 0.0
    %348 = vmatpush1.msra.mxu0 0.0
    %349 = vmatprep.subr.mxu0 0.0
    %350 = vmatpush1.msra.mxu0 0.0
    %351 = vmatprep.subr.mxu0 0.0
    %352 = vmatpush1.msra.mxu0 0.0
    %353 = vmatprep.subr.mxu0 0.0
    %354 = vmatpush1.msra.mxu0 0.0
    %355 = vmatprep.mubr.f32.mxu0 0.0
    %356 = vmatmul.mubr.f32.gmra.mrb[0].mxu0 %v289
    %v357 = vpop.f32.mrb[0].mxu0
    %v358 = vadd.f32 0.0, %v357
    %v359 = vpop.f32.mrb[0].mxu0
    %v360 = vadd.f32 0.0, %v359
    %361 = vdwg.mxu0
    %v362 = vsel %vm249, %v358, %v360
    %v363 = vadd.f32 %v128, %v169
    %v364 = vadd.f32 %v363, %v362
    %v365 = vxor.u32 %v364, 2147483648
    %v366 = vmul.f32 %v365, 1.442695
    %v367 = vpow.pop %v366
    %v368 = vadd.f32 %v367, 1.0
    %v369 = vrcp.pop %v368
    %v370 = vmul.f32 1.0, %v369
    %v371 = vtanh.pop %v364
    %v372 = vmul.f32 %v370, %v270
    %374 = vrot.lane.b32.xlu0 %v371, 32
    %v375 = vpop.permute.xlu0 %374
    %v377 = vmul.f32 %v370, %v375
    %379 = vrot.lane.b32.xlu0 %v377, 32
    %v380 = vpop.permute.xlu0 %379
    %v382 = vadd.f32 %v372, %v380
    %v383 = vtanh.pop %v382
    %385 = vrot.lane.b32.xlu0 %v383, 32
    %v386 = vpop.permute.xlu0 %385
    %v388 = vmul.f32 %v370, %v386
    %390 = vrot.lane.b32.xlu0 %v388, 64
    %v391 = vpop.permute.xlu0 %390
    %393 = vst.msk [vmem:[#allocation2 + $0x1] sm:$0x1] %vm281, %v391
    %394 = vst.msk [vmem:[#allocation3 + $0x4] sm:$0x4] %vm283, %v391
    %395 = vst.msk [vmem:[#allocation2 + $0x8] sm:$0x2] %vm285, %v391
    %396 = vst.msk [vmem:[#allocation3 + $0xb] sm:$0x8] %vm287, %v391
    %v397 = vsel %vm173, %v391, 0
    %399 = vmatprep.subr.mxu0 %v162
    %400 = vmatpush1.msra.mxu0 %v161
    %401 = vmatprep.subr.mxu0 %v164
    %402 = vmatpush1.msra.mxu0 %v163
    %403 = vmatprep.subr.mxu0 %v166
    %404 = vmatpush1.msra.mxu0 %v165
    %405 = vmatprep.subr.mxu0 %v168
    %406 = vmatpush1.msra.mxu0 %v167
    %407 = vmatprep.subr.mxu0 0.0
    %408 = vmatpush1.msra.mxu0 0.0
    %409 = vmatprep.subr.mxu0 0.0
    %410 = vmatpush1.msra.mxu0 0.0
    %411 = vmatprep.subr.mxu0 0.0
    %412 = vmatpush1.msra.mxu0 0.0
    %413 = vmatprep.subr.mxu0 0.0
    %414 = vmatpush1.msra.mxu0 0.0
    %415 = vmatprep.subr.mxu0 0.0
    %416 = vmatpush1.msra.mxu0 0.0
    %417 = vmatprep.subr.mxu0 0.0
    %418 = vmatpush1.msra.mxu0 0.0
    %419 = vmatprep.subr.mxu0 0.0
    %420 = vmatpush1.msra.mxu0 0.0
    %421 = vmatprep.subr.mxu0 0.0
    %422 = vmatpush1.msra.mxu0 0.0
    %423 = vmatprep.subr.mxu0 0.0
    %424 = vmatpush1.msra.mxu0 0.0
    %425 = vmatprep.subr.mxu0 0.0
    %426 = vmatpush1.msra.mxu0 0.0
    %427 = vmatprep.subr.mxu0 0.0
    %428 = vmatpush1.msra.mxu0 0.0
    %429 = vmatprep.subr.mxu0 0.0
    %430 = vmatpush1.msra.mxu0 0.0
    %431 = vmatprep.subr.mxu0 0.0
    %432 = vmatpush1.msra.mxu0 0.0
    %433 = vmatprep.subr.mxu0 0.0
    %434 = vmatpush1.msra.mxu0 0.0
    %435 = vmatprep.subr.mxu0 0.0
    %436 = vmatpush1.msra.mxu0 0.0
    %437 = vmatprep.subr.mxu0 0.0
    %438 = vmatpush1.msra.mxu0 0.0
    %439 = vmatprep.subr.mxu0 0.0
    %440 = vmatpush1.msra.mxu0 0.0
    %441 = vmatprep.subr.mxu0 0.0
    %442 = vmatpush1.msra.mxu0 0.0
    %443 = vmatprep.subr.mxu0 0.0
    %444 = vmatpush1.msra.mxu0 0.0
    %445 = vmatprep.subr.mxu0 0.0
    %446 = vmatpush1.msra.mxu0 0.0
    %447 = vmatprep.subr.mxu0 0.0
    %448 = vmatpush1.msra.mxu0 0.0
    %449 = vmatprep.subr.mxu0 0.0
    %450 = vmatpush1.msra.mxu0 0.0
    %451 = vmatprep.subr.mxu0 0.0
    %452 = vmatpush1.msra.mxu0 0.0
    %453 = vmatprep.subr.mxu0 0.0
    %454 = vmatpush1.msra.mxu0 0.0
    %455 = vmatprep.subr.mxu0 0.0
    %456 = vmatpush1.msra.mxu0 0.0
    %457 = vmatprep.subr.mxu0 0.0
    %458 = vmatpush1.msra.mxu0 0.0
    %459 = vmatprep.subr.mxu0 0.0
    %460 = vmatpush1.msra.mxu0 0.0
    %461 = vmatprep.subr.mxu0 0.0
    %462 = vmatpush1.msra.mxu0 0.0
    %463 = vmatprep.mubr.f32.mxu0 0.0
    %464 = vmatmul.mubr.f32.gmra.mrb[0].mxu0 %v397
    %v465 = vpop.f32.mrb[0].mxu0
    %v466 = vadd.f32 0.0, %v465
    %v467 = vpop.f32.mrb[0].mxu0
    %v468 = vadd.f32 0.0, %v467
    %469 = vdwg.mxu0
    %v470 = vsel %vm249, %v466, %v468
    %v471 = vadd.f32 %v133, %v169
    %v472 = vadd.f32 %v471, %v470
    %v473 = vxor.u32 %v472, 2147483648
    %v474 = vmul.f32 %v473, 1.442695
    %v475 = vpow.pop %v474
    %v476 = vadd.f32 %v475, 1.0
    %v477 = vrcp.pop %v476
    %v478 = vmul.f32 1.0, %v477
    %v479 = vtanh.pop %v472
    %v480 = vmul.f32 %v478, %v382
    %482 = vrot.lane.b32.xlu0 %v479, 32
    %v483 = vpop.permute.xlu0 %482
    %v485 = vmul.f32 %v478, %v483
    %487 = vrot.lane.b32.xlu0 %v485, 32
    %v488 = vpop.permute.xlu0 %487
    %v490 = vadd.f32 %v480, %v488
    %v491 = vtanh.pop %v490
    %493 = vrot.lane.b32.xlu0 %v491, 32
    %v494 = vpop.permute.xlu0 %493
    %v496 = vmul.f32 %v478, %v494
    %498 = vrot.lane.b32.xlu0 %v496, 64
    %v499 = vpop.permute.xlu0 %498
    %501 = vst.msk [vmem:[#allocation2 + $0x2] sm:$0x1] %vm281, %v499
    %502 = vst.msk [vmem:[#allocation3 + $0x3] sm:$0x4] %vm283, %v499
    %503 = vst.msk [vmem:[#allocation2 + $0x9] sm:$0x2] %vm285, %v499
    %504 = vst.msk [vmem:[#allocation3 + $0xa] sm:$0x8] %vm287, %v499
    %v505 = vsel %vm173, %v499, 0
    %507 = vmatprep.subr.mxu0 %v162
    %508 = vmatpush1.msra.mxu0 %v161
    %509 = vmatprep.subr.mxu0 %v164
    %510 = vmatpush1.msra.mxu0 %v163
    %511 = vmatprep.subr.mxu0 %v166
    %512 = vmatpush1.msra.mxu0 %v165
    %513 = vmatprep.subr.mxu0 %v168
    %514 = vmatpush1.msra.mxu0 %v167
    %515 = vmatprep.subr.mxu0 0.0
    %516 = vmatpush1.msra.mxu0 0.0
    %517 = vmatprep.subr.mxu0 0.0
    %518 = vmatpush1.msra.mxu0 0.0
    %519 = vmatprep.subr.mxu0 0.0
    %520 = vmatpush1.msra.mxu0 0.0
    %521 = vmatprep.subr.mxu0 0.0
    %522 = vmatpush1.msra.mxu0 0.0
    %523 = vmatprep.subr.mxu0 0.0
    %524 = vmatpush1.msra.mxu0 0.0
    %525 = vmatprep.subr.mxu0 0.0
    %526 = vmatpush1.msra.mxu0 0.0
    %527 = vmatprep.subr.mxu0 0.0
    %528 = vmatpush1.msra.mxu0 0.0
    %529 = vmatprep.subr.mxu0 0.0
    %530 = vmatpush1.msra.mxu0 0.0
    %531 = vmatprep.subr.mxu0 0.0
    %532 = vmatpush1.msra.mxu0 0.0
    %533 = vmatprep.subr.mxu0 0.0
    %534 = vmatpush1.msra.mxu0 0.0
    %535 = vmatprep.subr.mxu0 0.0
    %536 = vmatpush1.msra.mxu0 0.0
    %537 = vmatprep.subr.mxu0 0.0
    %538 = vmatpush1.msra.mxu0 0.0
    %539 = vmatprep.subr.mxu0 0.0
    %540 = vmatpush1.msra.mxu0 0.0
    %541 = vmatprep.subr.mxu0 0.0
    %542 = vmatpush1.msra.mxu0 0.0
    %543 = vmatprep.subr.mxu0 0.0
    %544 = vmatpush1.msra.mxu0 0.0
    %545 = vmatprep.subr.mxu0 0.0
    %546 = vmatpush1.msra.mxu0 0.0
    %547 = vmatprep.subr.mxu0 0.0
    %548 = vmatpush1.msra.mxu0 0.0
    %549 = vmatprep.subr.mxu0 0.0
    %550 = vmatpush1.msra.mxu0 0.0
    %551 = vmatprep.subr.mxu0 0.0
    %552 = vmatpush1.msra.mxu0 0.0
    %553 = vmatprep.subr.mxu0 0.0
    %554 = vmatpush1.msra.mxu0 0.0
    %555 = vmatprep.subr.mxu0 0.0
    %556 = vmatpush1.msra.mxu0 0.0
    %557 = vmatprep.subr.mxu0 0.0
    %558 = vmatpush1.msra.mxu0 0.0
    %559 = vmatprep.subr.mxu0 0.0
    %560 = vmatpush1.msra.mxu0 0.0
    %561 = vmatprep.subr.mxu0 0.0
    %562 = vmatpush1.msra.mxu0 0.0
    %563 = vmatprep.subr.mxu0 0.0
    %564 = vmatpush1.msra.mxu0 0.0
    %565 = vmatprep.subr.mxu0 0.0
    %566 = vmatpush1.msra.mxu0 0.0
    %567 = vmatprep.subr.mxu0 0.0
    %568 = vmatpush1.msra.mxu0 0.0
    %569 = vmatprep.subr.mxu0 0.0
    %570 = vmatpush1.msra.mxu0 0.0
    %571 = vmatprep.mubr.f32.mxu0 0.0
    %572 = vmatmul.mubr.f32.gmra.mrb[0].mxu0 %v505
    %v573 = vpop.f32.mrb[0].mxu0
    %v574 = vadd.f32 0.0, %v573
    %v575 = vpop.f32.mrb[0].mxu0
    %v576 = vadd.f32 0.0, %v575
    %577 = vdwg.mxu0
    %v578 = vsel %vm249, %v574, %v576
    %v579 = vadd.f32 %v138, %v169
    %v580 = vadd.f32 %v579, %v578
    %v581 = vxor.u32 %v580, 2147483648
    %v582 = vmul.f32 %v581, 1.442695
    %v583 = vpow.pop %v582
    %v584 = vadd.f32 %v583, 1.0
    %v585 = vrcp.pop %v584
    %v586 = vmul.f32 1.0, %v585
    %v587 = vtanh.pop %v580
    %v588 = vmul.f32 %v586, %v490
    %590 = vrot.lane.b32.xlu0 %v587, 32
    %v591 = vpop.permute.xlu0 %590
    %v593 = vmul.f32 %v586, %v591
    %595 = vrot.lane.b32.xlu0 %v593, 32
    %v596 = vpop.permute.xlu0 %595
    %v598 = vadd.f32 %v588, %v596
    %v599 = vtanh.pop %v598
    %601 = vrot.lane.b32.xlu0 %v599, 32
    %v602 = vpop.permute.xlu0 %601
    %v604 = vmul.f32 %v586, %v602
    %606 = vrot.lane.b32.xlu0 %v604, 64
    %v607 = vpop.permute.xlu0 %606
    %609 = vst.msk [vmem:[#allocation2 + $0x3] sm:$0x1] %vm281, %v607
    %610 = vst.msk [vmem:[#allocation3 + $0x2] sm:$0x4] %vm283, %v607
    %611 = vst.msk [vmem:[#allocation2 + $0xa] sm:$0x2] %vm285, %v607
    %612 = vst.msk [vmem:[#allocation3 + $0x9] sm:$0x8] %vm287, %v607
    %v613 = vsel %vm173, %v607, 0
    %615 = vmatprep.subr.mxu0 %v162
    %616 = vmatpush1.msra.mxu0 %v161
    %617 = vmatprep.subr.mxu0 %v164
    %618 = vmatpush1.msra.mxu0 %v163
    %619 = vmatprep.subr.mxu0 %v166
    %620 = vmatpush1.msra.mxu0 %v165
    %621 = vmatprep.subr.mxu0 %v168
    %622 = vmatpush1.msra.mxu0 %v167
    %623 = vmatprep.subr.mxu0 0.0
    %624 = vmatpush1.msra.mxu0 0.0
    %625 = vmatprep.subr.mxu0 0.0
    %626 = vmatpush1.msra.mxu0 0.0
    %627 = vmatprep.subr.mxu0 0.0
    %628 = vmatpush1.msra.mxu0 0.0
    %629 = vmatprep.subr.mxu0 0.0
    %630 = vmatpush1.msra.mxu0 0.0
    %631 = vmatprep.subr.mxu0 0.0
    %632 = vmatpush1.msra.mxu0 0.0
    %633 = vmatprep.subr.mxu0 0.0
    %634 = vmatpush1.msra.mxu0 0.0
    %635 = vmatprep.subr.mxu0 0.0
    %636 = vmatpush1.msra.mxu0 0.0
    %637 = vmatprep.subr.mxu0 0.0
    %638 = vmatpush1.msra.mxu0 0.0
    %639 = vmatprep.subr.mxu0 0.0
    %640 = vmatpush1.msra.mxu0 0.0
    %641 = vmatprep.subr.mxu0 0.0
    %642 = vmatpush1.msra.mxu0 0.0
    %643 = vmatprep.subr.mxu0 0.0
    %644 = vmatpush1.msra.mxu0 0.0
    %645 = vmatprep.subr.mxu0 0.0
    %646 = vmatpush1.msra.mxu0 0.0
    %647 = vmatprep.subr.mxu0 0.0
    %648 = vmatpush1.msra.mxu0 0.0
    %649 = vmatprep.subr.mxu0 0.0
    %650 = vmatpush1.msra.mxu0 0.0
    %651 = vmatprep.subr.mxu0 0.0
    %652 = vmatpush1.msra.mxu0 0.0
    %653 = vmatprep.subr.mxu0 0.0
    %654 = vmatpush1.msra.mxu0 0.0
    %655 = vmatprep.subr.mxu0 0.0
    %656 = vmatpush1.msra.mxu0 0.0
    %657 = vmatprep.subr.mxu0 0.0
    %658 = vmatpush1.msra.mxu0 0.0
    %659 = vmatprep.subr.mxu0 0.0
    %660 = vmatpush1.msra.mxu0 0.0
    %661 = vmatprep.subr.mxu0 0.0
    %662 = vmatpush1.msra.mxu0 0.0
    %663 = vmatprep.subr.mxu0 0.0
    %664 = vmatpush1.msra.mxu0 0.0
    %665 = vmatprep.subr.mxu0 0.0
    %666 = vmatpush1.msra.mxu0 0.0
    %667 = vmatprep.subr.mxu0 0.0
    %668 = vmatpush1.msra.mxu0 0.0
    %669 = vmatprep.subr.mxu0 0.0
    %670 = vmatpush1.msra.mxu0 0.0
    %671 = vmatprep.subr.mxu0 0.0
    %672 = vmatpush1.msra.mxu0 0.0
    %673 = vmatprep.subr.mxu0 0.0
    %674 = vmatpush1.msra.mxu0 0.0
    %675 = vmatprep.subr.mxu0 0.0
    %676 = vmatpush1.msra.mxu0 0.0
    %677 = vmatprep.subr.mxu0 0.0
    %678 = vmatpush1.msra.mxu0 0.0
    %679 = vmatprep.mubr.f32.mxu0 0.0
    %680 = vmatmul.mubr.f32.gmra.mrb[0].mxu0 %v613
    %v681 = vpop.f32.mrb[0].mxu0
    %v682 = vadd.f32 0.0, %v681
    %v683 = vpop.f32.mrb[0].mxu0
    %v684 = vadd.f32 0.0, %v683
    %685 = vdwg.mxu0
    %v686 = vsel %vm249, %v682, %v684
    %v687 = vadd.f32 %v143, %v169
    %v688 = vadd.f32 %v687, %v686
    %v689 = vxor.u32 %v688, 2147483648
    %v690 = vmul.f32 %v689, 1.442695
    %v691 = vpow.pop %v690
    %v692 = vadd.f32 %v691, 1.0
    %v693 = vrcp.pop %v692
    %v694 = vmul.f32 1.0, %v693
    %v695 = vtanh.pop %v688
    %v696 = vmul.f32 %v694, %v598
    %698 = vrot.lane.b32.xlu0 %v695, 32
    %v699 = vpop.permute.xlu0 %698
    %v701 = vmul.f32 %v694, %v699
    %703 = vrot.lane.b32.xlu0 %v701, 32
    %v704 = vpop.permute.xlu0 %703
    %v706 = vadd.f32 %v696, %v704
    %v707 = vtanh.pop %v706
    %709 = vrot.lane.b32.xlu0 %v707, 32
    %v710 = vpop.permute.xlu0 %709
    %v712 = vmul.f32 %v694, %v710
    %714 = vrot.lane.b32.xlu0 %v712, 64
    %v715 = vpop.permute.xlu0 %714
    %717 = vst.msk [vmem:[#allocation2 + $0x4] sm:$0x1] %vm281, %v715
    %718 = vst.msk [vmem:[#allocation3 + $0x1] sm:$0x4] %vm283, %v715
    %719 = vst.msk [vmem:[#allocation2 + $0xb] sm:$0x2] %vm285, %v715
    %720 = vst.msk [vmem:[#allocation3 + $0x8] sm:$0x8] %vm287, %v715
    %v721 = vsel %vm173, %v715, 0
    %723 = vmatprep.subr.mxu0 %v162
    %724 = vmatpush1.msra.mxu0 %v161
    %725 = vmatprep.subr.mxu0 %v164
    %726 = vmatpush1.msra.mxu0 %v163
    %727 = vmatprep.subr.mxu0 %v166
    %728 = vmatpush1.msra.mxu0 %v165
    %729 = vmatprep.subr.mxu0 %v168
    %730 = vmatpush1.msra.mxu0 %v167
    %731 = vmatprep.subr.mxu0 0.0
    %732 = vmatpush1.msra.mxu0 0.0
    %733 = vmatprep.subr.mxu0 0.0
    %734 = vmatpush1.msra.mxu0 0.0
    %735 = vmatprep.subr.mxu0 0.0
    %736 = vmatpush1.msra.mxu0 0.0
    %737 = vmatprep.subr.mxu0 0.0
    %738 = vmatpush1.msra.mxu0 0.0
    %739 = vmatprep.subr.mxu0 0.0
    %740 = vmatpush1.msra.mxu0 0.0
    %741 = vmatprep.subr.mxu0 0.0
    %742 = vmatpush1.msra.mxu0 0.0
    %743 = vmatprep.subr.mxu0 0.0
    %744 = vmatpush1.msra.mxu0 0.0
    %745 = vmatprep.subr.mxu0 0.0
    %746 = vmatpush1.msra.mxu0 0.0
    %747 = vmatprep.subr.mxu0 0.0
    %748 = vmatpush1.msra.mxu0 0.0
    %749 = vmatprep.subr.mxu0 0.0
    %750 = vmatpush1.msra.mxu0 0.0
    %751 = vmatprep.subr.mxu0 0.0
    %752 = vmatpush1.msra.mxu0 0.0
    %753 = vmatprep.subr.mxu0 0.0
    %754 = vmatpush1.msra.mxu0 0.0
    %755 = vmatprep.subr.mxu0 0.0
    %756 = vmatpush1.msra.mxu0 0.0
    %757 = vmatprep.subr.mxu0 0.0
    %758 = vmatpush1.msra.mxu0 0.0
    %759 = vmatprep.subr.mxu0 0.0
    %760 = vmatpush1.msra.mxu0 0.0
    %761 = vmatprep.subr.mxu0 0.0
    %762 = vmatpush1.msra.mxu0 0.0
    %763 = vmatprep.subr.mxu0 0.0
    %764 = vmatpush1.msra.mxu0 0.0
    %765 = vmatprep.subr.mxu0 0.0
    %766 = vmatpush1.msra.mxu0 0.0
    %767 = vmatprep.subr.mxu0 0.0
    %768 = vmatpush1.msra.mxu0 0.0
    %769 = vmatprep.subr.mxu0 0.0
    %770 = vmatpush1.msra.mxu0 0.0
    %771 = vmatprep.subr.mxu0 0.0
    %772 = vmatpush1.msra.mxu0 0.0
    %773 = vmatprep.subr.mxu0 0.0
    %774 = vmatpush1.msra.mxu0 0.0
    %775 = vmatprep.subr.mxu0 0.0
    %776 = vmatpush1.msra.mxu0 0.0
    %777 = vmatprep.subr.mxu0 0.0
    %778 = vmatpush1.msra.mxu0 0.0
    %779 = vmatprep.subr.mxu0 0.0
    %780 = vmatpush1.msra.mxu0 0.0
    %781 = vmatprep.subr.mxu0 0.0
    %782 = vmatpush1.msra.mxu0 0.0
    %783 = vmatprep.subr.mxu0 0.0
    %784 = vmatpush1.msra.mxu0 0.0
    %785 = vmatprep.subr.mxu0 0.0
    %786 = vmatpush1.msra.mxu0 0.0
    %787 = vmatprep.mubr.f32.mxu0 0.0
    %788 = vmatmul.mubr.f32.gmra.mrb[0].mxu0 %v721
    %v789 = vpop.f32.mrb[0].mxu0
    %v790 = vadd.f32 0.0, %v789
    %v791 = vpop.f32.mrb[0].mxu0
    %v792 = vadd.f32 0.0, %v791
    %793 = vdwg.mxu0
    %v794 = vsel %vm249, %v790, %v792
    %v795 = vadd.f32 %v148, %v169
    %v796 = vadd.f32 %v795, %v794
    %v797 = vxor.u32 %v796, 2147483648
    %v798 = vmul.f32 %v797, 1.442695
    %v799 = vpow.pop %v798
    %v800 = vadd.f32 %v799, 1.0
    %v801 = vrcp.pop %v800
    %v802 = vmul.f32 1.0, %v801
    %v803 = vtanh.pop %v796
    %v804 = vmul.f32 %v802, %v706
    %806 = vrot.lane.b32.xlu0 %v803, 32
    %v807 = vpop.permute.xlu0 %806
    %v809 = vmul.f32 %v802, %v807
    %811 = vrot.lane.b32.xlu0 %v809, 32
    %v812 = vpop.permute.xlu0 %811
    %v814 = vadd.f32 %v804, %v812
    %v815 = vtanh.pop %v814
    %817 = vrot.lane.b32.xlu0 %v815, 32
    %v818 = vpop.permute.xlu0 %817
    %v820 = vmul.f32 %v802, %v818
    %822 = vrot.lane.b32.xlu0 %v820, 64
    %v823 = vpop.permute.xlu0 %822
    %825 = vst.msk [vmem:[#allocation2 + $0x5] sm:$0x1] %vm281, %v823
    %826 = vst.msk [vmem:[#allocation3] sm:$0x4] %vm283, %v823
    %827 = vst.msk [vmem:[#allocation2 + $0xc] sm:$0x2] %vm285, %v823
    %828 = vst.msk [vmem:[#allocation3 + $0x7] sm:$0x8] %vm287, %v823
    %v829 = vsel %vm173, %v823, 0
    %831 = vmatprep.subr.mxu0 %v162
    %832 = vmatpush1.msra.mxu0 %v161
    %833 = vmatprep.subr.mxu0 %v164
    %834 = vmatpush1.msra.mxu0 %v163
    %835 = vmatprep.subr.mxu0 %v166
    %836 = vmatpush1.msra.mxu0 %v165
    %837 = vmatprep.subr.mxu0 %v168
    %838 = vmatpush1.msra.mxu0 %v167
    %839 = vmatprep.subr.mxu0 0.0
    %840 = vmatpush1.msra.mxu0 0.0
    %841 = vmatprep.subr.mxu0 0.0
    %842 = vmatpush1.msra.mxu0 0.0
    %843 = vmatprep.subr.mxu0 0.0
    %844 = vmatpush1.msra.mxu0 0.0
    %845 = vmatprep.subr.mxu0 0.0
    %846 = vmatpush1.msra.mxu0 0.0
    %847 = vmatprep.subr.mxu0 0.0
    %848 = vmatpush1.msra.mxu0 0.0
    %849 = vmatprep.subr.mxu0 0.0
    %850 = vmatpush1.msra.mxu0 0.0
    %851 = vmatprep.subr.mxu0 0.0
    %852 = vmatpush1.msra.mxu0 0.0
    %853 = vmatprep.subr.mxu0 0.0
    %854 = vmatpush1.msra.mxu0 0.0
    %855 = vmatprep.subr.mxu0 0.0
    %856 = vmatpush1.msra.mxu0 0.0
    %857 = vmatprep.subr.mxu0 0.0
    %858 = vmatpush1.msra.mxu0 0.0
    %859 = vmatprep.subr.mxu0 0.0
    %860 = vmatpush1.msra.mxu0 0.0
    %861 = vmatprep.subr.mxu0 0.0
    %862 = vmatpush1.msra.mxu0 0.0
    %863 = vmatprep.subr.mxu0 0.0
    %864 = vmatpush1.msra.mxu0 0.0
    %865 = vmatprep.subr.mxu0 0.0
    %866 = vmatpush1.msra.mxu0 0.0
    %867 = vmatprep.subr.mxu0 0.0
    %868 = vmatpush1.msra.mxu0 0.0
    %869 = vmatprep.subr.mxu0 0.0
    %870 = vmatpush1.msra.mxu0 0.0
    %871 = vmatprep.subr.mxu0 0.0
    %872 = vmatpush1.msra.mxu0 0.0
    %873 = vmatprep.subr.mxu0 0.0
    %874 = vmatpush1.msra.mxu0 0.0
    %875 = vmatprep.subr.mxu0 0.0
    %876 = vmatpush1.msra.mxu0 0.0
    %877 = vmatprep.subr.mxu0 0.0
    %878 = vmatpush1.msra.mxu0 0.0
    %879 = vmatprep.subr.mxu0 0.0
    %880 = vmatpush1.msra.mxu0 0.0
    %881 = vmatprep.subr.mxu0 0.0
    %882 = vmatpush1.msra.mxu0 0.0
    %883 = vmatprep.subr.mxu0 0.0
    %884 = vmatpush1.msra.mxu0 0.0
    %885 = vmatprep.subr.mxu0 0.0
    %886 = vmatpush1.msra.mxu0 0.0
    %887 = vmatprep.subr.mxu0 0.0
    %888 = vmatpush1.msra.mxu0 0.0
    %889 = vmatprep.subr.mxu0 0.0
    %890 = vmatpush1.msra.mxu0 0.0
    %891 = vmatprep.subr.mxu0 0.0
    %892 = vmatpush1.msra.mxu0 0.0
    %893 = vmatprep.subr.mxu0 0.0
    %894 = vmatpush1.msra.mxu0 0.0
    %895 = vmatprep.mubr.f32.mxu0 0.0
    %896 = vmatmul.mubr.f32.gmra.mrb[0].mxu0 %v829
    %v897 = vpop.f32.mrb[0].mxu0
    %v898 = vadd.f32 0.0, %v897
    %v899 = vpop.f32.mrb[0].mxu0
    %v900 = vadd.f32 0.0, %v899
    %901 = vdwg.mxu0
    %v902 = vsel %vm249, %v898, %v900
    %v903 = vadd.f32 %v153, %v169
    %v904 = vadd.f32 %v903, %v902
    %v905 = vxor.u32 %v904, 2147483648
    %v906 = vmul.f32 %v905, 1.442695
    %v907 = vpow.pop %v906
    %v908 = vadd.f32 %v907, 1.0
    %v909 = vrcp.pop %v908
    %v910 = vmul.f32 1.0, %v909
    %v911 = vtanh.pop %v904
    %v912 = vmul.f32 %v910, %v814
    %914 = vrot.lane.b32.xlu0 %v911, 32
    %v915 = vpop.permute.xlu0 %914
    %v917 = vmul.f32 %v910, %v915
    %919 = vrot.lane.b32.xlu0 %v917, 32
    %v920 = vpop.permute.xlu0 %919
    %v922 = vadd.f32 %v912, %v920
    %v923 = vtanh.pop %v922
    %925 = vrot.lane.b32.xlu0 %v923, 32
    %v926 = vpop.permute.xlu0 %925
    %v928 = vmul.f32 %v910, %v926
    %930 = vrot.lane.b32.xlu0 %v928, 64
    %v931 = vpop.permute.xlu0 %930
    %933 = vst.msk [vmem:[#allocation2 + $0x6] sm:$0x1] %vm281, %v931
    %934 = vst.msk [vmem:[#allocation3 - $0x1] sm:$0x4] %vm283, %v931
    %935 = vst.msk [vmem:[#allocation2 + $0xd] sm:$0x2] %vm285, %v931
    %936 = vst.msk [vmem:[#allocation3 + $0x6] sm:$0x8] %vm287, %v931
    %v937 = vsel %vm173, %v931, 0
    %939 = vmatprep.subr.mxu0 %v162
    %940 = vmatpush1.msra.mxu0 %v161
    %941 = vmatprep.subr.mxu0 %v164
    %942 = vmatpush1.msra.mxu0 %v163
    %943 = vmatprep.subr.mxu0 %v166
    %944 = vmatpush1.msra.mxu0 %v165
    %945 = vmatprep.subr.mxu0 %v168
    %946 = vmatpush1.msra.mxu0 %v167
    %947 = vmatprep.subr.mxu0 0.0
    %948 = vmatpush1.msra.mxu0 0.0
    %949 = vmatprep.subr.mxu0 0.0
    %950 = vmatpush1.msra.mxu0 0.0
    %951 = vmatprep.subr.mxu0 0.0
    %952 = vmatpush1.msra.mxu0 0.0
    %953 = vmatprep.subr.mxu0 0.0
    %954 = vmatpush1.msra.mxu0 0.0
    %955 = vmatprep.subr.mxu0 0.0
    %956 = vmatpush1.msra.mxu0 0.0
    %957 = vmatprep.subr.mxu0 0.0
    %958 = vmatpush1.msra.mxu0 0.0
    %959 = vmatprep.subr.mxu0 0.0
    %960 = vmatpush1.msra.mxu0 0.0
    %961 = vmatprep.subr.mxu0 0.0
    %962 = vmatpush1.msra.mxu0 0.0
    %963 = vmatprep.subr.mxu0 0.0
    %964 = vmatpush1.msra.mxu0 0.0
    %965 = vmatprep.subr.mxu0 0.0
    %966 = vmatpush1.msra.mxu0 0.0
    %967 = vmatprep.subr.mxu0 0.0
    %968 = vmatpush1.msra.mxu0 0.0
    %969 = vmatprep.subr.mxu0 0.0
    %970 = vmatpush1.msra.mxu0 0.0
    %971 = vmatprep.subr.mxu0 0.0
    %972 = vmatpush1.msra.mxu0 0.0
    %973 = vmatprep.subr.mxu0 0.0
    %974 = vmatpush1.msra.mxu0 0.0
    %975 = vmatprep.subr.mxu0 0.0
    %976 = vmatpush1.msra.mxu0 0.0
    %977 = vmatprep.subr.mxu0 0.0
    %978 = vmatpush1.msra.mxu0 0.0
    %979 = vmatprep.subr.mxu0 0.0
    %980 = vmatpush1.msra.mxu0 0.0
    %981 = vmatprep.subr.mxu0 0.0
    %982 = vmatpush1.msra.mxu0 0.0
    %983 = vmatprep.subr.mxu0 0.0
    %984 = vmatpush1.msra.mxu0 0.0
    %985 = vmatprep.subr.mxu0 0.0
    %986 = vmatpush1.msra.mxu0 0.0
    %987 = vmatprep.subr.mxu0 0.0
    %988 = vmatpush1.msra.mxu0 0.0
    %989 = vmatprep.subr.mxu0 0.0
    %990 = vmatpush1.msra.mxu0 0.0
    %991 = vmatprep.subr.mxu0 0.0
    %992 = vmatpush1.msra.mxu0 0.0
    %993 = vmatprep.subr.mxu0 0.0
    %994 = vmatpush1.msra.mxu0 0.0
    %995 = vmatprep.subr.mxu0 0.0
    %996 = vmatpush1.msra.mxu0 0.0
    %997 = vmatprep.subr.mxu0 0.0
    %998 = vmatpush1.msra.mxu0 0.0
    %999 = vmatprep.subr.mxu0 0.0
    %1000 = vmatpush1.msra.mxu0 0.0
    %1001 = vmatprep.subr.mxu0 0.0
    %1002 = vmatpush1.msra.mxu0 0.0
    %1003 = vmatprep.mubr.f32.mxu0 0.0
    %1004 = vmatmul.mubr.f32.gmra.mrb[0].mxu0 %v937
    %v1005 = vpop.f32.mrb[0].mxu0
    %v1006 = vadd.f32 0.0, %v1005
    %v1007 = vpop.f32.mrb[0].mxu0
    %v1008 = vadd.f32 0.0, %v1007
    %1009 = vdwg.mxu0
    %v1010 = vsel %vm249, %v1006, %v1008
    %v1011 = vadd.f32 %v158, %v169
    %v1012 = vadd.f32 %v1011, %v1010
    %v1013 = vxor.u32 %v1012, 2147483648
    %v1014 = vmul.f32 %v1013, 1.442695
    %v1015 = vpow.pop %v1014
    %v1016 = vadd.f32 %v1015, 1.0
    %v1017 = vrcp.pop %v1016
    %v1018 = vmul.f32 1.0, %v1017
    %v1019 = vtanh.pop %v1012
    %v1020 = vmul.f32 %v1018, %v922
    %1022 = vrot.lane.b32.xlu0 %v1019, 32
    %v1023 = vpop.permute.xlu0 %1022
    %v1025 = vmul.f32 %v1018, %v1023
    %1027 = vrot.lane.b32.xlu0 %v1025, 32
    %v1028 = vpop.permute.xlu0 %1027
    %v1030 = vadd.f32 %v1020, %v1028
    %v1031 = vtanh.pop %v1030
    %1033 = vrot.lane.b32.xlu0 %v1031, 32
    %v1034 = vpop.permute.xlu0 %1033
    %v1036 = vmul.f32 %v1018, %v1034
    %1038 = vrot.lane.b32.xlu0 %v1036, 64
    %v1039 = vpop.permute.xlu0 %1038
    %1041 = vst.msk [vmem:[#allocation2 + $0x7] sm:$0x1] %vm281, %v1039
    %1042 = vst.msk [vmem:[#allocation3 - $0x2] sm:$0x4] %vm283, %v1039
    %1043 = vst.msk [vmem:[#allocation2 + $0xe] sm:$0x2] %vm285, %v1039
    %1044 = vst.msk [vmem:[#allocation3 + $0x5] sm:$0x8] %vm287, %v1039
    %v1045 = vld [vmem:[#allocation2] sm:$0xff]
    %v1046 = vld [vmem:[#allocation2 + $0x8] sm:$0xff]
    %v1047 = vld [vmem:[#allocation3] sm:$0xff]
    %v1048 = vld [vmem:[#allocation3 + $0x8] sm:$0xff]
    %1051 = vrot.lane.b32.xlu0 %v1047, 32
    %v1052 = vpop.permute.xlu0 %1051
    %1053 = vrot.lane.b32.xlu0 %v1048, 32
    %v1054 = vpop.permute.xlu0 %1053
    %v1057 = vsel %vm173, %v1045, %v1052
    %v1058 = vsel %vm173, %v1046, %v1054
    %v1059 = vld [vmem:[%s1 + $0x8] sm:$0xff]
    %v1060 = vld [vmem:[%s1 + $0x18] sm:$0xff]
    %v1061 = vld [vmem:[%s1 + $0x28] sm:$0xff]
    %v1062 = vld [vmem:[%s1 + $0x38] sm:$0xff]
    %v1063 = vld [vmem:[%s1 + $0x48] sm:$0xff]
    %v1064 = vld [vmem:[%s1 + $0x58] sm:$0xff]
    %v1065 = vld [vmem:[%s1 + $0x68] sm:$0xff]
    %v1066 = vld [vmem:[%s1 + $0x78] sm:$0xff]
    %v1067 = vld [vmem:[%s2 + $0x18] sm:$0xff]
    %v1068 = vld [vmem:[%s2 + $0x40] sm:$0xff]
    %v1069 = vld [vmem:[%s2 + $0x68] sm:$0xff]
    %v1070 = vld [vmem:[%s2 + $0x90] sm:$0xff]
    %v1071 = vld [vmem:[%s2 + $0x18] ss:$0 sm:$0xff]
    %v1072 = vld [vmem:[%s2 + $0x20] ss:$0 sm:$0xff]
    %1074 = vrot.lane.b32.xlu0 %v1071, 46
    %v1075 = vpop.permute.xlu0 %1074
    %v1078 = vsel %vm31, %v1057, 0
    %v1081 = vsel %vm31, %v1058, 0
    %1083 = vmatprep.subr.mxu0 0.0
    %1084 = vmatpush1.msra.mxu0 %v1059
    %1085 = vmatprep.subr.mxu0 0.0
    %1086 = vmatpush1.msra.mxu0 %v1060
    %1087 = vmatprep.subr.mxu0 0.0
    %1088 = vmatpush1.msra.mxu0 %v1061
    %1089 = vmatprep.subr.mxu0 0.0
    %1090 = vmatpush1.msra.mxu0 %v1062
    %1091 = vmatprep.subr.mxu0 0.0
    %1092 = vmatpush1.msra.mxu0 %v1063
    %1093 = vmatprep.subr.mxu0 0.0
    %1094 = vmatpush1.msra.mxu0 %v1064
    %1095 = vmatprep.subr.mxu0 0.0
    %1096 = vmatpush1.msra.mxu0 %v1065
    %1097 = vmatprep.subr.mxu0 0.0
    %1098 = vmatpush1.msra.mxu0 %v1066
    %1099 = vmatprep.subr.mxu0 0.0
    %1100 = vmatpush1.msra.mxu0 0.0
    %1101 = vmatprep.subr.mxu0 0.0
    %1102 = vmatpush1.msra.mxu0 0.0
    %1103 = vmatprep.subr.mxu0 0.0
    %1104 = vmatpush1.msra.mxu0 0.0
    %1105 = vmatprep.subr.mxu0 0.0
    %1106 = vmatpush1.msra.mxu0 0.0
    %1107 = vmatprep.subr.mxu0 0.0
    %1108 = vmatpush1.msra.mxu0 0.0
    %1109 = vmatprep.subr.mxu0 0.0
    %1110 = vmatpush1.msra.mxu0 0.0
    %1111 = vmatprep.subr.mxu0 0.0
    %1112 = vmatpush1.msra.mxu0 0.0
    %1113 = vmatprep.subr.mxu0 0.0
    %1114 = vmatpush1.msra.mxu0 0.0
    %1115 = vmatprep.subr.mxu0 0.0
    %1116 = vmatpush1.msra.mxu0 0.0
    %1117 = vmatprep.subr.mxu0 0.0
    %1118 = vmatpush1.msra.mxu0 0.0
    %1119 = vmatprep.subr.mxu0 0.0
    %1120 = vmatpush1.msra.mxu0 0.0
    %1121 = vmatprep.subr.mxu0 0.0
    %1122 = vmatpush1.msra.mxu0 0.0
    %1123 = vmatprep.subr.mxu0 0.0
    %1124 = vmatpush1.msra.mxu0 0.0
    %1125 = vmatprep.subr.mxu0 0.0
    %1126 = vmatpush1.msra.mxu0 0.0
    %1127 = vmatprep.subr.mxu0 0.0
    %1128 = vmatpush1.msra.mxu0 0.0
    %1129 = vmatprep.subr.mxu0 0.0
    %1130 = vmatpush1.msra.mxu0 0.0
    %1131 = vmatprep.subr.mxu0 0.0
    %1132 = vmatpush1.msra.mxu0 0.0
    %1133 = vmatprep.subr.mxu0 0.0
    %1134 = vmatpush1.msra.mxu0 0.0
    %1135 = vmatprep.subr.mxu0 0.0
    %1136 = vmatpush1.msra.mxu0 0.0
    %1137 = vmatprep.subr.mxu0 0.0
    %1138 = vmatpush1.msra.mxu0 0.0
    %1139 = vmatprep.subr.mxu0 0.0
    %1140 = vmatpush1.msra.mxu0 0.0
    %1141 = vmatprep.subr.mxu0 0.0
    %1142 = vmatpush1.msra.mxu0 0.0
    %1143 = vmatprep.subr.mxu0 0.0
    %1144 = vmatpush1.msra.mxu0 0.0
    %1145 = vmatprep.subr.mxu0 0.0
    %1146 = vmatpush1.msra.mxu0 0.0
    %1147 = vmatprep.mubr.f32.mxu0 0.0
    %1148 = vmatmul.mubr.f32.gmra.mrb[0].mxu0 %v1078
    %v1149 = vpop.f32.mrb[0].mxu0
    %v1150 = vadd.f32 %v1075, %v1149
    %v1151 = vpop.f32.mrb[0].mxu0
    %1152 = vmatprep.mubr.f32.mxu0 0.0
    %1153 = vmatmul.mubr.f32.gmra.mrb[0].mxu0 %v1081
    %v1154 = vpop.f32.mrb[0].mxu0
    %v1155 = vadd.f32 %v1075, %v1154
    %v1156 = vpop.f32.mrb[0].mxu0
    %1157 = vdwg.mxu0
    %1166 = vrot.lane.b32.xlu0 %v1059, 112
    %v1167 = vpop.permute.xlu0 %1166
    %1168 = vrot.lane.b32.xlu0 %v1060, 112
    %v1169 = vpop.permute.xlu0 %1168
    %1170 = vrot.lane.b32.xlu0 %v1061, 112
    %v1171 = vpop.permute.xlu0 %1170
    %1172 = vrot.lane.b32.xlu0 %v1062, 112
    %v1173 = vpop.permute.xlu0 %1172
    %1174 = vrot.lane.b32.xlu0 %v1063, 112
    %v1175 = vpop.permute.xlu0 %1174
    %1176 = vrot.lane.b32.xlu0 %v1064, 112
    %v1177 = vpop.permute.xlu0 %1176
    %1178 = vrot.lane.b32.xlu0 %v1065, 112
    %v1179 = vpop.permute.xlu0 %1178
    %1180 = vrot.lane.b32.xlu0 %v1066, 112
    %v1181 = vpop.permute.xlu0 %1180
    %1191 = vrot.lane.b32.xlu0 %v1071, 30
    %v1192 = vpop.permute.xlu0 %1191
    %1193 = vrot.lane.b32.xlu0 %v1072, 30
    %v1194 = vpop.permute.xlu0 %1193
    %vm1195 = vcmask 244736
    %v1196 = vsel %vm1195, %v1192, %v1194
    %1198 = vmatprep.subr.mxu0 0.0
    %1199 = vmatpush1.msra.mxu0 %v1167
    %1200 = vmatprep.subr.mxu0 0.0
    %1201 = vmatpush1.msra.mxu0 %v1169
    %1202 = vmatprep.subr.mxu0 0.0
    %1203 = vmatpush1.msra.mxu0 %v1171
    %1204 = vmatprep.subr.mxu0 0.0
    %1205 = vmatpush1.msra.mxu0 %v1173
    %1206 = vmatprep.subr.mxu0 0.0
    %1207 = vmatpush1.msra.mxu0 %v1175
    %1208 = vmatprep.subr.mxu0 0.0
    %1209 = vmatpush1.msra.mxu0 %v1177
    %1210 = vmatprep.subr.mxu0 0.0
    %1211 = vmatpush1.msra.mxu0 %v1179
    %1212 = vmatprep.subr.mxu0 0.0
    %1213 = vmatpush1.msra.mxu0 %v1181
    %1214 = vmatprep.subr.mxu0 0.0
    %1215 = vmatpush1.msra.mxu0 0.0
    %1216 = vmatprep.subr.mxu0 0.0
    %1217 = vmatpush1.msra.mxu0 0.0
    %1218 = vmatprep.subr.mxu0 0.0
    %1219 = vmatpush1.msra.mxu0 0.0
    %1220 = vmatprep.subr.mxu0 0.0
    %1221 = vmatpush1.msra.mxu0 0.0
    %1222 = vmatprep.subr.mxu0 0.0
    %1223 = vmatpush1.msra.mxu0 0.0
    %1224 = vmatprep.subr.mxu0 0.0
    %1225 = vmatpush1.msra.mxu0 0.0
    %1226 = vmatprep.subr.mxu0 0.0
    %1227 = vmatpush1.msra.mxu0 0.0
    %1228 = vmatprep.subr.mxu0 0.0
    %1229 = vmatpush1.msra.mxu0 0.0
    %1230 = vmatprep.subr.mxu0 0.0
    %1231 = vmatpush1.msra.mxu0 0.0
    %1232 = vmatprep.subr.mxu0 0.0
    %1233 = vmatpush1.msra.mxu0 0.0
    %1234 = vmatprep.subr.mxu0 0.0
    %1235 = vmatpush1.msra.mxu0 0.0
    %1236 = vmatprep.subr.mxu0 0.0
    %1237 = vmatpush1.msra.mxu0 0.0
    %1238 = vmatprep.subr.mxu0 0.0
    %1239 = vmatpush1.msra.mxu0 0.0
    %1240 = vmatprep.subr.mxu0 0.0
    %1241 = vmatpush1.msra.mxu0 0.0
    %1242 = vmatprep.subr.mxu0 0.0
    %1243 = vmatpush1.msra.mxu0 0.0
    %1244 = vmatprep.subr.mxu0 0.0
    %1245 = vmatpush1.msra.mxu0 0.0
    %1246 = vmatprep.subr.mxu0 0.0
    %1247 = vmatpush1.msra.mxu0 0.0
    %1248 = vmatprep.subr.mxu0 0.0
    %1249 = vmatpush1.msra.mxu0 0.0
    %1250 = vmatprep.subr.mxu0 0.0
    %1251 = vmatpush1.msra.mxu0 0.0
    %1252 = vmatprep.subr.mxu0 0.0
    %1253 = vmatpush1.msra.mxu0 0.0
    %1254 = vmatprep.subr.mxu0 0.0
    %1255 = vmatpush1.msra.mxu0 0.0
    %1256 = vmatprep.subr.mxu0 0.0
    %1257 = vmatpush1.msra.mxu0 0.0
    %1258 = vmatprep.subr.mxu0 0.0
    %1259 = vmatpush1.msra.mxu0 0.0
    %1260 = vmatprep.subr.mxu0 0.0
    %1261 = vmatpush1.msra.mxu0 0.0
    %1262 = vmatprep.mubr.f32.mxu0 0.0
    %1263 = vmatmul.mubr.f32.gmra.mrb[0].mxu0 %v1078
    %v1264 = vpop.f32.mrb[0].mxu0
    %v1265 = vadd.f32 %v1196, %v1264
    %v1266 = vpop.f32.mrb[0].mxu0
    %1267 = vmatprep.mubr.f32.mxu0 0.0
    %1268 = vmatmul.mubr.f32.gmra.mrb[0].mxu0 %v1081
    %v1269 = vpop.f32.mrb[0].mxu0
    %v1270 = vadd.f32 %v1196, %v1269
    %v1271 = vpop.f32.mrb[0].mxu0
    %1272 = vdwg.mxu0
    %v1273 = vtanh.pop %v1265
    %v1274 = vtanh.pop %v1270
    %1279 = vrot.lane.b32.xlu0 %v1067, 64
    %v1280 = vpop.permute.xlu0 %1279
    %1281 = vrot.lane.b32.xlu0 %v1068, 64
    %v1282 = vpop.permute.xlu0 %1281
    %1283 = vrot.lane.b32.xlu0 %v1069, 64
    %v1284 = vpop.permute.xlu0 %1283
    %1285 = vrot.lane.b32.xlu0 %v1070, 64
    %v1286 = vpop.permute.xlu0 %1285
    %1291 = vrot.lane.b32.xlu0 %v1072, 126
    %v1292 = vpop.permute.xlu0 %1291
    %v1295 = vsel %vm173, %v1273, 0
    %v1298 = vsel %vm173, %v1274, 0
    %1300 = vmatprep.subr.mxu0 0.0
    %1301 = vmatpush1.msra.mxu0 %v1280
    %1302 = vmatprep.subr.mxu0 0.0
    %1303 = vmatpush1.msra.mxu0 %v1282
    %1304 = vmatprep.subr.mxu0 0.0
    %1305 = vmatpush1.msra.mxu0 %v1284
    %1306 = vmatprep.subr.mxu0 0.0
    %1307 = vmatpush1.msra.mxu0 %v1286
    %1308 = vmatprep.subr.mxu0 0.0
    %1309 = vmatpush1.msra.mxu0 0.0
    %1310 = vmatprep.subr.mxu0 0.0
    %1311 = vmatpush1.msra.mxu0 0.0
    %1312 = vmatprep.subr.mxu0 0.0
    %1313 = vmatpush1.msra.mxu0 0.0
    %1314 = vmatprep.subr.mxu0 0.0
    %1315 = vmatpush1.msra.mxu0 0.0
    %1316 = vmatprep.subr.mxu0 0.0
    %1317 = vmatpush1.msra.mxu0 0.0
    %1318 = vmatprep.subr.mxu0 0.0
    %1319 = vmatpush1.msra.mxu0 0.0
    %1320 = vmatprep.subr.mxu0 0.0
    %1321 = vmatpush1.msra.mxu0 0.0
    %1322 = vmatprep.subr.mxu0 0.0
    %1323 = vmatpush1.msra.mxu0 0.0
    %1324 = vmatprep.subr.mxu0 0.0
    %1325 = vmatpush1.msra.mxu0 0.0
    %1326 = vmatprep.subr.mxu0 0.0
    %1327 = vmatpush1.msra.mxu0 0.0
    %1328 = vmatprep.subr.mxu0 0.0
    %1329 = vmatpush1.msra.mxu0 0.0
    %1330 = vmatprep.subr.mxu0 0.0
    %1331 = vmatpush1.msra.mxu0 0.0
    %1332 = vmatprep.subr.mxu0 0.0
    %1333 = vmatpush1.msra.mxu0 0.0
    %1334 = vmatprep.subr.mxu0 0.0
    %1335 = vmatpush1.msra.mxu0 0.0
    %1336 = vmatprep.subr.mxu0 0.0
    %1337 = vmatpush1.msra.mxu0 0.0
    %1338 = vmatprep.subr.mxu0 0.0
    %1339 = vmatpush1.msra.mxu0 0.0
    %1340 = vmatprep.subr.mxu0 0.0
    %1341 = vmatpush1.msra.mxu0 0.0
    %1342 = vmatprep.subr.mxu0 0.0
    %1343 = vmatpush1.msra.mxu0 0.0
    %1344 = vmatprep.subr.mxu0 0.0
    %1345 = vmatpush1.msra.mxu0 0.0
    %1346 = vmatprep.subr.mxu0 0.0
    %1347 = vmatpush1.msra.mxu0 0.0
    %1348 = vmatprep.subr.mxu0 0.0
    %1349 = vmatpush1.msra.mxu0 0.0
    %1350 = vmatprep.subr.mxu0 0.0
    %1351 = vmatpush1.msra.mxu0 0.0
    %1352 = vmatprep.subr.mxu0 0.0
    %1353 = vmatpush1.msra.mxu0 0.0
    %1354 = vmatprep.subr.mxu0 0.0
    %1355 = vmatpush1.msra.mxu0 0.0
    %1356 = vmatprep.subr.mxu0 0.0
    %1357 = vmatpush1.msra.mxu0 0.0
    %1358 = vmatprep.subr.mxu0 0.0
    %1359 = vmatpush1.msra.mxu0 0.0
    %1360 = vmatprep.subr.mxu0 0.0
    %1361 = vmatpush1.msra.mxu0 0.0
    %1362 = vmatprep.subr.mxu0 0.0
    %1363 = vmatpush1.msra.mxu0 0.0
    %1364 = vmatprep.mubr.f32.mxu0 0.0
    %1365 = vmatmul.mubr.f32.gmra.mrb[0].mxu0 %v1295
    %v1366 = vpop.f32.mrb[0].mxu0
    %v1367 = vadd.f32 %v1292, %v1366
    %v1368 = vpop.f32.mrb[0].mxu0
    %1369 = vmatprep.mubr.f32.mxu0 0.0
    %1370 = vmatmul.mubr.f32.gmra.mrb[0].mxu0 %v1298
    %v1371 = vpop.f32.mrb[0].mxu0
    %v1372 = vadd.f32 %v1292, %v1371
    %v1373 = vpop.f32.mrb[0].mxu0
    %1374 = vdwg.mxu0
    %vm1375 = vcmask 130048
    %v1376 = vsel %vm1375, %v1150, -inf
    %v1377 = vrot.slane %v1376, 4
    %v1378 = vmax.f32 %v1376, %v1377
    %v1379 = vrot.slane %v1378, 2
    %v1380 = vmax.f32 %v1378, %v1379
    %v1381 = vrot.slane %v1380, 1
    %v1382 = vmax.f32 %v1380, %v1381
    %v1383 = vsub.f32 %v1150, %v1382
    %v1384 = vmul.f32 %v1383, 1.442695
    %v1385 = vpow.pop %v1384
    %v1386 = vsel %vm1375, %v1385, 0.0
    %v1387 = vrot.slane %v1386, 4
    %v1388 = vadd.f32 %v1386, %v1387
    %v1389 = vrot.slane %v1388, 2
    %v1390 = vadd.f32 %v1388, %v1389
    %v1391 = vrot.slane %v1390, 1
    %v1392 = vadd.f32 %v1390, %v1391
    %v1393 = vrcp.pop %v1392
    %v1394 = vmul.f32 %v1392, %v1393
    %v1395 = vsub.f32 2.0, %v1394
    %v1396 = vmul.f32 %v1393, %v1395
    %v1397 = vmul.f32 %v1385, %v1396
    %v1398 = vsel %vm1375, %v1367, -inf
    %v1399 = vrot.slane %v1398, 4
    %v1400 = vmax.f32 %v1398, %v1399
    %v1401 = vrot.slane %v1400, 2
    %v1402 = vmax.f32 %v1400, %v1401
    %v1403 = vrot.slane %v1402, 1
    %v1404 = vmax.f32 %v1402, %v1403
    %v1405 = vsub.f32 %v1367, %v1404
    %v1406 = vmul.f32 %v1405, 1.442695
    %v1407 = vpow.pop %v1406
    %v1408 = vsel %vm1375, %v1407, 0.0
    %v1409 = vrot.slane %v1408, 4
    %v1410 = vadd.f32 %v1408, %v1409
    %v1411 = vrot.slane %v1410, 2
    %v1412 = vadd.f32 %v1410, %v1411
    %v1413 = vrot.slane %v1412, 1
    %v1414 = vadd.f32 %v1412, %v1413
    %v1415 = vrcp.pop %v1414
    %v1416 = vmul.f32 %v1414, %v1415
    %v1417 = vsub.f32 2.0, %v1416
    %v1418 = vmul.f32 %v1415, %v1417
    %v1419 = vmul.f32 %v1407, %v1418
    %1420 = vxpose.xlu0.b32.start [1/16] %v1057, 128
    %1421 = vxpose.xlu0.b32.cont [2/16] 0.0, 128
    %1422 = vxpose.xlu0.b32.cont [3/16] 0.0, 128
    %1423 = vxpose.xlu0.b32.cont [4/16] 0.0, 128
    %1424 = vxpose.xlu0.b32.cont [5/16] 0.0, 128
    %1425 = vxpose.xlu0.b32.cont [6/16] 0.0, 128
    %1426 = vxpose.xlu0.b32.cont [7/16] 0.0, 128
    %1427 = vxpose.xlu0.b32.cont [8/16] 0.0, 128
    %1428 = vxpose.xlu0.b32.cont [9/16] 0.0, 128
    %1429 = vxpose.xlu0.b32.cont [10/16] 0.0, 128
    %1430 = vxpose.xlu0.b32.cont [11/16] 0.0, 128
    %1431 = vxpose.xlu0.b32.cont [12/16] 0.0, 128
    %1432 = vxpose.xlu0.b32.cont [13/16] 0.0, 128
    %1433 = vxpose.xlu0.b32.cont [14/16] 0.0, 128
    %1434 = vxpose.xlu0.b32.cont [15/16] 0.0, 128
    %1435 = vxpose.xlu0.b32.end [16/16] 0.0, 128
    %v1436 = vpop.trf.xlu0
    %v1437 = vpop.trf.xlu0
    %v1438 = vpop.trf.xlu0
    %v1439 = vpop.trf.xlu0
    %v1440 = vpop.trf.xlu0
    %v1441 = vpop.trf.xlu0
    %v1442 = vpop.trf.xlu0
    %v1443 = vpop.trf.xlu0
    %v1444 = vpop.trf.xlu0
    %v1445 = vpop.trf.xlu0
    %v1446 = vpop.trf.xlu0
    %v1447 = vpop.trf.xlu0
    %v1448 = vpop.trf.xlu0
    %v1449 = vpop.trf.xlu0
    %v1450 = vpop.trf.xlu0
    %v1451 = vpop.trf.xlu0
    %vm1452 = vcmask 64512
    %v1454 = vsel %vm1452, %v1436, 0
    %v1457 = vsel %vm1452, %v1437, 0
    %v1460 = vsel %vm1452, %v1438, 0
    %v1463 = vsel %vm1452, %v1439, 0
    %v1466 = vsel %vm1452, %v1440, 0
    %v1469 = vsel %vm1452, %v1441, 0
    %v1472 = vsel %vm1452, %v1442, 0
    %v1475 = vsel %vm1452, %v1443, 0
    %1477 = vmatprep.subr.mxu0 0.0
    %1478 = vmatpush1.msra.mxu0 %v1397
    %1479 = vmatprep.subr.mxu0 0.0
    %1480 = vmatpush1.msra.mxu0 0.0
    %1481 = vmatprep.subr.mxu0 0.0
    %1482 = vmatpush1.msra.mxu0 0.0
    %1483 = vmatprep.subr.mxu0 0.0
    %1484 = vmatpush1.msra.mxu0 0.0
    %1485 = vmatprep.subr.mxu0 0.0
    %1486 = vmatpush1.msra.mxu0 0.0
    %1487 = vmatprep.subr.mxu0 0.0
    %1488 = vmatpush1.msra.mxu0 0.0
    %1489 = vmatprep.subr.mxu0 0.0
    %1490 = vmatpush1.msra.mxu0 0.0
    %1491 = vmatprep.subr.mxu0 0.0
    %1492 = vmatpush1.msra.mxu0 0.0
    %1493 = vmatprep.subr.mxu0 0.0
    %1494 = vmatpush1.msra.mxu0 0.0
    %1495 = vmatprep.subr.mxu0 0.0
    %1496 = vmatpush1.msra.mxu0 0.0
    %1497 = vmatprep.subr.mxu0 0.0
    %1498 = vmatpush1.msra.mxu0 0.0
    %1499 = vmatprep.subr.mxu0 0.0
    %1500 = vmatpush1.msra.mxu0 0.0
    %1501 = vmatprep.subr.mxu0 0.0
    %1502 = vmatpush1.msra.mxu0 0.0
    %1503 = vmatprep.subr.mxu0 0.0
    %1504 = vmatpush1.msra.mxu0 0.0
    %1505 = vmatprep.subr.mxu0 0.0
    %1506 = vmatpush1.msra.mxu0 0.0
    %1507 = vmatprep.subr.mxu0 0.0
    %1508 = vmatpush1.msra.mxu0 0.0
    %1509 = vmatprep.subr.mxu0 0.0
    %1510 = vmatpush1.msra.mxu0 0.0
    %1511 = vmatprep.subr.mxu0 0.0
    %1512 = vmatpush1.msra.mxu0 0.0
    %1513 = vmatprep.subr.mxu0 0.0
    %1514 = vmatpush1.msra.mxu0 0.0
    %1515 = vmatprep.subr.mxu0 0.0
    %1516 = vmatpush1.msra.mxu0 0.0
    %1517 = vmatprep.subr.mxu0 0.0
    %1518 = vmatpush1.msra.mxu0 0.0
    %1519 = vmatprep.subr.mxu0 0.0
    %1520 = vmatpush1.msra.mxu0 0.0
    %1521 = vmatprep.subr.mxu0 0.0
    %1522 = vmatpush1.msra.mxu0 0.0
    %1523 = vmatprep.subr.mxu0 0.0
    %1524 = vmatpush1.msra.mxu0 0.0
    %1525 = vmatprep.subr.mxu0 0.0
    %1526 = vmatpush1.msra.mxu0 0.0
    %1527 = vmatprep.subr.mxu0 0.0
    %1528 = vmatpush1.msra.mxu0 0.0
    %1529 = vmatprep.subr.mxu0 0.0
    %1530 = vmatpush1.msra.mxu0 0.0
    %1531 = vmatprep.subr.mxu0 0.0
    %1532 = vmatpush1.msra.mxu0 0.0
    %1533 = vmatprep.subr.mxu0 0.0
    %1534 = vmatpush1.msra.mxu0 0.0
    %1535 = vmatprep.subr.mxu0 0.0
    %1536 = vmatpush1.msra.mxu0 0.0
    %1537 = vmatprep.subr.mxu0 0.0
    %1538 = vmatpush1.msra.mxu0 0.0
    %1539 = vmatprep.subr.mxu0 0.0
    %1540 = vmatpush1.msra.mxu0 0.0
    %1541 = vmatprep.mubr.f32.mxu0 0.0
    %1542 = vmatmul.mubr.f32.gmra.mrb[0].mxu0 %v1454
    %v1543 = vpop.f32.mrb[0].mxu0
    %v1544 = vadd.f32 0.0, %v1543
    %v1545 = vpop.f32.mrb[0].mxu0
    %1546 = vmatprep.mubr.f32.mxu0 0.0
    %1547 = vmatmul.mubr.f32.gmra.mrb[0].mxu0 %v1457
    %v1548 = vpop.f32.mrb[0].mxu0
    %v1549 = vadd.f32 0.0, %v1548
    %v1550 = vpop.f32.mrb[0].mxu0
    %1551 = vmatprep.mubr.f32.mxu0 0.0
    %1552 = vmatmul.mubr.f32.gmra.mrb[0].mxu0 %v1460
    %v1553 = vpop.f32.mrb[0].mxu0
    %v1554 = vadd.f32 0.0, %v1553
    %v1555 = vpop.f32.mrb[0].mxu0
    %1556 = vmatprep.mubr.f32.mxu0 0.0
    %1557 = vmatmul.mubr.f32.gmra.mrb[0].mxu0 %v1463
    %v1558 = vpop.f32.mrb[0].mxu0
    %v1559 = vadd.f32 0.0, %v1558
    %v1560 = vpop.f32.mrb[0].mxu0
    %1561 = vmatprep.mubr.f32.mxu0 0.0
    %1562 = vmatmul.mubr.f32.gmra.mrb[0].mxu0 %v1466
    %v1563 = vpop.f32.mrb[0].mxu0
    %v1564 = vadd.f32 0.0, %v1563
    %v1565 = vpop.f32.mrb[0].mxu0
    %1566 = vmatprep.mubr.f32.mxu0 0.0
    %1567 = vmatmul.mubr.f32.gmra.mrb[0].mxu0 %v1469
    %v1568 = vpop.f32.mrb[0].mxu0
    %v1569 = vadd.f32 0.0, %v1568
    %v1570 = vpop.f32.mrb[0].mxu0
    %1571 = vmatprep.mubr.f32.mxu0 0.0
    %1572 = vmatmul.mubr.f32.gmra.mrb[0].mxu0 %v1472
    %v1573 = vpop.f32.mrb[0].mxu0
    %v1574 = vadd.f32 0.0, %v1573
    %v1575 = vpop.f32.mrb[0].mxu0
    %1576 = vmatprep.mubr.f32.mxu0 0.0
    %1577 = vmatmul.mubr.f32.gmra.mrb[0].mxu0 %v1475
    %v1578 = vpop.f32.mrb[0].mxu0
    %v1579 = vadd.f32 0.0, %v1578
    %v1580 = vpop.f32.mrb[0].mxu0
    %1581 = vdwg.mxu0
    %1582 = vmatprep.subr.mxu0 0.0
    %1583 = vmatpush1.msra.mxu0 %v1419
    %1584 = vmatprep.subr.mxu0 0.0
    %1585 = vmatpush1.msra.mxu0 0.0
    %1586 = vmatprep.subr.mxu0 0.0
    %1587 = vmatpush1.msra.mxu0 0.0
    %1588 = vmatprep.subr.mxu0 0.0
    %1589 = vmatpush1.msra.mxu0 0.0
    %1590 = vmatprep.subr.mxu0 0.0
    %1591 = vmatpush1.msra.mxu0 0.0
    %1592 = vmatprep.subr.mxu0 0.0
    %1593 = vmatpush1.msra.mxu0 0.0
    %1594 = vmatprep.subr.mxu0 0.0
    %1595 = vmatpush1.msra.mxu0 0.0
    %1596 = vmatprep.subr.mxu0 0.0
    %1597 = vmatpush1.msra.mxu0 0.0
    %1598 = vmatprep.subr.mxu0 0.0
    %1599 = vmatpush1.msra.mxu0 0.0
    %1600 = vmatprep.subr.mxu0 0.0
    %1601 = vmatpush1.msra.mxu0 0.0
    %1602 = vmatprep.subr.mxu0 0.0
    %1603 = vmatpush1.msra.mxu0 0.0
    %1604 = vmatprep.subr.mxu0 0.0
    %1605 = vmatpush1.msra.mxu0 0.0
    %1606 = vmatprep.subr.mxu0 0.0
    %1607 = vmatpush1.msra.mxu0 0.0
    %1608 = vmatprep.subr.mxu0 0.0
    %1609 = vmatpush1.msra.mxu0 0.0
    %1610 = vmatprep.subr.mxu0 0.0
    %1611 = vmatpush1.msra.mxu0 0.0
    %1612 = vmatprep.subr.mxu0 0.0
    %1613 = vmatpush1.msra.mxu0 0.0
    %1614 = vmatprep.subr.mxu0 0.0
    %1615 = vmatpush1.msra.mxu0 0.0
    %1616 = vmatprep.subr.mxu0 0.0
    %1617 = vmatpush1.msra.mxu0 0.0
    %1618 = vmatprep.subr.mxu0 0.0
    %1619 = vmatpush1.msra.mxu0 0.0
    %1620 = vmatprep.subr.mxu0 0.0
    %1621 = vmatpush1.msra.mxu0 0.0
    %1622 = vmatprep.subr.mxu0 0.0
    %1623 = vmatpush1.msra.mxu0 0.0
    %1624 = vmatprep.subr.mxu0 0.0
    %1625 = vmatpush1.msra.mxu0 0.0
    %1626 = vmatprep.subr.mxu0 0.0
    %1627 = vmatpush1.msra.mxu0 0.0
    %1628 = vmatprep.subr.mxu0 0.0
    %1629 = vmatpush1.msra.mxu0 0.0
    %1630 = vmatprep.subr.mxu0 0.0
    %1631 = vmatpush1.msra.mxu0 0.0
    %1632 = vmatprep.subr.mxu0 0.0
    %1633 = vmatpush1.msra.mxu0 0.0
    %1634 = vmatprep.subr.mxu0 0.0
    %1635 = vmatpush1.msra.mxu0 0.0
    %1636 = vmatprep.subr.mxu0 0.0
    %1637 = vmatpush1.msra.mxu0 0.0
    %1638 = vmatprep.subr.mxu0 0.0
    %1639 = vmatpush1.msra.mxu0 0.0
    %1640 = vmatprep.subr.mxu0 0.0
    %1641 = vmatpush1.msra.mxu0 0.0
    %1642 = vmatprep.subr.mxu0 0.0
    %1643 = vmatpush1.msra.mxu0 0.0
    %1644 = vmatprep.subr.mxu0 0.0
    %1645 = vmatpush1.msra.mxu0 0.0
    %1646 = vmatprep.mubr.f32.mxu0 0.0
    %1647 = vmatmul.mubr.f32.gmra.mrb[0].mxu0 %v1454
    %v1648 = vpop.f32.mrb[0].mxu0
    %v1649 = vadd.f32 0.0, %v1648
    %v1650 = vpop.f32.mrb[0].mxu0
    %1651 = vmatprep.mubr.f32.mxu0 0.0
    %1652 = vmatmul.mubr.f32.gmra.mrb[0].mxu0 %v1457
    %v1653 = vpop.f32.mrb[0].mxu0
    %v1654 = vadd.f32 0.0, %v1653
    %v1655 = vpop.f32.mrb[0].mxu0
    %1656 = vmatprep.mubr.f32.mxu0 0.0
    %1657 = vmatmul.mubr.f32.gmra.mrb[0].mxu0 %v1460
    %v1658 = vpop.f32.mrb[0].mxu0
    %v1659 = vadd.f32 0.0, %v1658
    %v1660 = vpop.f32.mrb[0].mxu0
    %1661 = vmatprep.mubr.f32.mxu0 0.0
    %1662 = vmatmul.mubr.f32.gmra.mrb[0].mxu0 %v1463
    %v1663 = vpop.f32.mrb[0].mxu0
    %v1664 = vadd.f32 0.0, %v1663
    %v1665 = vpop.f32.mrb[0].mxu0
    %1666 = vmatprep.mubr.f32.mxu0 0.0
    %1667 = vmatmul.mubr.f32.gmra.mrb[0].mxu0 %v1466
    %v1668 = vpop.f32.mrb[0].mxu0
    %v1669 = vadd.f32 0.0, %v1668
    %v1670 = vpop.f32.mrb[0].mxu0
    %1671 = vmatprep.mubr.f32.mxu0 0.0
    %1672 = vmatmul.mubr.f32.gmra.mrb[0].mxu0 %v1469
    %v1673 = vpop.f32.mrb[0].mxu0
    %v1674 = vadd.f32 0.0, %v1673
    %v1675 = vpop.f32.mrb[0].mxu0
    %1676 = vmatprep.mubr.f32.mxu0 0.0
    %1677 = vmatmul.mubr.f32.gmra.mrb[0].mxu0 %v1472
    %v1678 = vpop.f32.mrb[0].mxu0
    %v1679 = vadd.f32 0.0, %v1678
    %v1680 = vpop.f32.mrb[0].mxu0
    %1681 = vmatprep.mubr.f32.mxu0 0.0
    %1682 = vmatmul.mubr.f32.gmra.mrb[0].mxu0 %v1475
    %v1683 = vpop.f32.mrb[0].mxu0
    %v1684 = vadd.f32 0.0, %v1683
    %v1685 = vpop.f32.mrb[0].mxu0
    %1686 = vdwg.mxu0
    %1687 = vset.pattern.permute.xlu0 48
    %1688 = vperm.xlu0 %1687, %v1059
    %v1689 = vpop.permute.xlu0 %1688
    %1691 = vset.pattern.permute.xlu0 48
    %1692 = vperm.xlu0 %1691, %v1060
    %v1693 = vpop.permute.xlu0 %1692
    %1695 = vset.pattern.permute.xlu0 48
    %1696 = vperm.xlu0 %1695, %v1061
    %v1697 = vpop.permute.xlu0 %1696
    %1699 = vset.pattern.permute.xlu0 48
    %1700 = vperm.xlu0 %1699, %v1062
    %v1701 = vpop.permute.xlu0 %1700
    %1703 = vset.pattern.permute.xlu0 48
    %1704 = vperm.xlu0 %1703, %v1063
    %v1705 = vpop.permute.xlu0 %1704
    %1707 = vset.pattern.permute.xlu0 48
    %1708 = vperm.xlu0 %1707, %v1064
    %v1709 = vpop.permute.xlu0 %1708
    %1711 = vset.pattern.permute.xlu0 48
    %1712 = vperm.xlu0 %1711, %v1065
    %v1713 = vpop.permute.xlu0 %1712
    %1715 = vset.pattern.permute.xlu0 48
    %1716 = vperm.xlu0 %1715, %v1066
    %v1717 = vpop.permute.xlu0 %1716
    %v1719 = vmul.f32 %v1544, %v1689
    %v1720 = vmul.f32 %v1549, %v1693
    %v1721 = vmul.f32 %v1554, %v1697
    %v1722 = vmul.f32 %v1559, %v1701
    %v1723 = vmul.f32 %v1564, %v1705
    %v1724 = vmul.f32 %v1569, %v1709
    %v1725 = vmul.f32 %v1574, %v1713
    %v1726 = vmul.f32 %v1579, %v1717
    %v1727 = vsel %vm1375, %v1719, 0.0
    %v1728 = vsel %vm1375, %v1720, 0.0
    %v1729 = vadd.f32 %v1727, %v1728
    %v1730 = vsel %vm1375, %v1721, 0.0
    %v1731 = vadd.f32 %v1729, %v1730
    %v1732 = vsel %vm1375, %v1722, 0.0
    %v1733 = vadd.f32 %v1731, %v1732
    %v1734 = vsel %vm1375, %v1723, 0.0
    %v1735 = vadd.f32 %v1733, %v1734
    %v1736 = vsel %vm1375, %v1724, 0.0
    %v1737 = vadd.f32 %v1735, %v1736
    %v1738 = vsel %vm1375, %v1725, 0.0
    %v1739 = vadd.f32 %v1737, %v1738
    %v1740 = vsel %vm1375, %v1726, 0.0
    %v1741 = vadd.f32 %v1739, %v1740
    %v1742 = vrot.slane %v1741, 4
    %v1743 = vadd.f32 %v1741, %v1742
    %v1744 = vrot.slane %v1743, 2
    %v1745 = vadd.f32 %v1743, %v1744
    %v1746 = vrot.slane %v1745, 1
    %v1747 = vadd.f32 %v1745, %v1746
    %1748 = vset.pattern.permute.xlu0 18
    %1749 = vperm.xlu0 %1748, %v1072
    %v1750 = vpop.permute.xlu0 %1749
    %v1752 = vadd.f32 %v1747, %v1750
    %v1753 = vxor.u32 %v1752, 2147483648
    %v1754 = vmul.f32 %v1753, 1.442695
    %v1755 = vpow.pop %v1754
    %v1756 = vadd.f32 %v1755, 1.0
    %v1757 = vrcp.pop %v1756
    %v1758 = vmul.f32 1.0, %v1757
    %1759 = vset.pattern.permute.xlu0 49
    %1760 = vperm.xlu0 %1759, %v1059
    %v1761 = vpop.permute.xlu0 %1760
    %1763 = vset.pattern.permute.xlu0 49
    %1764 = vperm.xlu0 %1763, %v1060
    %v1765 = vpop.permute.xlu0 %1764
    %1767 = vset.pattern.permute.xlu0 49
    %1768 = vperm.xlu0 %1767, %v1061
    %v1769 = vpop.permute.xlu0 %1768
    %1771 = vset.pattern.permute.xlu0 49
    %1772 = vperm.xlu0 %1771, %v1062
    %v1773 = vpop.permute.xlu0 %1772
    %1775 = vset.pattern.permute.xlu0 49
    %1776 = vperm.xlu0 %1775, %v1063
    %v1777 = vpop.permute.xlu0 %1776
    %1779 = vset.pattern.permute.xlu0 49
    %1780 = vperm.xlu0 %1779, %v1064
    %v1781 = vpop.permute.xlu0 %1780
    %1783 = vset.pattern.permute.xlu0 49
    %1784 = vperm.xlu0 %1783, %v1065
    %v1785 = vpop.permute.xlu0 %1784
    %1787 = vset.pattern.permute.xlu0 49
    %1788 = vperm.xlu0 %1787, %v1066
    %v1789 = vpop.permute.xlu0 %1788
    %v1791 = vmul.f32 %v1649, %v1761
    %v1792 = vmul.f32 %v1654, %v1765
    %v1793 = vmul.f32 %v1659, %v1769
    %v1794 = vmul.f32 %v1664, %v1773
    %v1795 = vmul.f32 %v1669, %v1777
    %v1796 = vmul.f32 %v1674, %v1781
    %v1797 = vmul.f32 %v1679, %v1785
    %v1798 = vmul.f32 %v1684, %v1789
    %v1799 = vsel %vm1375, %v1791, 0.0
    %v1800 = vsel %vm1375, %v1792, 0.0
    %v1801 = vadd.f32 %v1799, %v1800
    %v1802 = vsel %vm1375, %v1793, 0.0
    %v1803 = vadd.f32 %v1801, %v1802
    %v1804 = vsel %vm1375, %v1794, 0.0
    %v1805 = vadd.f32 %v1803, %v1804
    %v1806 = vsel %vm1375, %v1795, 0.0
    %v1807 = vadd.f32 %v1805, %v1806
    %v1808 = vsel %vm1375, %v1796, 0.0
    %v1809 = vadd.f32 %v1807, %v1808
    %v1810 = vsel %vm1375, %v1797, 0.0
    %v1811 = vadd.f32 %v1809, %v1810
    %v1812 = vsel %vm1375, %v1798, 0.0
    %v1813 = vadd.f32 %v1811, %v1812
    %v1814 = vrot.slane %v1813, 4
    %v1815 = vadd.f32 %v1813, %v1814
    %v1816 = vrot.slane %v1815, 2
    %v1817 = vadd.f32 %v1815, %v1816
    %v1818 = vrot.slane %v1817, 1
    %v1819 = vadd.f32 %v1817, %v1818
    %1820 = vset.pattern.permute.xlu0 19
    %1821 = vperm.xlu0 %1820, %v1072
    %v1822 = vpop.permute.xlu0 %1821
    %v1824 = vadd.f32 %v1819, %v1822
    %v1825 = vxor.u32 %v1824, 2147483648
    %v1826 = vmul.f32 %v1825, 1.442695
    %v1827 = vpow.pop %v1826
    %v1828 = vadd.f32 %v1827, 1.0
    %v1829 = vrcp.pop %v1828
    %v1830 = vmul.f32 1.0, %v1829
    %v1831 = vadd.f32 %v1758, %v1830
    %v1832 = vrcp.pop %v1831
    %v1833 = vmul.f32 %v1831, %v1832
    %v1834 = vsub.f32 2.0, %v1833
    %v1835 = vmul.f32 %v1832, %v1834
    %v1836 = vmul.f32 %v1758, %v1835
    %v1837 = vsub.f32 1.0, %v1836
    %v1838 = vmul.f32 %v1836, %v1544
    %v1839 = vmul.f32 %v1836, %v1549
    %v1840 = vmul.f32 %v1836, %v1554
    %v1841 = vmul.f32 %v1836, %v1559
    %v1842 = vmul.f32 %v1836, %v1564
    %v1843 = vmul.f32 %v1836, %v1569
    %v1844 = vmul.f32 %v1836, %v1574
    %v1845 = vmul.f32 %v1836, %v1579
    %v1846 = vmul.f32 %v1837, %v1649
    %v1847 = vmul.f32 %v1837, %v1654
    %v1848 = vmul.f32 %v1837, %v1659
    %v1849 = vmul.f32 %v1837, %v1664
    %v1850 = vmul.f32 %v1837, %v1669
    %v1851 = vmul.f32 %v1837, %v1674
    %v1852 = vmul.f32 %v1837, %v1679
    %v1853 = vmul.f32 %v1837, %v1684
    %v1854 = vadd.f32 %v1838, %v1846
    %v1855 = vadd.f32 %v1839, %v1847
    %v1856 = vadd.f32 %v1840, %v1848
    %v1857 = vadd.f32 %v1841, %v1849
    %v1858 = vadd.f32 %v1842, %v1850
    %v1859 = vadd.f32 %v1843, %v1851
    %v1860 = vadd.f32 %v1844, %v1852
    %v1861 = vadd.f32 %v1845, %v1853
    %1862 = vset.pattern.permute.xlu0 80
    %1863 = vperm.xlu0 %1862, %v1067
    %v1864 = vpop.permute.xlu0 %1863
    %1866 = vset.pattern.permute.xlu0 80
    %1867 = vperm.xlu0 %1866, %v1068
    %v1868 = vpop.permute.xlu0 %1867
    %1870 = vset.pattern.permute.xlu0 80
    %1871 = vperm.xlu0 %1870, %v1069
    %v1872 = vpop.permute.xlu0 %1871
    %1874 = vset.pattern.permute.xlu0 80
    %1875 = vperm.xlu0 %1874, %v1070
    %v1876 = vpop.permute.xlu0 %1875
    %v1878 = vsel %vm31, %v1067, 0
    %v1880 = vsel %vm31, %v1068, 0
    %v1882 = vsel %vm31, %v1069, 0
    %v1884 = vsel %vm31, %v1070, 0
    %1886 = vmatprep.subr.mxu0 0.0
    %1887 = vmatpush1.msra.mxu0 %v1854
    %1888 = vmatprep.subr.mxu0 0.0
    %1889 = vmatpush1.msra.mxu0 %v1855
    %1890 = vmatprep.subr.mxu0 0.0
    %1891 = vmatpush1.msra.mxu0 %v1856
    %1892 = vmatprep.subr.mxu0 0.0
    %1893 = vmatpush1.msra.mxu0 %v1857
    %1894 = vmatprep.subr.mxu0 0.0
    %1895 = vmatpush1.msra.mxu0 %v1858
    %1896 = vmatprep.subr.mxu0 0.0
    %1897 = vmatpush1.msra.mxu0 %v1859
    %1898 = vmatprep.subr.mxu0 0.0
    %1899 = vmatpush1.msra.mxu0 %v1860
    %1900 = vmatprep.subr.mxu0 0.0
    %1901 = vmatpush1.msra.mxu0 %v1861
    %1902 = vmatprep.subr.mxu0 0.0
    %1903 = vmatpush1.msra.mxu0 0.0
    %1904 = vmatprep.subr.mxu0 0.0
    %1905 = vmatpush1.msra.mxu0 0.0
    %1906 = vmatprep.subr.mxu0 0.0
    %1907 = vmatpush1.msra.mxu0 0.0
    %1908 = vmatprep.subr.mxu0 0.0
    %1909 = vmatpush1.msra.mxu0 0.0
    %1910 = vmatprep.subr.mxu0 0.0
    %1911 = vmatpush1.msra.mxu0 0.0
    %1912 = vmatprep.subr.mxu0 0.0
    %1913 = vmatpush1.msra.mxu0 0.0
    %1914 = vmatprep.subr.mxu0 0.0
    %1915 = vmatpush1.msra.mxu0 0.0
    %1916 = vmatprep.subr.mxu0 0.0
    %1917 = vmatpush1.msra.mxu0 0.0
    %1918 = vmatprep.subr.mxu0 0.0
    %1919 = vmatpush1.msra.mxu0 0.0
    %1920 = vmatprep.subr.mxu0 0.0
    %1921 = vmatpush1.msra.mxu0 0.0
    %1922 = vmatprep.subr.mxu0 0.0
    %1923 = vmatpush1.msra.mxu0 0.0
    %1924 = vmatprep.subr.mxu0 0.0
    %1925 = vmatpush1.msra.mxu0 0.0
    %1926 = vmatprep.subr.mxu0 0.0
    %1927 = vmatpush1.msra.mxu0 0.0
    %1928 = vmatprep.subr.mxu0 0.0
    %1929 = vmatpush1.msra.mxu0 0.0
    %1930 = vmatprep.subr.mxu0 0.0
    %1931 = vmatpush1.msra.mxu0 0.0
    %1932 = vmatprep.subr.mxu0 0.0
    %1933 = vmatpush1.msra.mxu0 0.0
    %1934 = vmatprep.subr.mxu0 0.0
    %1935 = vmatpush1.msra.mxu0 0.0
    %1936 = vmatprep.subr.mxu0 0.0
    %1937 = vmatpush1.msra.mxu0 0.0
    %1938 = vmatprep.subr.mxu0 0.0
    %1939 = vmatpush1.msra.mxu0 0.0
    %1940 = vmatprep.subr.mxu0 0.0
    %1941 = vmatpush1.msra.mxu0 0.0
    %1942 = vmatprep.subr.mxu0 0.0
    %1943 = vmatpush1.msra.mxu0 0.0
    %1944 = vmatprep.subr.mxu0 0.0
    %1945 = vmatpush1.msra.mxu0 0.0
    %1946 = vmatprep.subr.mxu0 0.0
    %1947 = vmatpush1.msra.mxu0 0.0
    %1948 = vmatprep.subr.mxu0 0.0
    %1949 = vmatpush1.msra.mxu0 0.0
    %1950 = vmatprep.mubr.f32.mxu0 0.0
    %1951 = vmatmul.mubr.f32.gmra.mrb[0].mxu0 %v1878
    %v1952 = vpop.f32.mrb[0].mxu0
    %v1953 = vadd.f32 %v1864, %v1952
    %v1954 = vpop.f32.mrb[0].mxu0
    %1955 = vmatprep.mubr.f32.mxu0 0.0
    %1956 = vmatmul.mubr.f32.gmra.mrb[0].mxu0 %v1880
    %v1957 = vpop.f32.mrb[0].mxu0
    %v1958 = vadd.f32 %v1868, %v1957
    %v1959 = vpop.f32.mrb[0].mxu0
    %1960 = vmatprep.mubr.f32.mxu0 0.0
    %1961 = vmatmul.mubr.f32.gmra.mrb[0].mxu0 %v1882
    %v1962 = vpop.f32.mrb[0].mxu0
    %v1963 = vadd.f32 %v1872, %v1962
    %v1964 = vpop.f32.mrb[0].mxu0
    %1965 = vmatprep.mubr.f32.mxu0 0.0
    %1966 = vmatmul.mubr.f32.gmra.mrb[0].mxu0 %v1884
    %v1967 = vpop.f32.mrb[0].mxu0
    %v1968 = vadd.f32 %v1876, %v1967
    %v1969 = vpop.f32.mrb[0].mxu0
    %1970 = vdwg.mxu0
    %v1971 = vmax.f32 %v1953, 0.0
    %v1972 = vmax.f32 %v1958, 0.0
    %v1973 = vmax.f32 %v1963, 0.0
    %v1974 = vmax.f32 %v1968, 0.0
    %1975 = vset.pattern.permute.xlu0 81
    %1976 = vperm.xlu0 %1975, %v1067
    %v1977 = vpop.permute.xlu0 %1976
    %1979 = vset.pattern.permute.xlu0 81
    %1980 = vperm.xlu0 %1979, %v1068
    %v1981 = vpop.permute.xlu0 %1980
    %1983 = vset.pattern.permute.xlu0 81
    %1984 = vperm.xlu0 %1983, %v1069
    %v1985 = vpop.permute.xlu0 %1984
    %1987 = vset.pattern.permute.xlu0 81
    %1988 = vperm.xlu0 %1987, %v1070
    %v1989 = vpop.permute.xlu0 %1988
    %v1991 = vmul.f32 %v1971, %v1977
    %v1992 = vmul.f32 %v1972, %v1981
    %v1993 = vmul.f32 %v1973, %v1985
    %v1994 = vmul.f32 %v1974, %v1989
    %v1995 = vsel %vm1375, %v1991, 0.0
    %v1996 = vsel %vm1375, %v1992, 0.0
    %v1997 = vadd.f32 %v1995, %v1996
    %v1998 = vsel %vm1375, %v1993, 0.0
    %v1999 = vadd.f32 %v1997, %v1998
    %v2000 = vsel %vm1375, %v1994, 0.0
    %v2001 = vadd.f32 %v1999, %v2000
    %v2002 = vrot.slane %v2001, 4
    %v2003 = vadd.f32 %v2001, %v2002
    %v2004 = vrot.slane %v2003, 2
    %v2005 = vadd.f32 %v2003, %v2004
    %v2006 = vrot.slane %v2005, 1
    %v2007 = vadd.f32 %v2005, %v2006
    %2008 = vset.pattern.permute.xlu0 20
    %2009 = vperm.xlu0 %2008, %v1072
    %v2010 = vpop.permute.xlu0 %2009
    %v2012 = vadd.f32 %v2007, %v2010
    %v2013 = vxor.u32 %v2012, 2147483648
    %v2014 = vmul.f32 %v2013, 1.442695
    %v2015 = vpow.pop %v2014
    %v2016 = vadd.f32 %v2015, 1.0
    %v2017 = vrcp.pop %v2016
    %v2018 = vmul.f32 1.0, %v2017
    %v2019 = vsel %vm1375, %v1155, -inf
    %v2020 = vrot.slane %v2019, 4
    %v2021 = vmax.f32 %v2019, %v2020
    %v2022 = vrot.slane %v2021, 2
    %v2023 = vmax.f32 %v2021, %v2022
    %v2024 = vrot.slane %v2023, 1
    %v2025 = vmax.f32 %v2023, %v2024
    %v2026 = vsub.f32 %v1155, %v2025
    %v2027 = vmul.f32 %v2026, 1.442695
    %v2028 = vpow.pop %v2027
    %v2029 = vsel %vm1375, %v2028, 0.0
    %v2030 = vrot.slane %v2029, 4
    %v2031 = vadd.f32 %v2029, %v2030
    %v2032 = vrot.slane %v2031, 2
    %v2033 = vadd.f32 %v2031, %v2032
    %v2034 = vrot.slane %v2033, 1
    %v2035 = vadd.f32 %v2033, %v2034
    %v2036 = vrcp.pop %v2035
    %v2037 = vmul.f32 %v2035, %v2036
    %v2038 = vsub.f32 2.0, %v2037
    %v2039 = vmul.f32 %v2036, %v2038
    %v2040 = vmul.f32 %v2028, %v2039
    %v2041 = vsel %vm1375, %v1372, -inf
    %v2042 = vrot.slane %v2041, 4
    %v2043 = vmax.f32 %v2041, %v2042
    %v2044 = vrot.slane %v2043, 2
    %v2045 = vmax.f32 %v2043, %v2044
    %v2046 = vrot.slane %v2045, 1
    %v2047 = vmax.f32 %v2045, %v2046
    %v2048 = vsub.f32 %v1372, %v2047
    %v2049 = vmul.f32 %v2048, 1.442695
    %v2050 = vpow.pop %v2049
    %v2051 = vsel %vm1375, %v2050, 0.0
    %v2052 = vrot.slane %v2051, 4
    %v2053 = vadd.f32 %v2051, %v2052
    %v2054 = vrot.slane %v2053, 2
    %v2055 = vadd.f32 %v2053, %v2054
    %v2056 = vrot.slane %v2055, 1
    %v2057 = vadd.f32 %v2055, %v2056
    %v2058 = vrcp.pop %v2057
    %v2059 = vmul.f32 %v2057, %v2058
    %v2060 = vsub.f32 2.0, %v2059
    %v2061 = vmul.f32 %v2058, %v2060
    %v2062 = vmul.f32 %v2050, %v2061
    %2063 = vxpose.xlu0.b32.start [1/16] %v1058, 128
    %2064 = vxpose.xlu0.b32.cont [2/16] 0.0, 128
    %2065 = vxpose.xlu0.b32.cont [3/16] 0.0, 128
    %2066 = vxpose.xlu0.b32.cont [4/16] 0.0, 128
    %2067 = vxpose.xlu0.b32.cont [5/16] 0.0, 128
    %2068 = vxpose.xlu0.b32.cont [6/16] 0.0, 128
    %2069 = vxpose.xlu0.b32.cont [7/16] 0.0, 128
    %2070 = vxpose.xlu0.b32.cont [8/16] 0.0, 128
    %2071 = vxpose.xlu0.b32.cont [9/16] 0.0, 128
    %2072 = vxpose.xlu0.b32.cont [10/16] 0.0, 128
    %2073 = vxpose.xlu0.b32.cont [11/16] 0.0, 128
    %2074 = vxpose.xlu0.b32.cont [12/16] 0.0, 128
    %2075 = vxpose.xlu0.b32.cont [13/16] 0.0, 128
    %2076 = vxpose.xlu0.b32.cont [14/16] 0.0, 128
    %2077 = vxpose.xlu0.b32.cont [15/16] 0.0, 128
    %2078 = vxpose.xlu0.b32.end [16/16] 0.0, 128
    %v2079 = vpop.trf.xlu0
    %v2080 = vpop.trf.xlu0
    %v2081 = vpop.trf.xlu0
    %v2082 = vpop.trf.xlu0
    %v2083 = vpop.trf.xlu0
    %v2084 = vpop.trf.xlu0
    %v2085 = vpop.trf.xlu0
    %v2086 = vpop.trf.xlu0
    %v2087 = vpop.trf.xlu0
    %v2088 = vpop.trf.xlu0
    %v2089 = vpop.trf.xlu0
    %v2090 = vpop.trf.xlu0
    %v2091 = vpop.trf.xlu0
    %v2092 = vpop.trf.xlu0
    %v2093 = vpop.trf.xlu0
    %v2094 = vpop.trf.xlu0
    %v2096 = vsel %vm1452, %v2079, 0
    %v2099 = vsel %vm1452, %v2080, 0
    %v2102 = vsel %vm1452, %v2081, 0
    %v2105 = vsel %vm1452, %v2082, 0
    %v2108 = vsel %vm1452, %v2083, 0
    %v2111 = vsel %vm1452, %v2084, 0
    %v2114 = vsel %vm1452, %v2085, 0
    %v2117 = vsel %vm1452, %v2086, 0
    %2119 = vmatprep.subr.mxu0 0.0
    %2120 = vmatpush1.msra.mxu0 %v2040
    %2121 = vmatprep.subr.mxu0 0.0
    %2122 = vmatpush1.msra.mxu0 0.0
    %2123 = vmatprep.subr.mxu0 0.0
    %2124 = vmatpush1.msra.mxu0 0.0
    %2125 = vmatprep.subr.mxu0 0.0
    %2126 = vmatpush1.msra.mxu0 0.0
    %2127 = vmatprep.subr.mxu0 0.0
    %2128 = vmatpush1.msra.mxu0 0.0
    %2129 = vmatprep.subr.mxu0 0.0
    %2130 = vmatpush1.msra.mxu0 0.0
    %2131 = vmatprep.subr.mxu0 0.0
    %2132 = vmatpush1.msra.mxu0 0.0
    %2133 = vmatprep.subr.mxu0 0.0
    %2134 = vmatpush1.msra.mxu0 0.0
    %2135 = vmatprep.subr.mxu0 0.0
    %2136 = vmatpush1.msra.mxu0 0.0
    %2137 = vmatprep.subr.mxu0 0.0
    %2138 = vmatpush1.msra.mxu0 0.0
    %2139 = vmatprep.subr.mxu0 0.0
    %2140 = vmatpush1.msra.mxu0 0.0
    %2141 = vmatprep.subr.mxu0 0.0
    %2142 = vmatpush1.msra.mxu0 0.0
    %2143 = vmatprep.subr.mxu0 0.0
    %2144 = vmatpush1.msra.mxu0 0.0
    %2145 = vmatprep.subr.mxu0 0.0
    %2146 = vmatpush1.msra.mxu0 0.0
    %2147 = vmatprep.subr.mxu0 0.0
    %2148 = vmatpush1.msra.mxu0 0.0
    %2149 = vmatprep.subr.mxu0 0.0
    %2150 = vmatpush1.msra.mxu0 0.0
    %2151 = vmatprep.subr.mxu0 0.0
    %2152 = vmatpush1.msra.mxu0 0.0
    %2153 = vmatprep.subr.mxu0 0.0
    %2154 = vmatpush1.msra.mxu0 0.0
    %2155 = vmatprep.subr.mxu0 0.0
    %2156 = vmatpush1.msra.mxu0 0.0
    %2157 = vmatprep.subr.mxu0 0.0
    %2158 = vmatpush1.msra.mxu0 0.0
    %2159 = vmatprep.subr.mxu0 0.0
    %2160 = vmatpush1.msra.mxu0 0.0
    %2161 = vmatprep.subr.mxu0 0.0
    %2162 = vmatpush1.msra.mxu0 0.0
    %2163 = vmatprep.subr.mxu0 0.0
    %2164 = vmatpush1.msra.mxu0 0.0
    %2165 = vmatprep.subr.mxu0 0.0
    %2166 = vmatpush1.msra.mxu0 0.0
    %2167 = vmatprep.subr.mxu0 0.0
    %2168 = vmatpush1.msra.mxu0 0.0
    %2169 = vmatprep.subr.mxu0 0.0
    %2170 = vmatpush1.msra.mxu0 0.0
    %2171 = vmatprep.subr.mxu0 0.0
    %2172 = vmatpush1.msra.mxu0 0.0
    %2173 = vmatprep.subr.mxu0 0.0
    %2174 = vmatpush1.msra.mxu0 0.0
    %2175 = vmatprep.subr.mxu0 0.0
    %2176 = vmatpush1.msra.mxu0 0.0
    %2177 = vmatprep.subr.mxu0 0.0
    %2178 = vmatpush1.msra.mxu0 0.0
    %2179 = vmatprep.subr.mxu0 0.0
    %2180 = vmatpush1.msra.mxu0 0.0
    %2181 = vmatprep.subr.mxu0 0.0
    %2182 = vmatpush1.msra.mxu0 0.0
    %2183 = vmatprep.mubr.f32.mxu0 0.0
    %2184 = vmatmul.mubr.f32.gmra.mrb[0].mxu0 %v2096
    %v2185 = vpop.f32.mrb[0].mxu0
    %v2186 = vadd.f32 0.0, %v2185
    %v2187 = vpop.f32.mrb[0].mxu0
    %2188 = vmatprep.mubr.f32.mxu0 0.0
    %2189 = vmatmul.mubr.f32.gmra.mrb[0].mxu0 %v2099
    %v2190 = vpop.f32.mrb[0].mxu0
    %v2191 = vadd.f32 0.0, %v2190
    %v2192 = vpop.f32.mrb[0].mxu0
    %2193 = vmatprep.mubr.f32.mxu0 0.0
    %2194 = vmatmul.mubr.f32.gmra.mrb[0].mxu0 %v2102
    %v2195 = vpop.f32.mrb[0].mxu0
    %v2196 = vadd.f32 0.0, %v2195
    %v2197 = vpop.f32.mrb[0].mxu0
    %2198 = vmatprep.mubr.f32.mxu0 0.0
    %2199 = vmatmul.mubr.f32.gmra.mrb[0].mxu0 %v2105
    %v2200 = vpop.f32.mrb[0].mxu0
    %v2201 = vadd.f32 0.0, %v2200
    %v2202 = vpop.f32.mrb[0].mxu0
    %2203 = vmatprep.mubr.f32.mxu0 0.0
    %2204 = vmatmul.mubr.f32.gmra.mrb[0].mxu0 %v2108
    %v2205 = vpop.f32.mrb[0].mxu0
    %v2206 = vadd.f32 0.0, %v2205
    %v2207 = vpop.f32.mrb[0].mxu0
    %2208 = vmatprep.mubr.f32.mxu0 0.0
    %2209 = vmatmul.mubr.f32.gmra.mrb[0].mxu0 %v2111
    %v2210 = vpop.f32.mrb[0].mxu0
    %v2211 = vadd.f32 0.0, %v2210
    %v2212 = vpop.f32.mrb[0].mxu0
    %2213 = vmatprep.mubr.f32.mxu0 0.0
    %2214 = vmatmul.mubr.f32.gmra.mrb[0].mxu0 %v2114
    %v2215 = vpop.f32.mrb[0].mxu0
    %v2216 = vadd.f32 0.0, %v2215
    %v2217 = vpop.f32.mrb[0].mxu0
    %2218 = vmatprep.mubr.f32.mxu0 0.0
    %2219 = vmatmul.mubr.f32.gmra.mrb[0].mxu0 %v2117
    %v2220 = vpop.f32.mrb[0].mxu0
    %v2221 = vadd.f32 0.0, %v2220
    %v2222 = vpop.f32.mrb[0].mxu0
    %2223 = vdwg.mxu0
    %2224 = vmatprep.subr.mxu0 0.0
    %2225 = vmatpush1.msra.mxu0 %v2062
    %2226 = vmatprep.subr.mxu0 0.0
    %2227 = vmatpush1.msra.mxu0 0.0
    %2228 = vmatprep.subr.mxu0 0.0
    %2229 = vmatpush1.msra.mxu0 0.0
    %2230 = vmatprep.subr.mxu0 0.0
    %2231 = vmatpush1.msra.mxu0 0.0
    %2232 = vmatprep.subr.mxu0 0.0
    %2233 = vmatpush1.msra.mxu0 0.0
    %2234 = vmatprep.subr.mxu0 0.0
    %2235 = vmatpush1.msra.mxu0 0.0
    %2236 = vmatprep.subr.mxu0 0.0
    %2237 = vmatpush1.msra.mxu0 0.0
    %2238 = vmatprep.subr.mxu0 0.0
    %2239 = vmatpush1.msra.mxu0 0.0
    %2240 = vmatprep.subr.mxu0 0.0
    %2241 = vmatpush1.msra.mxu0 0.0
    %2242 = vmatprep.subr.mxu0 0.0
    %2243 = vmatpush1.msra.mxu0 0.0
    %2244 = vmatprep.subr.mxu0 0.0
    %2245 = vmatpush1.msra.mxu0 0.0
    %2246 = vmatprep.subr.mxu0 0.0
    %2247 = vmatpush1.msra.mxu0 0.0
    %2248 = vmatprep.subr.mxu0 0.0
    %2249 = vmatpush1.msra.mxu0 0.0
    %2250 = vmatprep.subr.mxu0 0.0
    %2251 = vmatpush1.msra.mxu0 0.0
    %2252 = vmatprep.subr.mxu0 0.0
    %2253 = vmatpush1.msra.mxu0 0.0
    %2254 = vmatprep.subr.mxu0 0.0
    %2255 = vmatpush1.msra.mxu0 0.0
    %2256 = vmatprep.subr.mxu0 0.0
    %2257 = vmatpush1.msra.mxu0 0.0
    %2258 = vmatprep.subr.mxu0 0.0
    %2259 = vmatpush1.msra.mxu0 0.0
    %2260 = vmatprep.subr.mxu0 0.0
    %2261 = vmatpush1.msra.mxu0 0.0
    %2262 = vmatprep.subr.mxu0 0.0
    %2263 = vmatpush1.msra.mxu0 0.0
    %2264 = vmatprep.subr.mxu0 0.0
    %2265 = vmatpush1.msra.mxu0 0.0
    %2266 = vmatprep.subr.mxu0 0.0
    %2267 = vmatpush1.msra.mxu0 0.0
    %2268 = vmatprep.subr.mxu0 0.0
    %2269 = vmatpush1.msra.mxu0 0.0
    %2270 = vmatprep.subr.mxu0 0.0
    %2271 = vmatpush1.msra.mxu0 0.0
    %2272 = vmatprep.subr.mxu0 0.0
    %2273 = vmatpush1.msra.mxu0 0.0
    %2274 = vmatprep.subr.mxu0 0.0
    %2275 = vmatpush1.msra.mxu0 0.0
    %2276 = vmatprep.subr.mxu0 0.0
    %2277 = vmatpush1.msra.mxu0 0.0
    %2278 = vmatprep.subr.mxu0 0.0
    %2279 = vmatpush1.msra.mxu0 0.0
    %2280 = vmatprep.subr.mxu0 0.0
    %2281 = vmatpush1.msra.mxu0 0.0
    %2282 = vmatprep.subr.mxu0 0.0
    %2283 = vmatpush1.msra.mxu0 0.0
    %2284 = vmatprep.subr.mxu0 0.0
    %2285 = vmatpush1.msra.mxu0 0.0
    %2286 = vmatprep.subr.mxu0 0.0
    %2287 = vmatpush1.msra.mxu0 0.0
    %2288 = vmatprep.mubr.f32.mxu0 0.0
    %2289 = vmatmul.mubr.f32.gmra.mrb[0].mxu0 %v2096
    %v2290 = vpop.f32.mrb[0].mxu0
    %v2291 = vadd.f32 0.0, %v2290
    %v2292 = vpop.f32.mrb[0].mxu0
    %2293 = vmatprep.mubr.f32.mxu0 0.0
    %2294 = vmatmul.mubr.f32.gmra.mrb[0].mxu0 %v2099
    %v2295 = vpop.f32.mrb[0].mxu0
    %v2296 = vadd.f32 0.0, %v2295
    %v2297 = vpop.f32.mrb[0].mxu0
    %2298 = vmatprep.mubr.f32.mxu0 0.0
    %2299 = vmatmul.mubr.f32.gmra.mrb[0].mxu0 %v2102
    %v2300 = vpop.f32.mrb[0].mxu0
    %v2301 = vadd.f32 0.0, %v2300
    %v2302 = vpop.f32.mrb[0].mxu0
    %2303 = vmatprep.mubr.f32.mxu0 0.0
    %2304 = vmatmul.mubr.f32.gmra.mrb[0].mxu0 %v2105
    %v2305 = vpop.f32.mrb[0].mxu0
    %v2306 = vadd.f32 0.0, %v2305
    %v2307 = vpop.f32.mrb[0].mxu0
    %2308 = vmatprep.mubr.f32.mxu0 0.0
    %2309 = vmatmul.mubr.f32.gmra.mrb[0].mxu0 %v2108
    %v2310 = vpop.f32.mrb[0].mxu0
    %v2311 = vadd.f32 0.0, %v2310
    %v2312 = vpop.f32.mrb[0].mxu0
    %2313 = vmatprep.mubr.f32.mxu0 0.0
    %2314 = vmatmul.mubr.f32.gmra.mrb[0].mxu0 %v2111
    %v2315 = vpop.f32.mrb[0].mxu0
    %v2316 = vadd.f32 0.0, %v2315
    %v2317 = vpop.f32.mrb[0].mxu0
    %2318 = vmatprep.mubr.f32.mxu0 0.0
    %2319 = vmatmul.mubr.f32.gmra.mrb[0].mxu0 %v2114
    %v2320 = vpop.f32.mrb[0].mxu0
    %v2321 = vadd.f32 0.0, %v2320
    %v2322 = vpop.f32.mrb[0].mxu0
    %2323 = vmatprep.mubr.f32.mxu0 0.0
    %2324 = vmatmul.mubr.f32.gmra.mrb[0].mxu0 %v2117
    %v2325 = vpop.f32.mrb[0].mxu0
    %v2326 = vadd.f32 0.0, %v2325
    %v2327 = vpop.f32.mrb[0].mxu0
    %2328 = vdwg.mxu0
    %v2329 = vmul.f32 %v2186, %v1689
    %v2330 = vmul.f32 %v2191, %v1693
    %v2331 = vmul.f32 %v2196, %v1697
    %v2332 = vmul.f32 %v2201, %v1701
    %v2333 = vmul.f32 %v2206, %v1705
    %v2334 = vmul.f32 %v2211, %v1709
    %v2335 = vmul.f32 %v2216, %v1713
    %v2336 = vmul.f32 %v2221, %v1717
    %v2337 = vsel %vm1375, %v2329, 0.0
    %v2338 = vsel %vm1375, %v2330, 0.0
    %v2339 = vadd.f32 %v2337, %v2338
    %v2340 = vsel %vm1375, %v2331, 0.0
    %v2341 = vadd.f32 %v2339, %v2340
    %v2342 = vsel %vm1375, %v2332, 0.0
    %v2343 = vadd.f32 %v2341, %v2342
    %v2344 = vsel %vm1375, %v2333, 0.0
    %v2345 = vadd.f32 %v2343, %v2344
    %v2346 = vsel %vm1375, %v2334, 0.0
    %v2347 = vadd.f32 %v2345, %v2346
    %v2348 = vsel %vm1375, %v2335, 0.0
    %v2349 = vadd.f32 %v2347, %v2348
    %v2350 = vsel %vm1375, %v2336, 0.0
    %v2351 = vadd.f32 %v2349, %v2350
    %v2352 = vrot.slane %v2351, 4
    %v2353 = vadd.f32 %v2351, %v2352
    %v2354 = vrot.slane %v2353, 2
    %v2355 = vadd.f32 %v2353, %v2354
    %v2356 = vrot.slane %v2355, 1
    %v2357 = vadd.f32 %v2355, %v2356
    %v2358 = vadd.f32 %v2357, %v1750
    %v2359 = vxor.u32 %v2358, 2147483648
    %v2360 = vmul.f32 %v2359, 1.442695
    %v2361 = vpow.pop %v2360
    %v2362 = vadd.f32 %v2361, 1.0
    %v2363 = vrcp.pop %v2362
    %v2364 = vmul.f32 1.0, %v2363
    %v2365 = vmul.f32 %v2291, %v1761
    %v2366 = vmul.f32 %v2296, %v1765
    %v2367 = vmul.f32 %v2301, %v1769
    %v2368 = vmul.f32 %v2306, %v1773
    %v2369 = vmul.f32 %v2311, %v1777
    %v2370 = vmul.f32 %v2316, %v1781
    %v2371 = vmul.f32 %v2321, %v1785
    %v2372 = vmul.f32 %v2326, %v1789
    %v2373 = vsel %vm1375, %v2365, 0.0
    %v2374 = vsel %vm1375, %v2366, 0.0
    %v2375 = vadd.f32 %v2373, %v2374
    %v2376 = vsel %vm1375, %v2367, 0.0
    %v2377 = vadd.f32 %v2375, %v2376
    %v2378 = vsel %vm1375, %v2368, 0.0
    %v2379 = vadd.f32 %v2377, %v2378
    %v2380 = vsel %vm1375, %v2369, 0.0
    %v2381 = vadd.f32 %v2379, %v2380
    %v2382 = vsel %vm1375, %v2370, 0.0
    %v2383 = vadd.f32 %v2381, %v2382
    %v2384 = vsel %vm1375, %v2371, 0.0
    %v2385 = vadd.f32 %v2383, %v2384
    %v2386 = vsel %vm1375, %v2372, 0.0
    %v2387 = vadd.f32 %v2385, %v2386
    %v2388 = vrot.slane %v2387, 4
    %v2389 = vadd.f32 %v2387, %v2388
    %v2390 = vrot.slane %v2389, 2
    %v2391 = vadd.f32 %v2389, %v2390
    %v2392 = vrot.slane %v2391, 1
    %v2393 = vadd.f32 %v2391, %v2392
    %v2394 = vadd.f32 %v2393, %v1822
    %v2395 = vxor.u32 %v2394, 2147483648
    %v2396 = vmul.f32 %v2395, 1.442695
    %v2397 = vpow.pop %v2396
    %v2398 = vadd.f32 %v2397, 1.0
    %v2399 = vrcp.pop %v2398
    %v2400 = vmul.f32 1.0, %v2399
    %v2401 = vadd.f32 %v2364, %v2400
    %v2402 = vrcp.pop %v2401
    %v2403 = vmul.f32 %v2401, %v2402
    %v2404 = vsub.f32 2.0, %v2403
    %v2405 = vmul.f32 %v2402, %v2404
    %v2406 = vmul.f32 %v2364, %v2405
    %v2407 = vsub.f32 1.0, %v2406
    %v2408 = vmul.f32 %v2406, %v2186
    %v2409 = vmul.f32 %v2406, %v2191
    %v2410 = vmul.f32 %v2406, %v2196
    %v2411 = vmul.f32 %v2406, %v2201
    %v2412 = vmul.f32 %v2406, %v2206
    %v2413 = vmul.f32 %v2406, %v2211
    %v2414 = vmul.f32 %v2406, %v2216
    %v2415 = vmul.f32 %v2406, %v2221
    %v2416 = vmul.f32 %v2407, %v2291
    %v2417 = vmul.f32 %v2407, %v2296
    %v2418 = vmul.f32 %v2407, %v2301
    %v2419 = vmul.f32 %v2407, %v2306
    %v2420 = vmul.f32 %v2407, %v2311
    %v2421 = vmul.f32 %v2407, %v2316
    %v2422 = vmul.f32 %v2407, %v2321
    %v2423 = vmul.f32 %v2407, %v2326
    %v2424 = vadd.f32 %v2408, %v2416
    %v2425 = vadd.f32 %v2409, %v2417
    %v2426 = vadd.f32 %v2410, %v2418
    %v2427 = vadd.f32 %v2411, %v2419
    %v2428 = vadd.f32 %v2412, %v2420
    %v2429 = vadd.f32 %v2413, %v2421
    %v2430 = vadd.f32 %v2414, %v2422
    %v2431 = vadd.f32 %v2415, %v2423
    %2432 = vmatprep.subr.mxu0 0.0
    %2433 = vmatpush1.msra.mxu0 %v2424
    %2434 = vmatprep.subr.mxu0 0.0
    %2435 = vmatpush1.msra.mxu0 %v2425
    %2436 = vmatprep.subr.mxu0 0.0
    %2437 = vmatpush1.msra.mxu0 %v2426
    %2438 = vmatprep.subr.mxu0 0.0
    %2439 = vmatpush1.msra.mxu0 %v2427
    %2440 = vmatprep.subr.mxu0 0.0
    %2441 = vmatpush1.msra.mxu0 %v2428
    %2442 = vmatprep.subr.mxu0 0.0
    %2443 = vmatpush1.msra.mxu0 %v2429
    %2444 = vmatprep.subr.mxu0 0.0
    %2445 = vmatpush1.msra.mxu0 %v2430
    %2446 = vmatprep.subr.mxu0 0.0
    %2447 = vmatpush1.msra.mxu0 %v2431
    %2448 = vmatprep.subr.mxu0 0.0
    %2449 = vmatpush1.msra.mxu0 0.0
    %2450 = vmatprep.subr.mxu0 0.0
    %2451 = vmatpush1.msra.mxu0 0.0
    %2452 = vmatprep.subr.mxu0 0.0
    %2453 = vmatpush1.msra.mxu0 0.0
    %2454 = vmatprep.subr.mxu0 0.0
    %2455 = vmatpush1.msra.mxu0 0.0
    %2456 = vmatprep.subr.mxu0 0.0
    %2457 = vmatpush1.msra.mxu0 0.0
    %2458 = vmatprep.subr.mxu0 0.0
    %2459 = vmatpush1.msra.mxu0 0.0
    %2460 = vmatprep.subr.mxu0 0.0
    %2461 = vmatpush1.msra.mxu0 0.0
    %2462 = vmatprep.subr.mxu0 0.0
    %2463 = vmatpush1.msra.mxu0 0.0
    %2464 = vmatprep.subr.mxu0 0.0
    %2465 = vmatpush1.msra.mxu0 0.0
    %2466 = vmatprep.subr.mxu0 0.0
    %2467 = vmatpush1.msra.mxu0 0.0
    %2468 = vmatprep.subr.mxu0 0.0
    %2469 = vmatpush1.msra.mxu0 0.0
    %2470 = vmatprep.subr.mxu0 0.0
    %2471 = vmatpush1.msra.mxu0 0.0
    %2472 = vmatprep.subr.mxu0 0.0
    %2473 = vmatpush1.msra.mxu0 0.0
    %2474 = vmatprep.subr.mxu0 0.0
    %2475 = vmatpush1.msra.mxu0 0.0
    %2476 = vmatprep.subr.mxu0 0.0
    %2477 = vmatpush1.msra.mxu0 0.0
    %2478 = vmatprep.subr.mxu0 0.0
    %2479 = vmatpush1.msra.mxu0 0.0
    %2480 = vmatprep.subr.mxu0 0.0
    %2481 = vmatpush1.msra.mxu0 0.0
    %2482 = vmatprep.subr.mxu0 0.0
    %2483 = vmatpush1.msra.mxu0 0.0
    %2484 = vmatprep.subr.mxu0 0.0
    %2485 = vmatpush1.msra.mxu0 0.0
    %2486 = vmatprep.subr.mxu0 0.0
    %2487 = vmatpush1.msra.mxu0 0.0
    %2488 = vmatprep.subr.mxu0 0.0
    %2489 = vmatpush1.msra.mxu0 0.0
    %2490 = vmatprep.subr.mxu0 0.0
    %2491 = vmatpush1.msra.mxu0 0.0
    %2492 = vmatprep.subr.mxu0 0.0
    %2493 = vmatpush1.msra.mxu0 0.0
    %2494 = vmatprep.subr.mxu0 0.0
    %2495 = vmatpush1.msra.mxu0 0.0
    %2496 = vmatprep.mubr.f32.mxu0 0.0
    %2497 = vmatmul.mubr.f32.gmra.mrb[0].mxu0 %v1878
    %v2498 = vpop.f32.mrb[0].mxu0
    %v2499 = vadd.f32 %v1864, %v2498
    %v2500 = vpop.f32.mrb[0].mxu0
    %2501 = vmatprep.mubr.f32.mxu0 0.0
    %2502 = vmatmul.mubr.f32.gmra.mrb[0].mxu0 %v1880
    %v2503 = vpop.f32.mrb[0].mxu0
    %v2504 = vadd.f32 %v1868, %v2503
    %v2505 = vpop.f32.mrb[0].mxu0
    %2506 = vmatprep.mubr.f32.mxu0 0.0
    %2507 = vmatmul.mubr.f32.gmra.mrb[0].mxu0 %v1882
    %v2508 = vpop.f32.mrb[0].mxu0
    %v2509 = vadd.f32 %v1872, %v2508
    %v2510 = vpop.f32.mrb[0].mxu0
    %2511 = vmatprep.mubr.f32.mxu0 0.0
    %2512 = vmatmul.mubr.f32.gmra.mrb[0].mxu0 %v1884
    %v2513 = vpop.f32.mrb[0].mxu0
    %v2514 = vadd.f32 %v1876, %v2513
    %v2515 = vpop.f32.mrb[0].mxu0
    %2516 = vdwg.mxu0
    %v2517 = vmax.f32 %v2499, 0.0
    %v2518 = vmax.f32 %v2504, 0.0
    %v2519 = vmax.f32 %v2509, 0.0
    %v2520 = vmax.f32 %v2514, 0.0
    %v2521 = vmul.f32 %v2517, %v1977
    %v2522 = vmul.f32 %v2518, %v1981
    %v2523 = vmul.f32 %v2519, %v1985
    %v2524 = vmul.f32 %v2520, %v1989
    %v2525 = vsel %vm1375, %v2521, 0.0
    %v2526 = vsel %vm1375, %v2522, 0.0
    %v2527 = vadd.f32 %v2525, %v2526
    %v2528 = vsel %vm1375, %v2523, 0.0
    %v2529 = vadd.f32 %v2527, %v2528
    %v2530 = vsel %vm1375, %v2524, 0.0
    %v2531 = vadd.f32 %v2529, %v2530
    %v2532 = vrot.slane %v2531, 4
    %v2533 = vadd.f32 %v2531, %v2532
    %v2534 = vrot.slane %v2533, 2
    %v2535 = vadd.f32 %v2533, %v2534
    %v2536 = vrot.slane %v2535, 1
    %v2537 = vadd.f32 %v2535, %v2536
    %v2538 = vadd.f32 %v2537, %v2010
    %v2539 = vxor.u32 %v2538, 2147483648
    %v2540 = vmul.f32 %v2539, 1.442695
    %v2541 = vpow.pop %v2540
    %v2542 = vadd.f32 %v2541, 1.0
    %v2543 = vrcp.pop %v2542
    %v2544 = vmul.f32 1.0, %v2543
    %vm2545 = vcmask 1040384
    %v2546 = vsel %vm2545, %v2018, %v2544
    %vm2547 = vcmask 123904
    %2548 = vst.msk [vmem:[#allocation4] sm:$0x3] %vm2547, %v2546
    // Predicated region
    $region14: #{hybrid_xml_forward.1} parent=1 // pred_check
      _
    $region15: #{hybrid_xml_forward.1} parent=1 // pred_check_branch
      %2550 = sbr.rel (0) target = $region17
    $region16: #{hybrid_xml_forward.1} parent=1 // pred_region
      %s2552 = ssub.s32 32, 32
      %2553 = vsyncadd [#allocation5], %s2552
      %s2555 = sshll.u32 [#allocation4], 4
      %s2556 = int_to_ptr.vmem [resolvable:$true] %s2555
      %2558 = dma.vmem_to_hbm [thread:$0]  %s2556, 32, %s3, [#allocation5]
    $region17: #{hybrid_xml_forward.1} parent=1 // pred_fallthru
      _
    // Predicated region
    $region18: #{hybrid_xml_forward.1} parent=1 // pred_check
      _
    $region19: #{hybrid_xml_forward.1} parent=1 // pred_check_branch
      %2560 = sbr.rel (0) target = $region21
    $region20: #{hybrid_xml_forward.1} parent=1 // pred_region
      %2561 = dma.done [#allocation5], 32
    $region21: #{hybrid_xml_forward.1} parent=1 // pred_fallthru
      _
    %2562 = vsyncpa [#allocation5], 1

</llo_original>
